<compile_context>
chip_gen: v7x
topology: tpu7x:2x2x1
jax: 0.10.0
libtpu: 0.0.40
codegen_flags: <defaults>
</compile_context>

<pallas_src>
import math
import functools

import jax
import jax.numpy as jnp
from jax.experimental import pallas as pl
from jax.experimental.pallas import tpu as pltpu

# ----------------------------- config (small, synthetic) ---------------------
VOCAB = 64
D_MODEL = 32
N_HEADS = 4
D_HEAD = D_MODEL // N_HEADS
D_FFN = 64
BATCH = 2
SRC_LEN = 8
TGT_LEN = 8
NEG_INF = -1e9

_round_up = lambda x, m: (x + m - 1) // m * m
VOCAB_PAD = _round_up(VOCAB, 128)   # lane-dense logits store
D_PAD = _round_up(D_MODEL, 128)     # lane-dense encoder-output store


# ----------------------------- in-kernel helpers ------------------------------
def _mm(a, w_bf16):
    """MXU matmul: bf16 operands (weights pre-cast on host), f32 accumulation."""
    return jnp.dot(a.astype(jnp.bfloat16), w_bf16,
                   preferred_element_type=jnp.float32)


def _layer_norm(x, g, b, eps=1e-5):
    mu = jnp.mean(x, axis=-1, keepdims=True)
    var = jnp.mean(jnp.square(x - mu), axis=-1, keepdims=True)
    return (x - mu) * jax.lax.rsqrt(var + eps) * g + b


def _ffn(x, w1, b1, w2, b2):
    # Marian's default activation is swish/SiLU.
    h = jax.nn.silu(_mm(x, w1) + b1)
    return _mm(h, w2) + b2


def _mha(q2, k2, v2, bias, wo, bo, buf_ref, batch, sq, sk):
    """Multi-head attention + merged output projection.

    q2: (B*sq, D), k2/v2: (B*sk, D), bias: (B, sq, sk) f32 (already materialized
    at full rank — hoisted out of the head loop). Per-head outputs are assembled
    into buf_ref (B*sq, D_MODEL) VMEM scratch, then projected with ONE full-K
    matmul against wo (D_MODEL, D_MODEL).
    """
    q3 = q2.reshape(batch, sq, D_MODEL).astype(jnp.bfloat16)
    k3 = k2.reshape(batch, sk, D_MODEL).astype(jnp.bfloat16)
    v3 = v2.reshape(batch, sk, D_MODEL).astype(jnp.bfloat16)
    scale = D_HEAD ** -0.5
    # TODO(synk): at real sizes (d_head=64) this static head loop becomes a grid
    # axis (flash-attention style) with per-head BlockSpec index_maps; fully
    # batched in-kernel head dots would need 4-D transposes that don't lower.
    for h in range(N_HEADS):
        sl = slice(h * D_HEAD, (h + 1) * D_HEAD)
        # QK^T without materializing a transpose: contract the head dim of both.
        s = jax.lax.dot_general(q3[:, :, sl], k3[:, :, sl],
                                (((2,), (2,)), ((0,), (0,))),
                                preferred_element_type=jnp.float32)
        s = s * scale + bias
        s = s - jnp.max(s, axis=-1, keepdims=True)
        p = jnp.exp(s)
        p = p * pl.reciprocal(jnp.sum(p, axis=-1, keepdims=True), approx=True)
        oh = jax.lax.dot_general(p.astype(jnp.bfloat16), v3[:, :, sl],
                                 (((2,), (1,)), ((0,), (0,))),
                                 preferred_element_type=jnp.float32)
        buf_ref[:, sl] = oh.reshape(batch * sq, D_HEAD)
    # single merged-head projection (one full-K MXU pass instead of N_HEADS)
    return _mm(buf_ref[...], wo) + bo


# ----------------------------- Pallas kernels --------------------------------
def _encoder_layer_kernel(x_ref, mask_ref,
                          wqkv_ref, bqkv_ref, wo_ref, bo_ref,
                          ln1g_ref, ln1b_ref,
                          w1_ref, b1_ref, w2_ref, b2_ref,
                          ln2g_ref, ln2b_ref, pad_ref,
                          o_ref, attn_buf, *, batch, seq):
    x = x_ref[...]                                                 # (B*S, D) f32
    # padding bias built in-kernel, materialized ONCE at full (B, S, S)
    bias = jnp.broadcast_to(((1.0 - mask_ref[...]) * NEG_INF)[:, None, :],
                            (batch, seq, seq))

    # fused QKV projection: one MXU pass
    qkv = _mm(x, wqkv_ref[...]) + bqkv_ref[...]                    # (B*S, 3D)
    q = qkv[:, :D_MODEL]
    k = qkv[:, D_MODEL:2 * D_MODEL]
    v = qkv[:, 2 * D_MODEL:]

    attn = _mha(q, k, v, bias, wo_ref[...], bo_ref[...], attn_buf, batch, seq, seq)
    h = _layer_norm(x + attn, ln1g_ref[...], ln1b_ref[...])
    h = _layer_norm(h + _ffn(h, w1_ref[...], b1_ref[...], w2_ref[...], b2_ref[...]),
                    ln2g_ref[...], ln2b_ref[...])
    # lane-dense 128-wide output slab: h @ [I | 0] -> unmasked full-lane store.
    # (the decoder's cross-KV weight is zero-row padded, so the pad lanes are inert)
    o_ref[...] = _mm(h, pad_ref[...]).astype(o_ref.dtype)


def _decoder_lmhead_kernel(x_ref, enc_ref, mask_ref,
                           s_wqkv_ref, s_bqkv_ref, s_wo_ref, s_bo_ref,
                           ln1g_ref, ln1b_ref,
                           c_wq_ref, c_bq_ref, c_wkv_ref, c_bkv_ref,
                           c_wo_ref, c_bo_ref, ln2g_ref, ln2b_ref,
                           w1_ref, b1_ref, w2_ref, b2_ref, ln3g_ref, ln3b_ref,
                           emb_ref, lmb_ref,
                           o_ref, attn_buf, *, batch, src_len, tgt_len):
    x = x_ref[...]                                                 # (B*T, D) f32
    enc = enc_ref[...]                                             # (B*S, D_PAD) bf16

    # ---- biases materialized once at full rank (hoisted out of head loops) ----
    rows = jax.lax.broadcasted_iota(jnp.int32, (tgt_len, tgt_len), 0)
    cols = jax.lax.broadcasted_iota(jnp.int32, (tgt_len, tgt_len), 1)
    # TODO(synk): real Marian also folds the decoder padding mask into self-attn;
    # fixed-length synthetic targets here, so causal-only is equivalent.
    causal_bias = jnp.broadcast_to(jnp.where(cols > rows, NEG_INF, 0.0)[None, :, :],
                                   (batch, tgt_len, tgt_len))
    cross_bias = jnp.broadcast_to(((1.0 - mask_ref[...]) * NEG_INF)[:, None, :],
                                  (batch, tgt_len, src_len))

    # ---- causal self-attention ----
    qkv = _mm(x, s_wqkv_ref[...]) + s_bqkv_ref[...]
    q = qkv[:, :D_MODEL]
    k = qkv[:, D_MODEL:2 * D_MODEL]
    v = qkv[:, 2 * D_MODEL:]
    h = _layer_norm(
        x + _mha(q, k, v, causal_bias, s_wo_ref[...], s_bo_ref[...], attn_buf,
                 batch, tgt_len, tgt_len),
        ln1g_ref[...], ln1b_ref[...])

    # ---- cross-attention over the padded encoder slab ----
    q = _mm(h, c_wq_ref[...]) + c_bq_ref[...]
    kv = _mm(enc, c_wkv_ref[...]) + c_bkv_ref[...]     # c_wkv zero-row padded to D_PAD
    k = kv[:, :D_MODEL]
    v = kv[:, D_MODEL:]
    h = _layer_norm(
        h + _mha(q, k, v, cross_bias, c_wo_ref[...], c_bo_ref[...], attn_buf,
                 batch, tgt_len, src_len),
        ln2g_ref[...], ln2b_ref[...])

    # ---- FFN ----
    h = _layer_norm(h + _ffn(h, w1_ref[...], b1_ref[...], w2_ref[...], b2_ref[...]),
                    ln3g_ref[...], ln3b_ref[...])

    # ---- tied-embedding LM head: contract emb dim 1 (no emb.T copy); emb is
    #      zero-row padded to VOCAB_PAD=128 -> lane-dense unmasked logits store.
    # TODO(synk): at real vocab (~58k) this must become its own vocab-tiled
    # pallas_call with a K-accumulator (mandatory on v7x, 64 MiB VMEM).
    logits = jax.lax.dot_general(h.astype(jnp.bfloat16), emb_ref[...],
                                 (((1,), (1,)), ((), ())),
                                 preferred_element_type=jnp.float32) + lmb_ref[...]
    o_ref[...] = logits


# ----------------------------- model glue (plain JAX) -------------------------
def sinusoidal_positions(max_len, dim):
    """Marian / fairseq layout: sin in the first half of dims, cos in the second."""
    half = dim // 2
    pos = jnp.arange(max_len, dtype=jnp.float32)[:, None]
    inv_freq = jnp.power(10000.0, -2.0 * jnp.arange(half, dtype=jnp.float32) / dim)
    angle = pos * inv_freq[None, :]
    return jnp.concatenate([jnp.sin(angle), jnp.cos(angle)], axis=-1)


def _dense(key, din, dout):
    return jax.random.normal(key, (din, dout), jnp.float32) * 0.02


def init_params(key):
    d, f, v = D_MODEL, D_FFN, VOCAB
    ks = jax.random.split(key, 6)
    ke = jax.random.split(ks[1], 4)
    enc = {
        "wqkv": _dense(ke[0], d, 3 * d), "bqkv": jnp.zeros((3 * d,)),
        "wo": _dense(ke[1], d, d), "bo": jnp.zeros((d,)),
        "ln1_g": jnp.ones((d,)), "ln1_b": jnp.zeros((d,)),
        "ffn_w1": _dense(ke[2], d, f), "ffn_b1": jnp.zeros((f,)),
        "ffn_w2": _dense(ke[3], f, d), "ffn_b2": jnp.zeros((d,)),
        "ln2_g": jnp.ones((d,)), "ln2_b": jnp.zeros((d,)),
    }
    kd = jax.random.split(ks[2], 7)
    dec = {
        "s_wqkv": _dense(kd[0], d, 3 * d), "s_bqkv": jnp.zeros((3 * d,)),
        "s_wo": _dense(kd[1], d, d), "s_bo": jnp.zeros((d,)),
        "ln1_g": jnp.ones((d,)), "ln1_b": jnp.zeros((d,)),
        "c_wq": _dense(kd[2], d, d), "c_bq": jnp.zeros((d,)),
        "c_wkv": _dense(kd[3], d, 2 * d), "c_bkv": jnp.zeros((2 * d,)),
        "c_wo": _dense(kd[4], d, d), "c_bo": jnp.zeros((d,)),
        "ln2_g": jnp.ones((d,)), "ln2_b": jnp.zeros((d,)),
        "ffn_w1": _dense(kd[5], d, f), "ffn_b1": jnp.zeros((f,)),
        "ffn_w2": _dense(kd[6], f, d), "ffn_b2": jnp.zeros((d,)),
        "ln3_g": jnp.ones((d,)), "ln3_b": jnp.zeros((d,)),
    }
    return {
        "emb": jax.random.normal(ks[0], (v, d), jnp.float32) * 0.02,
        "pos": sinusoidal_positions(max(SRC_LEN, TGT_LEN), d),
        "enc_layer": enc,
        "dec_layer": dec,
        "final_logits_bias": jnp.zeros((v,), jnp.float32),
    }


def prepare_params(params):
    """One-time host-side prep (applied perf feedback):
    - pre-cast all matmul weights (incl. tied embedding) to bf16,
    - zero-row pad emb / final_logits_bias to VOCAB_PAD for a lane-dense logits store,
    - zero-row pad c_wkv to D_PAD so the decoder consumes the 128-lane encoder slab,
    - 1-D params reshaped to (1, N) for lane broadcast."""
    bf = lambda a: a.astype(jnp.bfloat16)
    r = lambda a: a.reshape(1, -1)
    e, d = params["enc_layer"], params["dec_layer"]

    emb_pad = jnp.zeros((VOCAB_PAD, D_MODEL), jnp.float32).at[:VOCAB].set(params["emb"])
    c_wkv_pad = jnp.zeros((D_PAD, 2 * D_MODEL), jnp.float32).at[:D_MODEL].set(d["c_wkv"])
    lmb_pad = jnp.zeros((VOCAB_PAD,), jnp.float32).at[:VOCAB].set(params["final_logits_bias"])
    eye_pad = jnp.eye(D_MODEL, D_PAD, dtype=jnp.float32)   # [I | 0] lane-dense pad matrix

    enc = dict(wqkv=bf(e["wqkv"]), bqkv=r(e["bqkv"]), wo=bf(e["wo"]), bo=r(e["bo"]),
               ln1g=r(e["ln1_g"]), ln1b=r(e["ln1_b"]),
               w1=bf(e["ffn_w1"]), b1=r(e["ffn_b1"]),
               w2=bf(e["ffn_w2"]), b2=r(e["ffn_b2"]),
               ln2g=r(e["ln2_g"]), ln2b=r(e["ln2_b"]), pad=bf(eye_pad))
    dec = dict(s_wqkv=bf(d["s_wqkv"]), s_bqkv=r(d["s_bqkv"]),
               s_wo=bf(d["s_wo"]), s_bo=r(d["s_bo"]),
               ln1g=r(d["ln1_g"]), ln1b=r(d["ln1_b"]),
               c_wq=bf(d["c_wq"]), c_bq=r(d["c_bq"]),
               c_wkv=bf(c_wkv_pad), c_bkv=r(d["c_bkv"]),
               c_wo=bf(d["c_wo"]), c_bo=r(d["c_bo"]),
               ln2g=r(d["ln2_g"]), ln2b=r(d["ln2_b"]),
               w1=bf(d["ffn_w1"]), b1=r(d["ffn_b1"]),
               w2=bf(d["ffn_w2"]), b2=r(d["ffn_b2"]),
               ln3g=r(d["ln3_g"]), ln3b=r(d["ln3_b"]),
               emb=bf(emb_pad), lmb=r(lmb_pad))
    return {"emb_f32": params["emb"], "pos": params["pos"], "enc": enc, "dec": dec}


def _vmem_specs(n):
    return [pl.BlockSpec(memory_space=pltpu.MemorySpace.VMEM) for _ in range(n)]


def _nbytes(*xs):
    return sum(int(x.size) * x.dtype.itemsize for x in xs)


def marian_logits(params, input_ids, attention_mask, decoder_input_ids):
    """Returns logits [batch, tgt_len, vocab], like MarianMTModel(...).logits."""
    B, S_src = input_ids.shape
    _, S_tgt = decoder_input_ids.shape
    emb_scale = math.sqrt(D_MODEL)

    # TODO(synk): fuse the embedding gather + sqrt(d) scale + positional add into the
    # kernels via PrefetchScalarGridSpec (ids in SMEM) + pl.Element row gather at real sizes.
    enc_in = (jnp.take(params["emb_f32"], input_ids, axis=0) * emb_scale
              + params["pos"][:S_src]).reshape(B * S_src, D_MODEL)
    dec_in = (jnp.take(params["emb_f32"], decoder_input_ids, axis=0) * emb_scale
              + params["pos"][:S_tgt]).reshape(B * S_tgt, D_MODEL)
    mask_f = attention_mask.astype(jnp.float32)

    ep, dp = params["enc"], params["dec"]

    # ----- encoder layer: one fused kernel -----
    m = B * S_src
    enc_args = (enc_in, mask_f, ep["wqkv"], ep["bqkv"], ep["wo"], ep["bo"],
                ep["ln1g"], ep["ln1b"], ep["w1"], ep["b1"], ep["w2"], ep["b2"],
                ep["ln2g"], ep["ln2b"], ep["pad"])
    enc_cost = pl.CostEstimate(
        flops=int(2 * m * D_MODEL * 3 * D_MODEL + 4 * B * S_src * S_src * D_MODEL
                  + 2 * m * D_MODEL * D_MODEL + 4 * m * D_MODEL * D_FFN
                  + 2 * m * D_MODEL * D_PAD),
        transcendentals=int(B * N_HEADS * S_src * S_src + m * D_FFN),
        bytes_accessed=int(_nbytes(*enc_args) + m * D_PAD * 2))
    enc_out = pl.pallas_call(
        functools.partial(_encoder_layer_kernel, batch=B, seq=S_src),
        out_shape=jax.ShapeDtypeStruct((m, D_PAD), jnp.bfloat16),
        in_specs=_vmem_specs(len(enc_args)),
        out_specs=pl.BlockSpec(memory_space=pltpu.MemorySpace.VMEM),
        scratch_shapes=[pltpu.VMEM((m, D_MODEL), jnp.float32)],
        cost_estimate=enc_cost,
    )(*enc_args)

    # ----- decoder layer + tied-embedding LM head: one fused kernel -----
    mt = B * S_tgt
    dec_args = (dec_in, enc_out, mask_f,
                dp["s_wqkv"], dp["s_bqkv"], dp["s_wo"], dp["s_bo"],
                dp["ln1g"], dp["ln1b"],
                dp["c_wq"], dp["c_bq"], dp["c_wkv"], dp["c_bkv"],
                dp["c_wo"], dp["c_bo"], dp["ln2g"], dp["ln2b"],
                dp["w1"], dp["b1"], dp["w2"], dp["b2"], dp["ln3g"], dp["ln3b"],
                dp["emb"], dp["lmb"])
    dec_cost = pl.CostEstimate(
        flops=int(2 * mt * D_MODEL * 3 * D_MODEL + 4 * B * S_tgt * S_tgt * D_MODEL
                  + 2 * mt * D_MODEL * D_MODEL + 2 * mt * D_MODEL * D_MODEL
                  + 2 * (B * S_src) * D_PAD * 2 * D_MODEL
                  + 4 * B * S_tgt * S_src * D_MODEL + 2 * mt * D_MODEL * D_MODEL
                  + 4 * mt * D_MODEL * D_FFN + 2 * mt * D_MODEL * VOCAB_PAD),
        transcendentals=int(B * N_HEADS * (S_tgt * S_tgt + S_tgt * S_src) + mt * D_FFN),
        bytes_accessed=int(_nbytes(*dec_args) + mt * VOCAB_PAD * 4))
    logits_pad = pl.pallas_call(
        functools.partial(_decoder_lmhead_kernel, batch=B,
                          src_len=S_src, tgt_len=S_tgt),
        out_shape=jax.ShapeDtypeStruct((mt, VOCAB_PAD), jnp.float32),
        in_specs=_vmem_specs(len(dec_args)),
        out_specs=pl.BlockSpec(memory_space=pltpu.MemorySpace.VMEM),
        scratch_shapes=[pltpu.VMEM((mt, D_MODEL), jnp.float32)],
        cost_estimate=dec_cost,
    )(*dec_args)

    return logits_pad.reshape(B, S_tgt, VOCAB_PAD)[:, :, :VOCAB]


# ----------------------------- main -------------------------------------------
if __name__ == "__main__":
    key = jax.random.PRNGKey(0)
    k_params, k_src, k_tgt = jax.random.split(key, 3)
    params = prepare_params(init_params(k_params))

    input_ids = jax.random.randint(k_src, (BATCH, SRC_LEN), 0, VOCAB, dtype=jnp.int32)
    decoder_input_ids = jax.random.randint(k_tgt, (BATCH, TGT_LEN), 0, VOCAB, dtype=jnp.int32)
    # pad out the last two source tokens of batch element 1
    attention_mask = jnp.ones((BATCH, SRC_LEN), jnp.int32).at[1, -2:].set(0)

    logits = jax.jit(marian_logits)(params, input_ids, attention_mask, decoder_input_ids)
    logits = jax.block_until_ready(logits)
    assert logits.shape == (BATCH, TGT_LEN, VOCAB)
    assert bool(jnp.all(jnp.isfinite(logits)))
    print("KERNEL_OK")
</pallas_src>

<mosaic_0001>
module attributes {stable_mosaic.version = 11 : i64} {
  func.func @_encoder_layer_kernel(%arg0: memref<16x32xf32, #tpu.memory_space<vmem>>, %arg1: memref<2x8xf32, #tpu.memory_space<vmem>>, %arg2: memref<32x96xbf16, #tpu.memory_space<vmem>>, %arg3: memref<1x96xf32, #tpu.memory_space<vmem>>, %arg4: memref<32x32xbf16, #tpu.memory_space<vmem>>, %arg5: memref<1x32xf32, #tpu.memory_space<vmem>>, %arg6: memref<1x32xf32, #tpu.memory_space<vmem>>, %arg7: memref<1x32xf32, #tpu.memory_space<vmem>>, %arg8: memref<32x64xbf16, #tpu.memory_space<vmem>>, %arg9: memref<1x64xf32, #tpu.memory_space<vmem>>, %arg10: memref<64x32xbf16, #tpu.memory_space<vmem>>, %arg11: memref<1x32xf32, #tpu.memory_space<vmem>>, %arg12: memref<1x32xf32, #tpu.memory_space<vmem>>, %arg13: memref<1x32xf32, #tpu.memory_space<vmem>>, %arg14: memref<32x128xbf16, #tpu.memory_space<vmem>>, %arg15: memref<16x128xbf16, #tpu.memory_space<vmem>>, %arg16: memref<16x32xf32, #tpu.memory_space<vmem>>) attributes {dimension_semantics = [], scalar_prefetch = 0 : i64, scratch_operands = 1 : i64, tpu.core_type = #tpu.core_type<tc>} {
    %c0 = arith.constant 0 : index
    %c0_0 = arith.constant 0 : index
    %0 = vector.load %arg0[%c0, %c0_0] : memref<16x32xf32, #tpu.memory_space<vmem>>, vector<16x32xf32>
    %c0_1 = arith.constant 0 : index
    %c0_2 = arith.constant 0 : index
    %1 = vector.load %arg1[%c0_1, %c0_2] : memref<2x8xf32, #tpu.memory_space<vmem>>, vector<2x8xf32>
    %cst = arith.constant 1.000000e+00 : f32
    %2 = vector.broadcast %cst : f32 to vector<2x8xf32>
    %3 = arith.subf %2, %1 : vector<2x8xf32>
    %cst_3 = arith.constant -1.000000e+09 : f32
    %4 = vector.broadcast %cst_3 : f32 to vector<2x8xf32>
    %5 = arith.mulf %3, %4 : vector<2x8xf32>
    %6 = vector.shape_cast %5 : vector<2x8xf32> to vector<2x1x8xf32>
    %7 = vector.shape_cast %6 : vector<2x1x8xf32> to vector<2x1x8xf32>
    %8 = vector.broadcast %7 : vector<2x1x8xf32> to vector<2x8x8xf32>
    %c0_4 = arith.constant 0 : index
    %c0_5 = arith.constant 0 : index
    %9 = vector.load %arg2[%c0_4, %c0_5] : memref<32x96xbf16, #tpu.memory_space<vmem>>, vector<32x96xbf16>
    %10 = arith.truncf %0 : vector<16x32xf32> to vector<16x32xbf16>
    %cst_6 = arith.constant dense<0.000000e+00> : vector<16x96xf32>
    %11 = tpu.matmul %10, %9, %cst_6 {dimension_numbers = #tpu.dot_dimension_numbers<[1], [0], [0], [1], [0, 0, 1, 1], [], []>} : vector<16x32xbf16>, vector<32x96xbf16>, vector<16x96xf32> -> vector<16x96xf32>
    %c0_7 = arith.constant 0 : index
    %c0_8 = arith.constant 0 : index
    %12 = vector.load %arg3[%c0_7, %c0_8] : memref<1x96xf32, #tpu.memory_space<vmem>>, vector<1x96xf32>
    %13 = vector.broadcast %12 : vector<1x96xf32> to vector<16x96xf32>
    %14 = arith.addf %11, %13 : vector<16x96xf32>
    %15 = vector.extract_strided_slice %14 {offsets = [0, 0], sizes = [16, 32], strides = [1, 1]} : vector<16x96xf32> to vector<16x32xf32>
    %16 = vector.extract_strided_slice %14 {offsets = [0, 32], sizes = [16, 32], strides = [1, 1]} : vector<16x96xf32> to vector<16x32xf32>
    %17 = vector.extract_strided_slice %14 {offsets = [0, 64], sizes = [16, 32], strides = [1, 1]} : vector<16x96xf32> to vector<16x32xf32>
    %c0_9 = arith.constant 0 : index
    %c0_10 = arith.constant 0 : index
    %18 = vector.load %arg4[%c0_9, %c0_10] : memref<32x32xbf16, #tpu.memory_space<vmem>>, vector<32x32xbf16>
    %c0_11 = arith.constant 0 : index
    %c0_12 = arith.constant 0 : index
    %19 = vector.load %arg5[%c0_11, %c0_12] : memref<1x32xf32, #tpu.memory_space<vmem>>, vector<1x32xf32>
    %20 = vector.shape_cast %15 : vector<16x32xf32> to vector<2x8x32xf32>
    %21 = arith.truncf %20 : vector<2x8x32xf32> to vector<2x8x32xbf16>
    %22 = vector.shape_cast %16 : vector<16x32xf32> to vector<2x8x32xf32>
    %23 = arith.truncf %22 : vector<2x8x32xf32> to vector<2x8x32xbf16>
    %24 = vector.shape_cast %17 : vector<16x32xf32> to vector<2x8x32xf32>
    %25 = arith.truncf %24 : vector<2x8x32xf32> to vector<2x8x32xbf16>
    %26 = vector.extract_strided_slice %21 {offsets = [0, 0, 0], sizes = [2, 8, 8], strides = [1, 1, 1]} : vector<2x8x32xbf16> to vector<2x8x8xbf16>
    %27 = vector.extract_strided_slice %23 {offsets = [0, 0, 0], sizes = [2, 8, 8], strides = [1, 1, 1]} : vector<2x8x32xbf16> to vector<2x8x8xbf16>
    %cst_13 = arith.constant dense<0.000000e+00> : vector<2x8x8xf32>
    %28 = tpu.matmul %26, %27, %cst_13 {dimension_numbers = #tpu.dot_dimension_numbers<[2], [2], [1], [1], [0, 0, 0, 1, 1, 1], [0], [0]>} : vector<2x8x8xbf16>, vector<2x8x8xbf16>, vector<2x8x8xf32> -> vector<2x8x8xf32>
    %cst_14 = arith.constant 0.353553385 : f32
    %29 = vector.broadcast %cst_14 : f32 to vector<2x8x8xf32>
    %30 = arith.mulf %28, %29 : vector<2x8x8xf32>
    %31 = arith.addf %30, %8 : vector<2x8x8xf32>
    %cst_15 = arith.constant dense<0xFF800000> : vector<2x8xf32>
    %32 = vector.multi_reduction <maximumf>, %31, %cst_15 [2] : vector<2x8x8xf32> to vector<2x8xf32>
    %33 = vector.shape_cast %32 : vector<2x8xf32> to vector<2x8x1xf32>
    %34 = vector.broadcast %33 : vector<2x8x1xf32> to vector<2x8x8xf32>
    %35 = arith.subf %31, %34 : vector<2x8x8xf32>
    %36 = math.exp %35 : vector<2x8x8xf32>
    %cst_16 = arith.constant dense<0.000000e+00> : vector<2x8xf32>
    %37 = vector.multi_reduction <add>, %36, %cst_16 [2] : vector<2x8x8xf32> to vector<2x8xf32>
    %38 = vector.shape_cast %37 : vector<2x8xf32> to vector<2x8x1xf32>
    %39 = tpu.reciprocal %38 {approx = true} : vector<2x8x1xf32> -> vector<2x8x1xf32>
    %40 = vector.broadcast %39 : vector<2x8x1xf32> to vector<2x8x8xf32>
    %41 = arith.mulf %36, %40 : vector<2x8x8xf32>
    %42 = arith.truncf %41 : vector<2x8x8xf32> to vector<2x8x8xbf16>
    %43 = vector.extract_strided_slice %25 {offsets = [0, 0, 0], sizes = [2, 8, 8], strides = [1, 1, 1]} : vector<2x8x32xbf16> to vector<2x8x8xbf16>
    %cst_17 = arith.constant dense<0.000000e+00> : vector<2x8x8xf32>
    %44 = tpu.matmul %42, %43, %cst_17 {dimension_numbers = #tpu.dot_dimension_numbers<[2], [1], [1], [2], [0, 0, 0, 1, 1, 2], [0], [0]>} : vector<2x8x8xbf16>, vector<2x8x8xbf16>, vector<2x8x8xf32> -> vector<2x8x8xf32>
    %45 = vector.shape_cast %44 : vector<2x8x8xf32> to vector<16x8xf32>
    %c0_18 = arith.constant 0 : index
    %c0_19 = arith.constant 0 : index
    %46 = vector.load %arg16[%c0_18, %c0_19] : memref<16x32xf32, #tpu.memory_space<vmem>>, vector<16x8xf32>
    tpu.vector_store %arg16[%c0_18, %c0_19], %45 {strides = array<i32>} : memref<16x32xf32, #tpu.memory_space<vmem>>, vector<16x8xf32>,
    %47 = vector.extract_strided_slice %21 {offsets = [0, 0, 8], sizes = [2, 8, 8], strides = [1, 1, 1]} : vector<2x8x32xbf16> to vector<2x8x8xbf16>
    %48 = vector.extract_strided_slice %23 {offsets = [0, 0, 8], sizes = [2, 8, 8], strides = [1, 1, 1]} : vector<2x8x32xbf16> to vector<2x8x8xbf16>
    %cst_20 = arith.constant dense<0.000000e+00> : vector<2x8x8xf32>
    %49 = tpu.matmul %47, %48, %cst_20 {dimension_numbers = #tpu.dot_dimension_numbers<[2], [2], [1], [1], [0, 0, 0, 1, 1, 1], [0], [0]>} : vector<2x8x8xbf16>, vector<2x8x8xbf16>, vector<2x8x8xf32> -> vector<2x8x8xf32>
    %cst_21 = arith.constant 0.353553385 : f32
    %50 = vector.broadcast %cst_21 : f32 to vector<2x8x8xf32>
    %51 = arith.mulf %49, %50 : vector<2x8x8xf32>
    %52 = arith.addf %51, %8 : vector<2x8x8xf32>
    %cst_22 = arith.constant dense<0xFF800000> : vector<2x8xf32>
    %53 = vector.multi_reduction <maximumf>, %52, %cst_22 [2] : vector<2x8x8xf32> to vector<2x8xf32>
    %54 = vector.shape_cast %53 : vector<2x8xf32> to vector<2x8x1xf32>
    %55 = vector.broadcast %54 : vector<2x8x1xf32> to vector<2x8x8xf32>
    %56 = arith.subf %52, %55 : vector<2x8x8xf32>
    %57 = math.exp %56 : vector<2x8x8xf32>
    %cst_23 = arith.constant dense<0.000000e+00> : vector<2x8xf32>
    %58 = vector.multi_reduction <add>, %57, %cst_23 [2] : vector<2x8x8xf32> to vector<2x8xf32>
    %59 = vector.shape_cast %58 : vector<2x8xf32> to vector<2x8x1xf32>
    %60 = tpu.reciprocal %59 {approx = true} : vector<2x8x1xf32> -> vector<2x8x1xf32>
    %61 = vector.broadcast %60 : vector<2x8x1xf32> to vector<2x8x8xf32>
    %62 = arith.mulf %57, %61 : vector<2x8x8xf32>
    %63 = arith.truncf %62 : vector<2x8x8xf32> to vector<2x8x8xbf16>
    %64 = vector.extract_strided_slice %25 {offsets = [0, 0, 8], sizes = [2, 8, 8], strides = [1, 1, 1]} : vector<2x8x32xbf16> to vector<2x8x8xbf16>
    %cst_24 = arith.constant dense<0.000000e+00> : vector<2x8x8xf32>
    %65 = tpu.matmul %63, %64, %cst_24 {dimension_numbers = #tpu.dot_dimension_numbers<[2], [1], [1], [2], [0, 0, 0, 1, 1, 2], [0], [0]>} : vector<2x8x8xbf16>, vector<2x8x8xbf16>, vector<2x8x8xf32> -> vector<2x8x8xf32>
    %66 = vector.shape_cast %65 : vector<2x8x8xf32> to vector<16x8xf32>
    %c0_25 = arith.constant 0 : index
    %c8 = arith.constant 8 : index
    %67 = vector.load %arg16[%c0_25, %c8] : memref<16x32xf32, #tpu.memory_space<vmem>>, vector<16x8xf32>
    tpu.vector_store %arg16[%c0_25, %c8], %66 {strides = array<i32>} : memref<16x32xf32, #tpu.memory_space<vmem>>, vector<16x8xf32>,
    %68 = vector.extract_strided_slice %21 {offsets = [0, 0, 16], sizes = [2, 8, 8], strides = [1, 1, 1]} : vector<2x8x32xbf16> to vector<2x8x8xbf16>
    %69 = vector.extract_strided_slice %23 {offsets = [0, 0, 16], sizes = [2, 8, 8], strides = [1, 1, 1]} : vector<2x8x32xbf16> to vector<2x8x8xbf16>
    %cst_26 = arith.constant dense<0.000000e+00> : vector<2x8x8xf32>
    %70 = tpu.matmul %68, %69, %cst_26 {dimension_numbers = #tpu.dot_dimension_numbers<[2], [2], [1], [1], [0, 0, 0, 1, 1, 1], [0], [0]>} : vector<2x8x8xbf16>, vector<2x8x8xbf16>, vector<2x8x8xf32> -> vector<2x8x8xf32>
    %cst_27 = arith.constant 0.353553385 : f32
    %71 = vector.broadcast %cst_27 : f32 to vector<2x8x8xf32>
    %72 = arith.mulf %70, %71 : vector<2x8x8xf32>
    %73 = arith.addf %72, %8 : vector<2x8x8xf32>
    %cst_28 = arith.constant dense<0xFF800000> : vector<2x8xf32>
    %74 = vector.multi_reduction <maximumf>, %73, %cst_28 [2] : vector<2x8x8xf32> to vector<2x8xf32>
    %75 = vector.shape_cast %74 : vector<2x8xf32> to vector<2x8x1xf32>
    %76 = vector.broadcast %75 : vector<2x8x1xf32> to vector<2x8x8xf32>
    %77 = arith.subf %73, %76 : vector<2x8x8xf32>
    %78 = math.exp %77 : vector<2x8x8xf32>
    %cst_29 = arith.constant dense<0.000000e+00> : vector<2x8xf32>
    %79 = vector.multi_reduction <add>, %78, %cst_29 [2] : vector<2x8x8xf32> to vector<2x8xf32>
    %80 = vector.shape_cast %79 : vector<2x8xf32> to vector<2x8x1xf32>
    %81 = tpu.reciprocal %80 {approx = true} : vector<2x8x1xf32> -> vector<2x8x1xf32>
    %82 = vector.broadcast %81 : vector<2x8x1xf32> to vector<2x8x8xf32>
    %83 = arith.mulf %78, %82 : vector<2x8x8xf32>
    %84 = arith.truncf %83 : vector<2x8x8xf32> to vector<2x8x8xbf16>
    %85 = vector.extract_strided_slice %25 {offsets = [0, 0, 16], sizes = [2, 8, 8], strides = [1, 1, 1]} : vector<2x8x32xbf16> to vector<2x8x8xbf16>
    %cst_30 = arith.constant dense<0.000000e+00> : vector<2x8x8xf32>
    %86 = tpu.matmul %84, %85, %cst_30 {dimension_numbers = #tpu.dot_dimension_numbers<[2], [1], [1], [2], [0, 0, 0, 1, 1, 2], [0], [0]>} : vector<2x8x8xbf16>, vector<2x8x8xbf16>, vector<2x8x8xf32> -> vector<2x8x8xf32>
    %87 = vector.shape_cast %86 : vector<2x8x8xf32> to vector<16x8xf32>
    %c0_31 = arith.constant 0 : index
    %c16 = arith.constant 16 : index
    %88 = vector.load %arg16[%c0_31, %c16] : memref<16x32xf32, #tpu.memory_space<vmem>>, vector<16x8xf32>
    tpu.vector_store %arg16[%c0_31, %c16], %87 {strides = array<i32>} : memref<16x32xf32, #tpu.memory_space<vmem>>, vector<16x8xf32>,
    %89 = vector.extract_strided_slice %21 {offsets = [0, 0, 24], sizes = [2, 8, 8], strides = [1, 1, 1]} : vector<2x8x32xbf16> to vector<2x8x8xbf16>
    %90 = vector.extract_strided_slice %23 {offsets = [0, 0, 24], sizes = [2, 8, 8], strides = [1, 1, 1]} : vector<2x8x32xbf16> to vector<2x8x8xbf16>
    %cst_32 = arith.constant dense<0.000000e+00> : vector<2x8x8xf32>
    %91 = tpu.matmul %89, %90, %cst_32 {dimension_numbers = #tpu.dot_dimension_numbers<[2], [2], [1], [1], [0, 0, 0, 1, 1, 1], [0], [0]>} : vector<2x8x8xbf16>, vector<2x8x8xbf16>, vector<2x8x8xf32> -> vector<2x8x8xf32>
    %cst_33 = arith.constant 0.353553385 : f32
    %92 = vector.broadcast %cst_33 : f32 to vector<2x8x8xf32>
    %93 = arith.mulf %91, %92 : vector<2x8x8xf32>
    %94 = arith.addf %93, %8 : vector<2x8x8xf32>
    %cst_34 = arith.constant dense<0xFF800000> : vector<2x8xf32>
    %95 = vector.multi_reduction <maximumf>, %94, %cst_34 [2] : vector<2x8x8xf32> to vector<2x8xf32>
    %96 = vector.shape_cast %95 : vector<2x8xf32> to vector<2x8x1xf32>
    %97 = vector.broadcast %96 : vector<2x8x1xf32> to vector<2x8x8xf32>
    %98 = arith.subf %94, %97 : vector<2x8x8xf32>
    %99 = math.exp %98 : vector<2x8x8xf32>
    %cst_35 = arith.constant dense<0.000000e+00> : vector<2x8xf32>
    %100 = vector.multi_reduction <add>, %99, %cst_35 [2] : vector<2x8x8xf32> to vector<2x8xf32>
    %101 = vector.shape_cast %100 : vector<2x8xf32> to vector<2x8x1xf32>
    %102 = tpu.reciprocal %101 {approx = true} : vector<2x8x1xf32> -> vector<2x8x1xf32>
    %103 = vector.broadcast %102 : vector<2x8x1xf32> to vector<2x8x8xf32>
    %104 = arith.mulf %99, %103 : vector<2x8x8xf32>
    %105 = arith.truncf %104 : vector<2x8x8xf32> to vector<2x8x8xbf16>
    %106 = vector.extract_strided_slice %25 {offsets = [0, 0, 24], sizes = [2, 8, 8], strides = [1, 1, 1]} : vector<2x8x32xbf16> to vector<2x8x8xbf16>
    %cst_36 = arith.constant dense<0.000000e+00> : vector<2x8x8xf32>
    %107 = tpu.matmul %105, %106, %cst_36 {dimension_numbers = #tpu.dot_dimension_numbers<[2], [1], [1], [2], [0, 0, 0, 1, 1, 2], [0], [0]>} : vector<2x8x8xbf16>, vector<2x8x8xbf16>, vector<2x8x8xf32> -> vector<2x8x8xf32>
    %108 = vector.shape_cast %107 : vector<2x8x8xf32> to vector<16x8xf32>
    %c0_37 = arith.constant 0 : index
    %c24 = arith.constant 24 : index
    %109 = vector.load %arg16[%c0_37, %c24] : memref<16x32xf32, #tpu.memory_space<vmem>>, vector<16x8xf32>
    tpu.vector_store %arg16[%c0_37, %c24], %108 {strides = array<i32>} : memref<16x32xf32, #tpu.memory_space<vmem>>, vector<16x8xf32>,
    %c0_38 = arith.constant 0 : index
    %c0_39 = arith.constant 0 : index
    %110 = vector.load %arg16[%c0_38, %c0_39] : memref<16x32xf32, #tpu.memory_space<vmem>>, vector<16x32xf32>
    %111 = arith.truncf %110 : vector<16x32xf32> to vector<16x32xbf16>
    %cst_40 = arith.constant dense<0.000000e+00> : vector<16x32xf32>
    %112 = tpu.matmul %111, %18, %cst_40 {dimension_numbers = #tpu.dot_dimension_numbers<[1], [0], [0], [1], [0, 0, 1, 1], [], []>} : vector<16x32xbf16>, vector<32x32xbf16>, vector<16x32xf32> -> vector<16x32xf32>
    %113 = vector.broadcast %19 : vector<1x32xf32> to vector<16x32xf32>
    %114 = arith.addf %112, %113 : vector<16x32xf32>
    %115 = arith.addf %0, %114 : vector<16x32xf32>
    %c0_41 = arith.constant 0 : index
    %c0_42 = arith.constant 0 : index
    %116 = vector.load %arg6[%c0_41, %c0_42] : memref<1x32xf32, #tpu.memory_space<vmem>>, vector<1x32xf32>
    %c0_43 = arith.constant 0 : index
    %c0_44 = arith.constant 0 : index
    %117 = vector.load %arg7[%c0_43, %c0_44] : memref<1x32xf32, #tpu.memory_space<vmem>>, vector<1x32xf32>
    %cst_45 = arith.constant dense<0.000000e+00> : vector<16xf32>
    %118 = vector.multi_reduction <add>, %115, %cst_45 [1] : vector<16x32xf32> to vector<16xf32>
    %119 = vector.shape_cast %118 : vector<16xf32> to vector<16x1xf32>
    %cst_46 = arith.constant 3.200000e+01 : f32
    %120 = vector.broadcast %cst_46 : f32 to vector<16x1xf32>
    %121 = arith.divf %119, %120 : vector<16x1xf32>
    %122 = vector.broadcast %121 : vector<16x1xf32> to vector<16x32xf32>
    %123 = arith.subf %115, %122 : vector<16x32xf32>
    %124 = arith.mulf %123, %123 : vector<16x32xf32>
    %cst_47 = arith.constant dense<0.000000e+00> : vector<16xf32>
    %125 = vector.multi_reduction <add>, %124, %cst_47 [1] : vector<16x32xf32> to vector<16xf32>
    %126 = vector.shape_cast %125 : vector<16xf32> to vector<16x1xf32>
    %cst_48 = arith.constant 3.200000e+01 : f32
    %127 = vector.broadcast %cst_48 : f32 to vector<16x1xf32>
    %128 = arith.divf %126, %127 : vector<16x1xf32>
    %129 = vector.broadcast %121 : vector<16x1xf32> to vector<16x32xf32>
    %130 = arith.subf %115, %129 : vector<16x32xf32>
    %cst_49 = arith.constant 9.99999974E-6 : f32
    %131 = vector.broadcast %cst_49 : f32 to vector<16x1xf32>
    %132 = arith.addf %128, %131 : vector<16x1xf32>
    %133 = math.rsqrt %132 : vector<16x1xf32>
    %134 = vector.broadcast %133 : vector<16x1xf32> to vector<16x32xf32>
    %135 = arith.mulf %130, %134 : vector<16x32xf32>
    %136 = vector.broadcast %116 : vector<1x32xf32> to vector<16x32xf32>
    %137 = arith.mulf %135, %136 : vector<16x32xf32>
    %138 = vector.broadcast %117 : vector<1x32xf32> to vector<16x32xf32>
    %139 = arith.addf %137, %138 : vector<16x32xf32>
    %c0_50 = arith.constant 0 : index
    %c0_51 = arith.constant 0 : index
    %140 = vector.load %arg8[%c0_50, %c0_51] : memref<32x64xbf16, #tpu.memory_space<vmem>>, vector<32x64xbf16>
    %c0_52 = arith.constant 0 : index
    %c0_53 = arith.constant 0 : index
    %141 = vector.load %arg9[%c0_52, %c0_53] : memref<1x64xf32, #tpu.memory_space<vmem>>, vector<1x64xf32>
    %c0_54 = arith.constant 0 : index
    %c0_55 = arith.constant 0 : index
    %142 = vector.load %arg10[%c0_54, %c0_55] : memref<64x32xbf16, #tpu.memory_space<vmem>>, vector<64x32xbf16>
    %c0_56 = arith.constant 0 : index
    %c0_57 = arith.constant 0 : index
    %143 = vector.load %arg11[%c0_56, %c0_57] : memref<1x32xf32, #tpu.memory_space<vmem>>, vector<1x32xf32>
    %144 = arith.truncf %139 : vector<16x32xf32> to vector<16x32xbf16>
    %cst_58 = arith.constant dense<0.000000e+00> : vector<16x64xf32>
    %145 = tpu.matmul %144, %140, %cst_58 {dimension_numbers = #tpu.dot_dimension_numbers<[1], [0], [0], [1], [0, 0, 1, 1], [], []>} : vector<16x32xbf16>, vector<32x64xbf16>, vector<16x64xf32> -> vector<16x64xf32>
    %146 = vector.broadcast %141 : vector<1x64xf32> to vector<16x64xf32>
    %147 = arith.addf %145, %146 : vector<16x64xf32>
    %148 = arith.negf %147 : vector<16x64xf32>
    %149 = math.exp %148 : vector<16x64xf32>
    %cst_59 = arith.constant 1.000000e+00 : f32
    %150 = vector.broadcast %cst_59 : f32 to vector<16x64xf32>
    %151 = arith.addf %150, %149 : vector<16x64xf32>
    %152 = arith.divf %150, %151 : vector<16x64xf32>
    %153 = arith.mulf %147, %152 : vector<16x64xf32>
    %154 = arith.truncf %153 : vector<16x64xf32> to vector<16x64xbf16>
    %cst_60 = arith.constant dense<0.000000e+00> : vector<16x32xf32>
    %155 = tpu.matmul %154, %142, %cst_60 {dimension_numbers = #tpu.dot_dimension_numbers<[1], [0], [0], [1], [0, 0, 1, 1], [], []>} : vector<16x64xbf16>, vector<64x32xbf16>, vector<16x32xf32> -> vector<16x32xf32>
    %156 = vector.broadcast %143 : vector<1x32xf32> to vector<16x32xf32>
    %157 = arith.addf %155, %156 : vector<16x32xf32>
    %158 = arith.addf %139, %157 : vector<16x32xf32>
    %c0_61 = arith.constant 0 : index
    %c0_62 = arith.constant 0 : index
    %159 = vector.load %arg12[%c0_61, %c0_62] : memref<1x32xf32, #tpu.memory_space<vmem>>, vector<1x32xf32>
    %c0_63 = arith.constant 0 : index
    %c0_64 = arith.constant 0 : index
    %160 = vector.load %arg13[%c0_63, %c0_64] : memref<1x32xf32, #tpu.memory_space<vmem>>, vector<1x32xf32>
    %cst_65 = arith.constant dense<0.000000e+00> : vector<16xf32>
    %161 = vector.multi_reduction <add>, %158, %cst_65 [1] : vector<16x32xf32> to vector<16xf32>
    %162 = vector.shape_cast %161 : vector<16xf32> to vector<16x1xf32>
    %cst_66 = arith.constant 3.200000e+01 : f32
    %163 = vector.broadcast %cst_66 : f32 to vector<16x1xf32>
    %164 = arith.divf %162, %163 : vector<16x1xf32>
    %165 = vector.broadcast %164 : vector<16x1xf32> to vector<16x32xf32>
    %166 = arith.subf %158, %165 : vector<16x32xf32>
    %167 = arith.mulf %166, %166 : vector<16x32xf32>
    %cst_67 = arith.constant dense<0.000000e+00> : vector<16xf32>
    %168 = vector.multi_reduction <add>, %167, %cst_67 [1] : vector<16x32xf32> to vector<16xf32>
    %169 = vector.shape_cast %168 : vector<16xf32> to vector<16x1xf32>
    %cst_68 = arith.constant 3.200000e+01 : f32
    %170 = vector.broadcast %cst_68 : f32 to vector<16x1xf32>
    %171 = arith.divf %169, %170 : vector<16x1xf32>
    %172 = vector.broadcast %164 : vector<16x1xf32> to vector<16x32xf32>
    %173 = arith.subf %158, %172 : vector<16x32xf32>
    %cst_69 = arith.constant 9.99999974E-6 : f32
    %174 = vector.broadcast %cst_69 : f32 to vector<16x1xf32>
    %175 = arith.addf %171, %174 : vector<16x1xf32>
    %176 = math.rsqrt %175 : vector<16x1xf32>
    %177 = vector.broadcast %176 : vector<16x1xf32> to vector<16x32xf32>
    %178 = arith.mulf %173, %177 : vector<16x32xf32>
    %179 = vector.broadcast %159 : vector<1x32xf32> to vector<16x32xf32>
    %180 = arith.mulf %178, %179 : vector<16x32xf32>
    %181 = vector.broadcast %160 : vector<1x32xf32> to vector<16x32xf32>
    %182 = arith.addf %180, %181 : vector<16x32xf32>
    %c0_70 = arith.constant 0 : index
    %c0_71 = arith.constant 0 : index
    %183 = vector.load %arg14[%c0_70, %c0_71] : memref<32x128xbf16, #tpu.memory_space<vmem>>, vector<32x128xbf16>
    %184 = arith.truncf %182 : vector<16x32xf32> to vector<16x32xbf16>
    %cst_72 = arith.constant dense<0.000000e+00> : vector<16x128xf32>
    %185 = tpu.matmul %184, %183, %cst_72 {dimension_numbers = #tpu.dot_dimension_numbers<[1], [0], [0], [1], [0, 0, 1, 1], [], []>} : vector<16x32xbf16>, vector<32x128xbf16>, vector<16x128xf32> -> vector<16x128xf32>
    %186 = arith.truncf %185 : vector<16x128xf32> to vector<16x128xbf16>
    %c0_73 = arith.constant 0 : index
    %c0_74 = arith.constant 0 : index
    %187 = vector.load %arg15[%c0_73, %c0_74] : memref<16x128xbf16, #tpu.memory_space<vmem>>, vector<16x128xbf16>
    tpu.vector_store %arg15[%c0_73, %c0_74], %186 {strides = array<i32>} : memref<16x128xbf16, #tpu.memory_space<vmem>>, vector<16x128xbf16>,
    return
  }
}

module attributes {stable_mosaic.version = 11 : i64} {
  func.func @_decoder_lmhead_kernel(%arg0: memref<16x32xf32, #tpu.memory_space<vmem>>, %arg1: memref<16x128xbf16, #tpu.memory_space<vmem>>, %arg2: memref<2x8xf32, #tpu.memory_space<vmem>>, %arg3: memref<32x96xbf16, #tpu.memory_space<vmem>>, %arg4: memref<1x96xf32, #tpu.memory_space<vmem>>, %arg5: memref<32x32xbf16, #tpu.memory_space<vmem>>, %arg6: memref<1x32xf32, #tpu.memory_space<vmem>>, %arg7: memref<1x32xf32, #tpu.memory_space<vmem>>, %arg8: memref<1x32xf32, #tpu.memory_space<vmem>>, %arg9: memref<32x32xbf16, #tpu.memory_space<vmem>>, %arg10: memref<1x32xf32, #tpu.memory_space<vmem>>, %arg11: memref<128x64xbf16, #tpu.memory_space<vmem>>, %arg12: memref<1x64xf32, #tpu.memory_space<vmem>>, %arg13: memref<32x32xbf16, #tpu.memory_space<vmem>>, %arg14: memref<1x32xf32, #tpu.memory_space<vmem>>, %arg15: memref<1x32xf32, #tpu.memory_space<vmem>>, %arg16: memref<1x32xf32, #tpu.memory_space<vmem>>, %arg17: memref<32x64xbf16, #tpu.memory_space<vmem>>, %arg18: memref<1x64xf32, #tpu.memory_space<vmem>>, %arg19: memref<64x32xbf16, #tpu.memory_space<vmem>>, %arg20: memref<1x32xf32, #tpu.memory_space<vmem>>, %arg21: memref<1x32xf32, #tpu.memory_space<vmem>>, %arg22: memref<1x32xf32, #tpu.memory_space<vmem>>, %arg23: memref<128x32xbf16, #tpu.memory_space<vmem>>, %arg24: memref<1x128xf32, #tpu.memory_space<vmem>>, %arg25: memref<16x128xf32, #tpu.memory_space<vmem>>, %arg26: memref<16x32xf32, #tpu.memory_space<vmem>>) attributes {dimension_semantics = [], scalar_prefetch = 0 : i64, scratch_operands = 1 : i64, tpu.core_type = #tpu.core_type<tc>} {
    %c0 = arith.constant 0 : index
    %c0_0 = arith.constant 0 : index
    %0 = vector.load %arg0[%c0, %c0_0] : memref<16x32xf32, #tpu.memory_space<vmem>>, vector<16x32xf32>
    %c0_1 = arith.constant 0 : index
    %c0_2 = arith.constant 0 : index
    %1 = vector.load %arg1[%c0_1, %c0_2] : memref<16x128xbf16, #tpu.memory_space<vmem>>, vector<16x128xbf16>
    %2 = tpu.iota {dimensions = array<i32: 0>} : vector<8x8xi32>
    %3 = tpu.iota {dimensions = array<i32: 1>} : vector<8x8xi32>
    %4 = arith.cmpi sgt, %3, %2 : vector<8x8xi32>
    %cst = arith.constant -1.000000e+09 : f32
    %cst_3 = arith.constant 0.000000e+00 : f32
    %5 = vector.broadcast %cst : f32 to vector<8x8xf32>
    %6 = vector.broadcast %cst_3 : f32 to vector<8x8xf32>
    %7 = arith.select %4, %5, %6 : vector<8x8xi1>, vector<8x8xf32>
    %8 = vector.shape_cast %7 : vector<8x8xf32> to vector<1x8x8xf32>
    %9 = vector.shape_cast %8 : vector<1x8x8xf32> to vector<1x8x8xf32>
    %10 = vector.broadcast %9 : vector<1x8x8xf32> to vector<2x8x8xf32>
    %c0_4 = arith.constant 0 : index
    %c0_5 = arith.constant 0 : index
    %11 = vector.load %arg2[%c0_4, %c0_5] : memref<2x8xf32, #tpu.memory_space<vmem>>, vector<2x8xf32>
    %cst_6 = arith.constant 1.000000e+00 : f32
    %12 = vector.broadcast %cst_6 : f32 to vector<2x8xf32>
    %13 = arith.subf %12, %11 : vector<2x8xf32>
    %cst_7 = arith.constant -1.000000e+09 : f32
    %14 = vector.broadcast %cst_7 : f32 to vector<2x8xf32>
    %15 = arith.mulf %13, %14 : vector<2x8xf32>
    %16 = vector.shape_cast %15 : vector<2x8xf32> to vector<2x1x8xf32>
    %17 = vector.shape_cast %16 : vector<2x1x8xf32> to vector<2x1x8xf32>
    %18 = vector.broadcast %17 : vector<2x1x8xf32> to vector<2x8x8xf32>
    %c0_8 = arith.constant 0 : index
    %c0_9 = arith.constant 0 : index
    %19 = vector.load %arg3[%c0_8, %c0_9] : memref<32x96xbf16, #tpu.memory_space<vmem>>, vector<32x96xbf16>
    %20 = arith.truncf %0 : vector<16x32xf32> to vector<16x32xbf16>
    %cst_10 = arith.constant dense<0.000000e+00> : vector<16x96xf32>
    %21 = tpu.matmul %20, %19, %cst_10 {dimension_numbers = #tpu.dot_dimension_numbers<[1], [0], [0], [1], [0, 0, 1, 1], [], []>} : vector<16x32xbf16>, vector<32x96xbf16>, vector<16x96xf32> -> vector<16x96xf32>
    %c0_11 = arith.constant 0 : index
    %c0_12 = arith.constant 0 : index
    %22 = vector.load %arg4[%c0_11, %c0_12] : memref<1x96xf32, #tpu.memory_space<vmem>>, vector<1x96xf32>
    %23 = vector.broadcast %22 : vector<1x96xf32> to vector<16x96xf32>
    %24 = arith.addf %21, %23 : vector<16x96xf32>
    %25 = vector.extract_strided_slice %24 {offsets = [0, 0], sizes = [16, 32], strides = [1, 1]} : vector<16x96xf32> to vector<16x32xf32>
    %26 = vector.extract_strided_slice %24 {offsets = [0, 32], sizes = [16, 32], strides = [1, 1]} : vector<16x96xf32> to vector<16x32xf32>
    %27 = vector.extract_strided_slice %24 {offsets = [0, 64], sizes = [16, 32], strides = [1, 1]} : vector<16x96xf32> to vector<16x32xf32>
    %c0_13 = arith.constant 0 : index
    %c0_14 = arith.constant 0 : index
    %28 = vector.load %arg5[%c0_13, %c0_14] : memref<32x32xbf16, #tpu.memory_space<vmem>>, vector<32x32xbf16>
    %c0_15 = arith.constant 0 : index
    %c0_16 = arith.constant 0 : index
    %29 = vector.load %arg6[%c0_15, %c0_16] : memref<1x32xf32, #tpu.memory_space<vmem>>, vector<1x32xf32>
    %30 = vector.shape_cast %25 : vector<16x32xf32> to vector<2x8x32xf32>
    %31 = arith.truncf %30 : vector<2x8x32xf32> to vector<2x8x32xbf16>
    %32 = vector.shape_cast %26 : vector<16x32xf32> to vector<2x8x32xf32>
    %33 = arith.truncf %32 : vector<2x8x32xf32> to vector<2x8x32xbf16>
    %34 = vector.shape_cast %27 : vector<16x32xf32> to vector<2x8x32xf32>
    %35 = arith.truncf %34 : vector<2x8x32xf32> to vector<2x8x32xbf16>
    %36 = vector.extract_strided_slice %31 {offsets = [0, 0, 0], sizes = [2, 8, 8], strides = [1, 1, 1]} : vector<2x8x32xbf16> to vector<2x8x8xbf16>
    %37 = vector.extract_strided_slice %33 {offsets = [0, 0, 0], sizes = [2, 8, 8], strides = [1, 1, 1]} : vector<2x8x32xbf16> to vector<2x8x8xbf16>
    %cst_17 = arith.constant dense<0.000000e+00> : vector<2x8x8xf32>
    %38 = tpu.matmul %36, %37, %cst_17 {dimension_numbers = #tpu.dot_dimension_numbers<[2], [2], [1], [1], [0, 0, 0, 1, 1, 1], [0], [0]>} : vector<2x8x8xbf16>, vector<2x8x8xbf16>, vector<2x8x8xf32> -> vector<2x8x8xf32>
    %cst_18 = arith.constant 0.353553385 : f32
    %39 = vector.broadcast %cst_18 : f32 to vector<2x8x8xf32>
    %40 = arith.mulf %38, %39 : vector<2x8x8xf32>
    %41 = arith.addf %40, %10 : vector<2x8x8xf32>
    %cst_19 = arith.constant dense<0xFF800000> : vector<2x8xf32>
    %42 = vector.multi_reduction <maximumf>, %41, %cst_19 [2] : vector<2x8x8xf32> to vector<2x8xf32>
    %43 = vector.shape_cast %42 : vector<2x8xf32> to vector<2x8x1xf32>
    %44 = vector.broadcast %43 : vector<2x8x1xf32> to vector<2x8x8xf32>
    %45 = arith.subf %41, %44 : vector<2x8x8xf32>
    %46 = math.exp %45 : vector<2x8x8xf32>
    %cst_20 = arith.constant dense<0.000000e+00> : vector<2x8xf32>
    %47 = vector.multi_reduction <add>, %46, %cst_20 [2] : vector<2x8x8xf32> to vector<2x8xf32>
    %48 = vector.shape_cast %47 : vector<2x8xf32> to vector<2x8x1xf32>
    %49 = tpu.reciprocal %48 {approx = true} : vector<2x8x1xf32> -> vector<2x8x1xf32>
    %50 = vector.broadcast %49 : vector<2x8x1xf32> to vector<2x8x8xf32>
    %51 = arith.mulf %46, %50 : vector<2x8x8xf32>
    %52 = arith.truncf %51 : vector<2x8x8xf32> to vector<2x8x8xbf16>
    %53 = vector.extract_strided_slice %35 {offsets = [0, 0, 0], sizes = [2, 8, 8], strides = [1, 1, 1]} : vector<2x8x32xbf16> to vector<2x8x8xbf16>
    %cst_21 = arith.constant dense<0.000000e+00> : vector<2x8x8xf32>
    %54 = tpu.matmul %52, %53, %cst_21 {dimension_numbers = #tpu.dot_dimension_numbers<[2], [1], [1], [2], [0, 0, 0, 1, 1, 2], [0], [0]>} : vector<2x8x8xbf16>, vector<2x8x8xbf16>, vector<2x8x8xf32> -> vector<2x8x8xf32>
    %55 = vector.shape_cast %54 : vector<2x8x8xf32> to vector<16x8xf32>
    %c0_22 = arith.constant 0 : index
    %c0_23 = arith.constant 0 : index
    %56 = vector.load %arg26[%c0_22, %c0_23] : memref<16x32xf32, #tpu.memory_space<vmem>>, vector<16x8xf32>
    tpu.vector_store %arg26[%c0_22, %c0_23], %55 {strides = array<i32>} : memref<16x32xf32, #tpu.memory_space<vmem>>, vector<16x8xf32>,
    %57 = vector.extract_strided_slice %31 {offsets = [0, 0, 8], sizes = [2, 8, 8], strides = [1, 1, 1]} : vector<2x8x32xbf16> to vector<2x8x8xbf16>
    %58 = vector.extract_strided_slice %33 {offsets = [0, 0, 8], sizes = [2, 8, 8], strides = [1, 1, 1]} : vector<2x8x32xbf16> to vector<2x8x8xbf16>
    %cst_24 = arith.constant dense<0.000000e+00> : vector<2x8x8xf32>
    %59 = tpu.matmul %57, %58, %cst_24 {dimension_numbers = #tpu.dot_dimension_numbers<[2], [2], [1], [1], [0, 0, 0, 1, 1, 1], [0], [0]>} : vector<2x8x8xbf16>, vector<2x8x8xbf16>, vector<2x8x8xf32> -> vector<2x8x8xf32>
    %cst_25 = arith.constant 0.353553385 : f32
    %60 = vector.broadcast %cst_25 : f32 to vector<2x8x8xf32>
    %61 = arith.mulf %59, %60 : vector<2x8x8xf32>
    %62 = arith.addf %61, %10 : vector<2x8x8xf32>
    %cst_26 = arith.constant dense<0xFF800000> : vector<2x8xf32>
    %63 = vector.multi_reduction <maximumf>, %62, %cst_26 [2] : vector<2x8x8xf32> to vector<2x8xf32>
    %64 = vector.shape_cast %63 : vector<2x8xf32> to vector<2x8x1xf32>
    %65 = vector.broadcast %64 : vector<2x8x1xf32> to vector<2x8x8xf32>
    %66 = arith.subf %62, %65 : vector<2x8x8xf32>
    %67 = math.exp %66 : vector<2x8x8xf32>
    %cst_27 = arith.constant dense<0.000000e+00> : vector<2x8xf32>
    %68 = vector.multi_reduction <add>, %67, %cst_27 [2] : vector<2x8x8xf32> to vector<2x8xf32>
    %69 = vector.shape_cast %68 : vector<2x8xf32> to vector<2x8x1xf32>
    %70 = tpu.reciprocal %69 {approx = true} : vector<2x8x1xf32> -> vector<2x8x1xf32>
    %71 = vector.broadcast %70 : vector<2x8x1xf32> to vector<2x8x8xf32>
    %72 = arith.mulf %67, %71 : vector<2x8x8xf32>
    %73 = arith.truncf %72 : vector<2x8x8xf32> to vector<2x8x8xbf16>
    %74 = vector.extract_strided_slice %35 {offsets = [0, 0, 8], sizes = [2, 8, 8], strides = [1, 1, 1]} : vector<2x8x32xbf16> to vector<2x8x8xbf16>
    %cst_28 = arith.constant dense<0.000000e+00> : vector<2x8x8xf32>
    %75 = tpu.matmul %73, %74, %cst_28 {dimension_numbers = #tpu.dot_dimension_numbers<[2], [1], [1], [2], [0, 0, 0, 1, 1, 2], [0], [0]>} : vector<2x8x8xbf16>, vector<2x8x8xbf16>, vector<2x8x8xf32> -> vector<2x8x8xf32>
    %76 = vector.shape_cast %75 : vector<2x8x8xf32> to vector<16x8xf32>
    %c0_29 = arith.constant 0 : index
    %c8 = arith.constant 8 : index
    %77 = vector.load %arg26[%c0_29, %c8] : memref<16x32xf32, #tpu.memory_space<vmem>>, vector<16x8xf32>
    tpu.vector_store %arg26[%c0_29, %c8], %76 {strides = array<i32>} : memref<16x32xf32, #tpu.memory_space<vmem>>, vector<16x8xf32>,
    %78 = vector.extract_strided_slice %31 {offsets = [0, 0, 16], sizes = [2, 8, 8], strides = [1, 1, 1]} : vector<2x8x32xbf16> to vector<2x8x8xbf16>
    %79 = vector.extract_strided_slice %33 {offsets = [0, 0, 16], sizes = [2, 8, 8], strides = [1, 1, 1]} : vector<2x8x32xbf16> to vector<2x8x8xbf16>
    %cst_30 = arith.constant dense<0.000000e+00> : vector<2x8x8xf32>
    %80 = tpu.matmul %78, %79, %cst_30 {dimension_numbers = #tpu.dot_dimension_numbers<[2], [2], [1], [1], [0, 0, 0, 1, 1, 1], [0], [0]>} : vector<2x8x8xbf16>, vector<2x8x8xbf16>, vector<2x8x8xf32> -> vector<2x8x8xf32>
    %cst_31 = arith.constant 0.353553385 : f32
    %81 = vector.broadcast %cst_31 : f32 to vector<2x8x8xf32>
    %82 = arith.mulf %80, %81 : vector<2x8x8xf32>
    %83 = arith.addf %82, %10 : vector<2x8x8xf32>
    %cst_32 = arith.constant dense<0xFF800000> : vector<2x8xf32>
    %84 = vector.multi_reduction <maximumf>, %83, %cst_32 [2] : vector<2x8x8xf32> to vector<2x8xf32>
    %85 = vector.shape_cast %84 : vector<2x8xf32> to vector<2x8x1xf32>
    %86 = vector.broadcast %85 : vector<2x8x1xf32> to vector<2x8x8xf32>
    %87 = arith.subf %83, %86 : vector<2x8x8xf32>
    %88 = math.exp %87 : vector<2x8x8xf32>
    %cst_33 = arith.constant dense<0.000000e+00> : vector<2x8xf32>
    %89 = vector.multi_reduction <add>, %88, %cst_33 [2] : vector<2x8x8xf32> to vector<2x8xf32>
    %90 = vector.shape_cast %89 : vector<2x8xf32> to vector<2x8x1xf32>
    %91 = tpu.reciprocal %90 {approx = true} : vector<2x8x1xf32> -> vector<2x8x1xf32>
    %92 = vector.broadcast %91 : vector<2x8x1xf32> to vector<2x8x8xf32>
    %93 = arith.mulf %88, %92 : vector<2x8x8xf32>
    %94 = arith.truncf %93 : vector<2x8x8xf32> to vector<2x8x8xbf16>
    %95 = vector.extract_strided_slice %35 {offsets = [0, 0, 16], sizes = [2, 8, 8], strides = [1, 1, 1]} : vector<2x8x32xbf16> to vector<2x8x8xbf16>
    %cst_34 = arith.constant dense<0.000000e+00> : vector<2x8x8xf32>
    %96 = tpu.matmul %94, %95, %cst_34 {dimension_numbers = #tpu.dot_dimension_numbers<[2], [1], [1], [2], [0, 0, 0, 1, 1, 2], [0], [0]>} : vector<2x8x8xbf16>, vector<2x8x8xbf16>, vector<2x8x8xf32> -> vector<2x8x8xf32>
    %97 = vector.shape_cast %96 : vector<2x8x8xf32> to vector<16x8xf32>
    %c0_35 = arith.constant 0 : index
    %c16 = arith.constant 16 : index
    %98 = vector.load %arg26[%c0_35, %c16] : memref<16x32xf32, #tpu.memory_space<vmem>>, vector<16x8xf32>
    tpu.vector_store %arg26[%c0_35, %c16], %97 {strides = array<i32>} : memref<16x32xf32, #tpu.memory_space<vmem>>, vector<16x8xf32>,
    %99 = vector.extract_strided_slice %31 {offsets = [0, 0, 24], sizes = [2, 8, 8], strides = [1, 1, 1]} : vector<2x8x32xbf16> to vector<2x8x8xbf16>
    %100 = vector.extract_strided_slice %33 {offsets = [0, 0, 24], sizes = [2, 8, 8], strides = [1, 1, 1]} : vector<2x8x32xbf16> to vector<2x8x8xbf16>
    %cst_36 = arith.constant dense<0.000000e+00> : vector<2x8x8xf32>
    %101 = tpu.matmul %99, %100, %cst_36 {dimension_numbers = #tpu.dot_dimension_numbers<[2], [2], [1], [1], [0, 0, 0, 1, 1, 1], [0], [0]>} : vector<2x8x8xbf16>, vector<2x8x8xbf16>, vector<2x8x8xf32> -> vector<2x8x8xf32>
    %cst_37 = arith.constant 0.353553385 : f32
    %102 = vector.broadcast %cst_37 : f32 to vector<2x8x8xf32>
    %103 = arith.mulf %101, %102 : vector<2x8x8xf32>
    %104 = arith.addf %103, %10 : vector<2x8x8xf32>
    %cst_38 = arith.constant dense<0xFF800000> : vector<2x8xf32>
    %105 = vector.multi_reduction <maximumf>, %104, %cst_38 [2] : vector<2x8x8xf32> to vector<2x8xf32>
    %106 = vector.shape_cast %105 : vector<2x8xf32> to vector<2x8x1xf32>
    %107 = vector.broadcast %106 : vector<2x8x1xf32> to vector<2x8x8xf32>
    %108 = arith.subf %104, %107 : vector<2x8x8xf32>
    %109 = math.exp %108 : vector<2x8x8xf32>
    %cst_39 = arith.constant dense<0.000000e+00> : vector<2x8xf32>
    %110 = vector.multi_reduction <add>, %109, %cst_39 [2] : vector<2x8x8xf32> to vector<2x8xf32>
    %111 = vector.shape_cast %110 : vector<2x8xf32> to vector<2x8x1xf32>
    %112 = tpu.reciprocal %111 {approx = true} : vector<2x8x1xf32> -> vector<2x8x1xf32>
    %113 = vector.broadcast %112 : vector<2x8x1xf32> to vector<2x8x8xf32>
    %114 = arith.mulf %109, %113 : vector<2x8x8xf32>
    %115 = arith.truncf %114 : vector<2x8x8xf32> to vector<2x8x8xbf16>
    %116 = vector.extract_strided_slice %35 {offsets = [0, 0, 24], sizes = [2, 8, 8], strides = [1, 1, 1]} : vector<2x8x32xbf16> to vector<2x8x8xbf16>
    %cst_40 = arith.constant dense<0.000000e+00> : vector<2x8x8xf32>
    %117 = tpu.matmul %115, %116, %cst_40 {dimension_numbers = #tpu.dot_dimension_numbers<[2], [1], [1], [2], [0, 0, 0, 1, 1, 2], [0], [0]>} : vector<2x8x8xbf16>, vector<2x8x8xbf16>, vector<2x8x8xf32> -> vector<2x8x8xf32>
    %118 = vector.shape_cast %117 : vector<2x8x8xf32> to vector<16x8xf32>
    %c0_41 = arith.constant 0 : index
    %c24 = arith.constant 24 : index
    %119 = vector.load %arg26[%c0_41, %c24] : memref<16x32xf32, #tpu.memory_space<vmem>>, vector<16x8xf32>
    tpu.vector_store %arg26[%c0_41, %c24], %118 {strides = array<i32>} : memref<16x32xf32, #tpu.memory_space<vmem>>, vector<16x8xf32>,
    %c0_42 = arith.constant 0 : index
    %c0_43 = arith.constant 0 : index
    %120 = vector.load %arg26[%c0_42, %c0_43] : memref<16x32xf32, #tpu.memory_space<vmem>>, vector<16x32xf32>
    %121 = arith.truncf %120 : vector<16x32xf32> to vector<16x32xbf16>
    %cst_44 = arith.constant dense<0.000000e+00> : vector<16x32xf32>
    %122 = tpu.matmul %121, %28, %cst_44 {dimension_numbers = #tpu.dot_dimension_numbers<[1], [0], [0], [1], [0, 0, 1, 1], [], []>} : vector<16x32xbf16>, vector<32x32xbf16>, vector<16x32xf32> -> vector<16x32xf32>
    %123 = vector.broadcast %29 : vector<1x32xf32> to vector<16x32xf32>
    %124 = arith.addf %122, %123 : vector<16x32xf32>
    %125 = arith.addf %0, %124 : vector<16x32xf32>
    %c0_45 = arith.constant 0 : index
    %c0_46 = arith.constant 0 : index
    %126 = vector.load %arg7[%c0_45, %c0_46] : memref<1x32xf32, #tpu.memory_space<vmem>>, vector<1x32xf32>
    %c0_47 = arith.constant 0 : index
    %c0_48 = arith.constant 0 : index
    %127 = vector.load %arg8[%c0_47, %c0_48] : memref<1x32xf32, #tpu.memory_space<vmem>>, vector<1x32xf32>
    %cst_49 = arith.constant dense<0.000000e+00> : vector<16xf32>
    %128 = vector.multi_reduction <add>, %125, %cst_49 [1] : vector<16x32xf32> to vector<16xf32>
    %129 = vector.shape_cast %128 : vector<16xf32> to vector<16x1xf32>
    %cst_50 = arith.constant 3.200000e+01 : f32
    %130 = vector.broadcast %cst_50 : f32 to vector<16x1xf32>
    %131 = arith.divf %129, %130 : vector<16x1xf32>
    %132 = vector.broadcast %131 : vector<16x1xf32> to vector<16x32xf32>
    %133 = arith.subf %125, %132 : vector<16x32xf32>
    %134 = arith.mulf %133, %133 : vector<16x32xf32>
    %cst_51 = arith.constant dense<0.000000e+00> : vector<16xf32>
    %135 = vector.multi_reduction <add>, %134, %cst_51 [1] : vector<16x32xf32> to vector<16xf32>
    %136 = vector.shape_cast %135 : vector<16xf32> to vector<16x1xf32>
    %cst_52 = arith.constant 3.200000e+01 : f32
    %137 = vector.broadcast %cst_52 : f32 to vector<16x1xf32>
    %138 = arith.divf %136, %137 : vector<16x1xf32>
    %139 = vector.broadcast %131 : vector<16x1xf32> to vector<16x32xf32>
    %140 = arith.subf %125, %139 : vector<16x32xf32>
    %cst_53 = arith.constant 9.99999974E-6 : f32
    %141 = vector.broadcast %cst_53 : f32 to vector<16x1xf32>
    %142 = arith.addf %138, %141 : vector<16x1xf32>
    %143 = math.rsqrt %142 : vector<16x1xf32>
    %144 = vector.broadcast %143 : vector<16x1xf32> to vector<16x32xf32>
    %145 = arith.mulf %140, %144 : vector<16x32xf32>
    %146 = vector.broadcast %126 : vector<1x32xf32> to vector<16x32xf32>
    %147 = arith.mulf %145, %146 : vector<16x32xf32>
    %148 = vector.broadcast %127 : vector<1x32xf32> to vector<16x32xf32>
    %149 = arith.addf %147, %148 : vector<16x32xf32>
    %c0_54 = arith.constant 0 : index
    %c0_55 = arith.constant 0 : index
    %150 = vector.load %arg9[%c0_54, %c0_55] : memref<32x32xbf16, #tpu.memory_space<vmem>>, vector<32x32xbf16>
    %151 = arith.truncf %149 : vector<16x32xf32> to vector<16x32xbf16>
    %cst_56 = arith.constant dense<0.000000e+00> : vector<16x32xf32>
    %152 = tpu.matmul %151, %150, %cst_56 {dimension_numbers = #tpu.dot_dimension_numbers<[1], [0], [0], [1], [0, 0, 1, 1], [], []>} : vector<16x32xbf16>, vector<32x32xbf16>, vector<16x32xf32> -> vector<16x32xf32>
    %c0_57 = arith.constant 0 : index
    %c0_58 = arith.constant 0 : index
    %153 = vector.load %arg10[%c0_57, %c0_58] : memref<1x32xf32, #tpu.memory_space<vmem>>, vector<1x32xf32>
    %154 = vector.broadcast %153 : vector<1x32xf32> to vector<16x32xf32>
    %155 = arith.addf %152, %154 : vector<16x32xf32>
    %c0_59 = arith.constant 0 : index
    %c0_60 = arith.constant 0 : index
    %156 = vector.load %arg11[%c0_59, %c0_60] : memref<128x64xbf16, #tpu.memory_space<vmem>>, vector<128x64xbf16>
    %cst_61 = arith.constant dense<0.000000e+00> : vector<16x64xf32>
    %157 = tpu.matmul %1, %156, %cst_61 {dimension_numbers = #tpu.dot_dimension_numbers<[1], [0], [0], [1], [0, 0, 1, 1], [], []>} : vector<16x128xbf16>, vector<128x64xbf16>, vector<16x64xf32> -> vector<16x64xf32>
    %c0_62 = arith.constant 0 : index
    %c0_63 = arith.constant 0 : index
    %158 = vector.load %arg12[%c0_62, %c0_63] : memref<1x64xf32, #tpu.memory_space<vmem>>, vector<1x64xf32>
    %159 = vector.broadcast %158 : vector<1x64xf32> to vector<16x64xf32>
    %160 = arith.addf %157, %159 : vector<16x64xf32>
    %161 = vector.extract_strided_slice %160 {offsets = [0, 0], sizes = [16, 32], strides = [1, 1]} : vector<16x64xf32> to vector<16x32xf32>
    %162 = vector.extract_strided_slice %160 {offsets = [0, 32], sizes = [16, 32], strides = [1, 1]} : vector<16x64xf32> to vector<16x32xf32>
    %c0_64 = arith.constant 0 : index
    %c0_65 = arith.constant 0 : index
    %163 = vector.load %arg13[%c0_64, %c0_65] : memref<32x32xbf16, #tpu.memory_space<vmem>>, vector<32x32xbf16>
    %c0_66 = arith.constant 0 : index
    %c0_67 = arith.constant 0 : index
    %164 = vector.load %arg14[%c0_66, %c0_67] : memref<1x32xf32, #tpu.memory_space<vmem>>, vector<1x32xf32>
    %165 = vector.shape_cast %155 : vector<16x32xf32> to vector<2x8x32xf32>
    %166 = arith.truncf %165 : vector<2x8x32xf32> to vector<2x8x32xbf16>
    %167 = vector.shape_cast %161 : vector<16x32xf32> to vector<2x8x32xf32>
    %168 = arith.truncf %167 : vector<2x8x32xf32> to vector<2x8x32xbf16>
    %169 = vector.shape_cast %162 : vector<16x32xf32> to vector<2x8x32xf32>
    %170 = arith.truncf %169 : vector<2x8x32xf32> to vector<2x8x32xbf16>
    %171 = vector.extract_strided_slice %166 {offsets = [0, 0, 0], sizes = [2, 8, 8], strides = [1, 1, 1]} : vector<2x8x32xbf16> to vector<2x8x8xbf16>
    %172 = vector.extract_strided_slice %168 {offsets = [0, 0, 0], sizes = [2, 8, 8], strides = [1, 1, 1]} : vector<2x8x32xbf16> to vector<2x8x8xbf16>
    %cst_68 = arith.constant dense<0.000000e+00> : vector<2x8x8xf32>
    %173 = tpu.matmul %171, %172, %cst_68 {dimension_numbers = #tpu.dot_dimension_numbers<[2], [2], [1], [1], [0, 0, 0, 1, 1, 1], [0], [0]>} : vector<2x8x8xbf16>, vector<2x8x8xbf16>, vector<2x8x8xf32> -> vector<2x8x8xf32>
    %cst_69 = arith.constant 0.353553385 : f32
    %174 = vector.broadcast %cst_69 : f32 to vector<2x8x8xf32>
    %175 = arith.mulf %173, %174 : vector<2x8x8xf32>
    %176 = arith.addf %175, %18 : vector<2x8x8xf32>
    %cst_70 = arith.constant dense<0xFF800000> : vector<2x8xf32>
    %177 = vector.multi_reduction <maximumf>, %176, %cst_70 [2] : vector<2x8x8xf32> to vector<2x8xf32>
    %178 = vector.shape_cast %177 : vector<2x8xf32> to vector<2x8x1xf32>
    %179 = vector.broadcast %178 : vector<2x8x1xf32> to vector<2x8x8xf32>
    %180 = arith.subf %176, %179 : vector<2x8x8xf32>
    %181 = math.exp %180 : vector<2x8x8xf32>
    %cst_71 = arith.constant dense<0.000000e+00> : vector<2x8xf32>
    %182 = vector.multi_reduction <add>, %181, %cst_71 [2] : vector<2x8x8xf32> to vector<2x8xf32>
    %183 = vector.shape_cast %182 : vector<2x8xf32> to vector<2x8x1xf32>
    %184 = tpu.reciprocal %183 {approx = true} : vector<2x8x1xf32> -> vector<2x8x1xf32>
    %185 = vector.broadcast %184 : vector<2x8x1xf32> to vector<2x8x8xf32>
    %186 = arith.mulf %181, %185 : vector<2x8x8xf32>
    %187 = arith.truncf %186 : vector<2x8x8xf32> to vector<2x8x8xbf16>
    %188 = vector.extract_strided_slice %170 {offsets = [0, 0, 0], sizes = [2, 8, 8], strides = [1, 1, 1]} : vector<2x8x32xbf16> to vector<2x8x8xbf16>
    %cst_72 = arith.constant dense<0.000000e+00> : vector<2x8x8xf32>
    %189 = tpu.matmul %187, %188, %cst_72 {dimension_numbers = #tpu.dot_dimension_numbers<[2], [1], [1], [2], [0, 0, 0, 1, 1, 2], [0], [0]>} : vector<2x8x8xbf16>, vector<2x8x8xbf16>, vector<2x8x8xf32> -> vector<2x8x8xf32>
    %190 = vector.shape_cast %189 : vector<2x8x8xf32> to vector<16x8xf32>
    %c0_73 = arith.constant 0 : index
    %c0_74 = arith.constant 0 : index
    %191 = vector.load %arg26[%c0_73, %c0_74] : memref<16x32xf32, #tpu.memory_space<vmem>>, vector<16x8xf32>
    tpu.vector_store %arg26[%c0_73, %c0_74], %190 {strides = array<i32>} : memref<16x32xf32, #tpu.memory_space<vmem>>, vector<16x8xf32>,
    %192 = vector.extract_strided_slice %166 {offsets = [0, 0, 8], sizes = [2, 8, 8], strides = [1, 1, 1]} : vector<2x8x32xbf16> to vector<2x8x8xbf16>
    %193 = vector.extract_strided_slice %168 {offsets = [0, 0, 8], sizes = [2, 8, 8], strides = [1, 1, 1]} : vector<2x8x32xbf16> to vector<2x8x8xbf16>
    %cst_75 = arith.constant dense<0.000000e+00> : vector<2x8x8xf32>
    %194 = tpu.matmul %192, %193, %cst_75 {dimension_numbers = #tpu.dot_dimension_numbers<[2], [2], [1], [1], [0, 0, 0, 1, 1, 1], [0], [0]>} : vector<2x8x8xbf16>, vector<2x8x8xbf16>, vector<2x8x8xf32> -> vector<2x8x8xf32>
    %cst_76 = arith.constant 0.353553385 : f32
    %195 = vector.broadcast %cst_76 : f32 to vector<2x8x8xf32>
    %196 = arith.mulf %194, %195 : vector<2x8x8xf32>
    %197 = arith.addf %196, %18 : vector<2x8x8xf32>
    %cst_77 = arith.constant dense<0xFF800000> : vector<2x8xf32>
    %198 = vector.multi_reduction <maximumf>, %197, %cst_77 [2] : vector<2x8x8xf32> to vector<2x8xf32>
    %199 = vector.shape_cast %198 : vector<2x8xf32> to vector<2x8x1xf32>
    %200 = vector.broadcast %199 : vector<2x8x1xf32> to vector<2x8x8xf32>
    %201 = arith.subf %197, %200 : vector<2x8x8xf32>
    %202 = math.exp %201 : vector<2x8x8xf32>
    %cst_78 = arith.constant dense<0.000000e+00> : vector<2x8xf32>
    %203 = vector.multi_reduction <add>, %202, %cst_78 [2] : vector<2x8x8xf32> to vector<2x8xf32>
    %204 = vector.shape_cast %203 : vector<2x8xf32> to vector<2x8x1xf32>
    %205 = tpu.reciprocal %204 {approx = true} : vector<2x8x1xf32> -> vector<2x8x1xf32>
    %206 = vector.broadcast %205 : vector<2x8x1xf32> to vector<2x8x8xf32>
    %207 = arith.mulf %202, %206 : vector<2x8x8xf32>
    %208 = arith.truncf %207 : vector<2x8x8xf32> to vector<2x8x8xbf16>
    %209 = vector.extract_strided_slice %170 {offsets = [0, 0, 8], sizes = [2, 8, 8], strides = [1, 1, 1]} : vector<2x8x32xbf16> to vector<2x8x8xbf16>
    %cst_79 = arith.constant dense<0.000000e+00> : vector<2x8x8xf32>
    %210 = tpu.matmul %208, %209, %cst_79 {dimension_numbers = #tpu.dot_dimension_numbers<[2], [1], [1], [2], [0, 0, 0, 1, 1, 2], [0], [0]>} : vector<2x8x8xbf16>, vector<2x8x8xbf16>, vector<2x8x8xf32> -> vector<2x8x8xf32>
    %211 = vector.shape_cast %210 : vector<2x8x8xf32> to vector<16x8xf32>
    %c0_80 = arith.constant 0 : index
    %c8_81 = arith.constant 8 : index
    %212 = vector.load %arg26[%c0_80, %c8_81] : memref<16x32xf32, #tpu.memory_space<vmem>>, vector<16x8xf32>
    tpu.vector_store %arg26[%c0_80, %c8_81], %211 {strides = array<i32>} : memref<16x32xf32, #tpu.memory_space<vmem>>, vector<16x8xf32>,
    %213 = vector.extract_strided_slice %166 {offsets = [0, 0, 16], sizes = [2, 8, 8], strides = [1, 1, 1]} : vector<2x8x32xbf16> to vector<2x8x8xbf16>
    %214 = vector.extract_strided_slice %168 {offsets = [0, 0, 16], sizes = [2, 8, 8], strides = [1, 1, 1]} : vector<2x8x32xbf16> to vector<2x8x8xbf16>
    %cst_82 = arith.constant dense<0.000000e+00> : vector<2x8x8xf32>
    %215 = tpu.matmul %213, %214, %cst_82 {dimension_numbers = #tpu.dot_dimension_numbers<[2], [2], [1], [1], [0, 0, 0, 1, 1, 1], [0], [0]>} : vector<2x8x8xbf16>, vector<2x8x8xbf16>, vector<2x8x8xf32> -> vector<2x8x8xf32>
    %cst_83 = arith.constant 0.353553385 : f32
    %216 = vector.broadcast %cst_83 : f32 to vector<2x8x8xf32>
    %217 = arith.mulf %215, %216 : vector<2x8x8xf32>
    %218 = arith.addf %217, %18 : vector<2x8x8xf32>
    %cst_84 = arith.constant dense<0xFF800000> : vector<2x8xf32>
    %219 = vector.multi_reduction <maximumf>, %218, %cst_84 [2] : vector<2x8x8xf32> to vector<2x8xf32>
    %220 = vector.shape_cast %219 : vector<2x8xf32> to vector<2x8x1xf32>
    %221 = vector.broadcast %220 : vector<2x8x1xf32> to vector<2x8x8xf32>
    %222 = arith.subf %218, %221 : vector<2x8x8xf32>
    %223 = math.exp %222 : vector<2x8x8xf32>
    %cst_85 = arith.constant dense<0.000000e+00> : vector<2x8xf32>
    %224 = vector.multi_reduction <add>, %223, %cst_85 [2] : vector<2x8x8xf32> to vector<2x8xf32>
    %225 = vector.shape_cast %224 : vector<2x8xf32> to vector<2x8x1xf32>
    %226 = tpu.reciprocal %225 {approx = true} : vector<2x8x1xf32> -> vector<2x8x1xf32>
    %227 = vector.broadcast %226 : vector<2x8x1xf32> to vector<2x8x8xf32>
    %228 = arith.mulf %223, %227 : vector<2x8x8xf32>
    %229 = arith.truncf %228 : vector<2x8x8xf32> to vector<2x8x8xbf16>
    %230 = vector.extract_strided_slice %170 {offsets = [0, 0, 16], sizes = [2, 8, 8], strides = [1, 1, 1]} : vector<2x8x32xbf16> to vector<2x8x8xbf16>
    %cst_86 = arith.constant dense<0.000000e+00> : vector<2x8x8xf32>
    %231 = tpu.matmul %229, %230, %cst_86 {dimension_numbers = #tpu.dot_dimension_numbers<[2], [1], [1], [2], [0, 0, 0, 1, 1, 2], [0], [0]>} : vector<2x8x8xbf16>, vector<2x8x8xbf16>, vector<2x8x8xf32> -> vector<2x8x8xf32>
    %232 = vector.shape_cast %231 : vector<2x8x8xf32> to vector<16x8xf32>
    %c0_87 = arith.constant 0 : index
    %c16_88 = arith.constant 16 : index
    %233 = vector.load %arg26[%c0_87, %c16_88] : memref<16x32xf32, #tpu.memory_space<vmem>>, vector<16x8xf32>
    tpu.vector_store %arg26[%c0_87, %c16_88], %232 {strides = array<i32>} : memref<16x32xf32, #tpu.memory_space<vmem>>, vector<16x8xf32>,
    %234 = vector.extract_strided_slice %166 {offsets = [0, 0, 24], sizes = [2, 8, 8], strides = [1, 1, 1]} : vector<2x8x32xbf16> to vector<2x8x8xbf16>
    %235 = vector.extract_strided_slice %168 {offsets = [0, 0, 24], sizes = [2, 8, 8], strides = [1, 1, 1]} : vector<2x8x32xbf16> to vector<2x8x8xbf16>
    %cst_89 = arith.constant dense<0.000000e+00> : vector<2x8x8xf32>
    %236 = tpu.matmul %234, %235, %cst_89 {dimension_numbers = #tpu.dot_dimension_numbers<[2], [2], [1], [1], [0, 0, 0, 1, 1, 1], [0], [0]>} : vector<2x8x8xbf16>, vector<2x8x8xbf16>, vector<2x8x8xf32> -> vector<2x8x8xf32>
    %cst_90 = arith.constant 0.353553385 : f32
    %237 = vector.broadcast %cst_90 : f32 to vector<2x8x8xf32>
    %238 = arith.mulf %236, %237 : vector<2x8x8xf32>
    %239 = arith.addf %238, %18 : vector<2x8x8xf32>
    %cst_91 = arith.constant dense<0xFF800000> : vector<2x8xf32>
    %240 = vector.multi_reduction <maximumf>, %239, %cst_91 [2] : vector<2x8x8xf32> to vector<2x8xf32>
    %241 = vector.shape_cast %240 : vector<2x8xf32> to vector<2x8x1xf32>
    %242 = vector.broadcast %241 : vector<2x8x1xf32> to vector<2x8x8xf32>
    %243 = arith.subf %239, %242 : vector<2x8x8xf32>
    %244 = math.exp %243 : vector<2x8x8xf32>
    %cst_92 = arith.constant dense<0.000000e+00> : vector<2x8xf32>
    %245 = vector.multi_reduction <add>, %244, %cst_92 [2] : vector<2x8x8xf32> to vector<2x8xf32>
    %246 = vector.shape_cast %245 : vector<2x8xf32> to vector<2x8x1xf32>
    %247 = tpu.reciprocal %246 {approx = true} : vector<2x8x1xf32> -> vector<2x8x1xf32>
    %248 = vector.broadcast %247 : vector<2x8x1xf32> to vector<2x8x8xf32>
    %249 = arith.mulf %244, %248 : vector<2x8x8xf32>
    %250 = arith.truncf %249 : vector<2x8x8xf32> to vector<2x8x8xbf16>
    %251 = vector.extract_strided_slice %170 {offsets = [0, 0, 24], sizes = [2, 8, 8], strides = [1, 1, 1]} : vector<2x8x32xbf16> to vector<2x8x8xbf16>
    %cst_93 = arith.constant dense<0.000000e+00> : vector<2x8x8xf32>
    %252 = tpu.matmul %250, %251, %cst_93 {dimension_numbers = #tpu.dot_dimension_numbers<[2], [1], [1], [2], [0, 0, 0, 1, 1, 2], [0], [0]>} : vector<2x8x8xbf16>, vector<2x8x8xbf16>, vector<2x8x8xf32> -> vector<2x8x8xf32>
    %253 = vector.shape_cast %252 : vector<2x8x8xf32> to vector<16x8xf32>
    %c0_94 = arith.constant 0 : index
    %c24_95 = arith.constant 24 : index
    %254 = vector.load %arg26[%c0_94, %c24_95] : memref<16x32xf32, #tpu.memory_space<vmem>>, vector<16x8xf32>
    tpu.vector_store %arg26[%c0_94, %c24_95], %253 {strides = array<i32>} : memref<16x32xf32, #tpu.memory_space<vmem>>, vector<16x8xf32>,
    %c0_96 = arith.constant 0 : index
    %c0_97 = arith.constant 0 : index
    %255 = vector.load %arg26[%c0_96, %c0_97] : memref<16x32xf32, #tpu.memory_space<vmem>>, vector<16x32xf32>
    %256 = arith.truncf %255 : vector<16x32xf32> to vector<16x32xbf16>
    %cst_98 = arith.constant dense<0.000000e+00> : vector<16x32xf32>
    %257 = tpu.matmul %256, %163, %cst_98 {dimension_numbers = #tpu.dot_dimension_numbers<[1], [0], [0], [1], [0, 0, 1, 1], [], []>} : vector<16x32xbf16>, vector<32x32xbf16>, vector<16x32xf32> -> vector<16x32xf32>
    %258 = vector.broadcast %164 : vector<1x32xf32> to vector<16x32xf32>
    %259 = arith.addf %257, %258 : vector<16x32xf32>
    %260 = arith.addf %149, %259 : vector<16x32xf32>
    %c0_99 = arith.constant 0 : index
    %c0_100 = arith.constant 0 : index
    %261 = vector.load %arg15[%c0_99, %c0_100] : memref<1x32xf32, #tpu.memory_space<vmem>>, vector<1x32xf32>
    %c0_101 = arith.constant 0 : index
    %c0_102 = arith.constant 0 : index
    %262 = vector.load %arg16[%c0_101, %c0_102] : memref<1x32xf32, #tpu.memory_space<vmem>>, vector<1x32xf32>
    %cst_103 = arith.constant dense<0.000000e+00> : vector<16xf32>
    %263 = vector.multi_reduction <add>, %260, %cst_103 [1] : vector<16x32xf32> to vector<16xf32>
    %264 = vector.shape_cast %263 : vector<16xf32> to vector<16x1xf32>
    %cst_104 = arith.constant 3.200000e+01 : f32
    %265 = vector.broadcast %cst_104 : f32 to vector<16x1xf32>
    %266 = arith.divf %264, %265 : vector<16x1xf32>
    %267 = vector.broadcast %266 : vector<16x1xf32> to vector<16x32xf32>
    %268 = arith.subf %260, %267 : vector<16x32xf32>
    %269 = arith.mulf %268, %268 : vector<16x32xf32>
    %cst_105 = arith.constant dense<0.000000e+00> : vector<16xf32>
    %270 = vector.multi_reduction <add>, %269, %cst_105 [1] : vector<16x32xf32> to vector<16xf32>
    %271 = vector.shape_cast %270 : vector<16xf32> to vector<16x1xf32>
    %cst_106 = arith.constant 3.200000e+01 : f32
    %272 = vector.broadcast %cst_106 : f32 to vector<16x1xf32>
    %273 = arith.divf %271, %272 : vector<16x1xf32>
    %274 = vector.broadcast %266 : vector<16x1xf32> to vector<16x32xf32>
    %275 = arith.subf %260, %274 : vector<16x32xf32>
    %cst_107 = arith.constant 9.99999974E-6 : f32
    %276 = vector.broadcast %cst_107 : f32 to vector<16x1xf32>
    %277 = arith.addf %273, %276 : vector<16x1xf32>
    %278 = math.rsqrt %277 : vector<16x1xf32>
    %279 = vector.broadcast %278 : vector<16x1xf32> to vector<16x32xf32>
    %280 = arith.mulf %275, %279 : vector<16x32xf32>
    %281 = vector.broadcast %261 : vector<1x32xf32> to vector<16x32xf32>
    %282 = arith.mulf %280, %281 : vector<16x32xf32>
    %283 = vector.broadcast %262 : vector<1x32xf32> to vector<16x32xf32>
    %284 = arith.addf %282, %283 : vector<16x32xf32>
    %c0_108 = arith.constant 0 : index
    %c0_109 = arith.constant 0 : index
    %285 = vector.load %arg17[%c0_108, %c0_109] : memref<32x64xbf16, #tpu.memory_space<vmem>>, vector<32x64xbf16>
    %c0_110 = arith.constant 0 : index
    %c0_111 = arith.constant 0 : index
    %286 = vector.load %arg18[%c0_110, %c0_111] : memref<1x64xf32, #tpu.memory_space<vmem>>, vector<1x64xf32>
    %c0_112 = arith.constant 0 : index
    %c0_113 = arith.constant 0 : index
    %287 = vector.load %arg19[%c0_112, %c0_113] : memref<64x32xbf16, #tpu.memory_space<vmem>>, vector<64x32xbf16>
    %c0_114 = arith.constant 0 : index
    %c0_115 = arith.constant 0 : index
    %288 = vector.load %arg20[%c0_114, %c0_115] : memref<1x32xf32, #tpu.memory_space<vmem>>, vector<1x32xf32>
    %289 = arith.truncf %284 : vector<16x32xf32> to vector<16x32xbf16>
    %cst_116 = arith.constant dense<0.000000e+00> : vector<16x64xf32>
    %290 = tpu.matmul %289, %285, %cst_116 {dimension_numbers = #tpu.dot_dimension_numbers<[1], [0], [0], [1], [0, 0, 1, 1], [], []>} : vector<16x32xbf16>, vector<32x64xbf16>, vector<16x64xf32> -> vector<16x64xf32>
    %291 = vector.broadcast %286 : vector<1x64xf32> to vector<16x64xf32>
    %292 = arith.addf %290, %291 : vector<16x64xf32>
    %293 = arith.negf %292 : vector<16x64xf32>
    %294 = math.exp %293 : vector<16x64xf32>
    %cst_117 = arith.constant 1.000000e+00 : f32
    %295 = vector.broadcast %cst_117 : f32 to vector<16x64xf32>
    %296 = arith.addf %295, %294 : vector<16x64xf32>
    %297 = arith.divf %295, %296 : vector<16x64xf32>
    %298 = arith.mulf %292, %297 : vector<16x64xf32>
    %299 = arith.truncf %298 : vector<16x64xf32> to vector<16x64xbf16>
    %cst_118 = arith.constant dense<0.000000e+00> : vector<16x32xf32>
    %300 = tpu.matmul %299, %287, %cst_118 {dimension_numbers = #tpu.dot_dimension_numbers<[1], [0], [0], [1], [0, 0, 1, 1], [], []>} : vector<16x64xbf16>, vector<64x32xbf16>, vector<16x32xf32> -> vector<16x32xf32>
    %301 = vector.broadcast %288 : vector<1x32xf32> to vector<16x32xf32>
    %302 = arith.addf %300, %301 : vector<16x32xf32>
    %303 = arith.addf %284, %302 : vector<16x32xf32>
    %c0_119 = arith.constant 0 : index
    %c0_120 = arith.constant 0 : index
    %304 = vector.load %arg21[%c0_119, %c0_120] : memref<1x32xf32, #tpu.memory_space<vmem>>, vector<1x32xf32>
    %c0_121 = arith.constant 0 : index
    %c0_122 = arith.constant 0 : index
    %305 = vector.load %arg22[%c0_121, %c0_122] : memref<1x32xf32, #tpu.memory_space<vmem>>, vector<1x32xf32>
    %cst_123 = arith.constant dense<0.000000e+00> : vector<16xf32>
    %306 = vector.multi_reduction <add>, %303, %cst_123 [1] : vector<16x32xf32> to vector<16xf32>
    %307 = vector.shape_cast %306 : vector<16xf32> to vector<16x1xf32>
    %cst_124 = arith.constant 3.200000e+01 : f32
    %308 = vector.broadcast %cst_124 : f32 to vector<16x1xf32>
    %309 = arith.divf %307, %308 : vector<16x1xf32>
    %310 = vector.broadcast %309 : vector<16x1xf32> to vector<16x32xf32>
    %311 = arith.subf %303, %310 : vector<16x32xf32>
    %312 = arith.mulf %311, %311 : vector<16x32xf32>
    %cst_125 = arith.constant dense<0.000000e+00> : vector<16xf32>
    %313 = vector.multi_reduction <add>, %312, %cst_125 [1] : vector<16x32xf32> to vector<16xf32>
    %314 = vector.shape_cast %313 : vector<16xf32> to vector<16x1xf32>
    %cst_126 = arith.constant 3.200000e+01 : f32
    %315 = vector.broadcast %cst_126 : f32 to vector<16x1xf32>
    %316 = arith.divf %314, %315 : vector<16x1xf32>
    %317 = vector.broadcast %309 : vector<16x1xf32> to vector<16x32xf32>
    %318 = arith.subf %303, %317 : vector<16x32xf32>
    %cst_127 = arith.constant 9.99999974E-6 : f32
    %319 = vector.broadcast %cst_127 : f32 to vector<16x1xf32>
    %320 = arith.addf %316, %319 : vector<16x1xf32>
    %321 = math.rsqrt %320 : vector<16x1xf32>
    %322 = vector.broadcast %321 : vector<16x1xf32> to vector<16x32xf32>
    %323 = arith.mulf %318, %322 : vector<16x32xf32>
    %324 = vector.broadcast %304 : vector<1x32xf32> to vector<16x32xf32>
    %325 = arith.mulf %323, %324 : vector<16x32xf32>
    %326 = vector.broadcast %305 : vector<1x32xf32> to vector<16x32xf32>
    %327 = arith.addf %325, %326 : vector<16x32xf32>
    %328 = arith.truncf %327 : vector<16x32xf32> to vector<16x32xbf16>
    %c0_128 = arith.constant 0 : index
    %c0_129 = arith.constant 0 : index
    %329 = vector.load %arg23[%c0_128, %c0_129] : memref<128x32xbf16, #tpu.memory_space<vmem>>, vector<128x32xbf16>
    %cst_130 = arith.constant dense<0.000000e+00> : vector<16x128xf32>
    %330 = tpu.matmul %328, %329, %cst_130 {dimension_numbers = #tpu.dot_dimension_numbers<[1], [1], [0], [0], [0, 0, 1, 0], [], []>} : vector<16x32xbf16>, vector<128x32xbf16>, vector<16x128xf32> -> vector<16x128xf32>
    %c0_131 = arith.constant 0 : index
    %c0_132 = arith.constant 0 : index
    %331 = vector.load %arg24[%c0_131, %c0_132] : memref<1x128xf32, #tpu.memory_space<vmem>>, vector<1x128xf32>
    %332 = vector.broadcast %331 : vector<1x128xf32> to vector<16x128xf32>
    %333 = arith.addf %330, %332 : vector<16x128xf32>
    %c0_133 = arith.constant 0 : index
    %c0_134 = arith.constant 0 : index
    %334 = vector.load %arg25[%c0_133, %c0_134] : memref<16x128xf32, #tpu.memory_space<vmem>>, vector<16x128xf32>
    tpu.vector_store %arg25[%c0_133, %c0_134], %333 {strides = array<i32>} : memref<16x128xf32, #tpu.memory_space<vmem>>, vector<16x128xf32>,
    return
  }
}

</mosaic_0001>

<llo_original>
// kernel: marian_logits.2
$region0: #{marian_logits.2}
  #allocation0 [shape = 'u32[]', space=smem, size = 0x4, offset = 0x4, fixed_abs, tag = 'smem constant byte address 0x4 - core index']
  #allocation1 [shape = 'u32[144,128]{1,0:T(1,128)}', space=vmem, size = 0x12000, scoped, tag = 'internal scratch']
  #allocation2 [shape = 'f32[16,32]{1,0:T(8,128)}', space=vmem, size = 0x2000, scoped, tag = 'scratch operand']
  %s0 = inlined_call_operand.vmem [shape: f32[16,32], index: 0, kind: input, shape index: {}]
  %s1 = inlined_call_operand.vmem [shape: f32[2,8], index: 1, kind: input, shape index: {}]
  %s2 = inlined_call_operand.vmem [shape: bf16[32,96], index: 2, kind: input, shape index: {}]
  %s3 = inlined_call_operand.vmem [shape: f32[1,96], index: 3, kind: input, shape index: {}]
  %s4 = inlined_call_operand.vmem [shape: bf16[32,32], index: 4, kind: input, shape index: {}]
  %s5 = inlined_call_operand.vmem [shape: f32[1,32], index: 5, kind: input, shape index: {}]
  %s6 = inlined_call_operand.vmem [shape: f32[1,32], index: 6, kind: input, shape index: {}]
  %s7 = inlined_call_operand.vmem [shape: f32[1,32], index: 7, kind: input, shape index: {}]
  %s8 = inlined_call_operand.vmem [shape: bf16[32,64], index: 8, kind: input, shape index: {}]
  %s9 = inlined_call_operand.vmem [shape: f32[1,64], index: 9, kind: input, shape index: {}]
  %s10 = inlined_call_operand.vmem [shape: bf16[64,32], index: 10, kind: input, shape index: {}]
  %s11 = inlined_call_operand.vmem [shape: f32[1,32], index: 11, kind: input, shape index: {}]
  %s12 = inlined_call_operand.vmem [shape: f32[1,32], index: 12, kind: input, shape index: {}]
  %s13 = inlined_call_operand.vmem [shape: f32[1,32], index: 13, kind: input, shape index: {}]
  %s14 = inlined_call_operand.vmem [shape: bf16[32,128], index: 14, kind: input, shape index: {}]
  %s15 = inlined_call_operand.vmem [shape: bf16[16,128], index: 15, kind: output, shape index: {}]
  %s16 = sld [smem:[#allocation0]]
  $region70: #{marian_logits.2} parent=0
    _
  %s18 = ssub.s32 1, %s16
  %s19 = scalar_select 0, %s18, %s16
  // Predicated region
  $region2: #{marian_logits.2} parent=0 // pred_check
    _
  $region3: #{marian_logits.2} parent=0 // pred_check_branch
    %21 = sbr.rel (0) target = $region5
  $region4: #{marian_logits.2} parent=0 // pred_region
    _
  $region5: #{marian_logits.2} parent=0 // pred_fallthru
    _
  // Predicated region
  $region6: #{marian_logits.2} parent=0 // pred_check
    _
  $region7: #{marian_logits.2} parent=0 // pred_check_branch
    %23 = sbr.rel (0) target = $region9
  $region8: #{marian_logits.2} parent=0 // pred_region
    _
  $region9: #{marian_logits.2} parent=0 // pred_fallthru
    _
  // Predicated region
  $region10: #{marian_logits.2} parent=0 // pred_check
    _
  $region11: #{marian_logits.2} parent=0 // pred_check_branch
    %25 = sbr.rel (0) target = $region13
  $region12: #{marian_logits.2} parent=0 // pred_region
    _
  $region13: #{marian_logits.2} parent=0 // pred_fallthru
    _
  // Predicated region
  $region14: #{marian_logits.2} parent=0 // pred_check
    _
  $region15: #{marian_logits.2} parent=0 // pred_check_branch
    %27 = sbr.rel (0) target = $region17
  $region16: #{marian_logits.2} parent=0 // pred_region
    _
  $region17: #{marian_logits.2} parent=0 // pred_fallthru
    _
  // Predicated region
  $region18: #{marian_logits.2} parent=0 // pred_check
    _
  $region19: #{marian_logits.2} parent=0 // pred_check_branch
    %29 = sbr.rel (0) target = $region21
  $region20: #{marian_logits.2} parent=0 // pred_region
    _
  $region21: #{marian_logits.2} parent=0 // pred_fallthru
    _
  // Predicated region
  $region22: #{marian_logits.2} parent=0 // pred_check
    _
  $region23: #{marian_logits.2} parent=0 // pred_check_branch
    %31 = sbr.rel (0) target = $region25
  $region24: #{marian_logits.2} parent=0 // pred_region
    _
  $region25: #{marian_logits.2} parent=0 // pred_fallthru
    _
  // Predicated region
  $region26: #{marian_logits.2} parent=0 // pred_check
    _
  $region27: #{marian_logits.2} parent=0 // pred_check_branch
    %33 = sbr.rel (0) target = $region29
  $region28: #{marian_logits.2} parent=0 // pred_region
    _
  $region29: #{marian_logits.2} parent=0 // pred_fallthru
    _
  // Predicated region
  $region30: #{marian_logits.2} parent=0 // pred_check
    _
  $region31: #{marian_logits.2} parent=0 // pred_check_branch
    %35 = sbr.rel (0) target = $region33
  $region32: #{marian_logits.2} parent=0 // pred_region
    _
  $region33: #{marian_logits.2} parent=0 // pred_fallthru
    _
  // Predicated region
  $region34: #{marian_logits.2} parent=0 // pred_check
    _
  $region35: #{marian_logits.2} parent=0 // pred_check_branch
    %37 = sbr.rel (0) target = $region37
  $region36: #{marian_logits.2} parent=0 // pred_region
    _
  $region37: #{marian_logits.2} parent=0 // pred_fallthru
    _
  // Predicated region
  $region38: #{marian_logits.2} parent=0 // pred_check
    _
  $region39: #{marian_logits.2} parent=0 // pred_check_branch
    %39 = sbr.rel (0) target = $region41
  $region40: #{marian_logits.2} parent=0 // pred_region
    _
  $region41: #{marian_logits.2} parent=0 // pred_fallthru
    _
  // Predicated region
  $region42: #{marian_logits.2} parent=0 // pred_check
    _
  $region43: #{marian_logits.2} parent=0 // pred_check_branch
    %41 = sbr.rel (0) target = $region45
  $region44: #{marian_logits.2} parent=0 // pred_region
    _
  $region45: #{marian_logits.2} parent=0 // pred_fallthru
    _
  // Predicated region
  $region46: #{marian_logits.2} parent=0 // pred_check
    _
  $region47: #{marian_logits.2} parent=0 // pred_check_branch
    %43 = sbr.rel (0) target = $region49
  $region48: #{marian_logits.2} parent=0 // pred_region
    _
  $region49: #{marian_logits.2} parent=0 // pred_fallthru
    _
  // Predicated region
  $region50: #{marian_logits.2} parent=0 // pred_check
    _
  $region51: #{marian_logits.2} parent=0 // pred_check_branch
    %45 = sbr.rel (0) target = $region53
  $region52: #{marian_logits.2} parent=0 // pred_region
    _
  $region53: #{marian_logits.2} parent=0 // pred_fallthru
    _
  // Predicated region
  $region54: #{marian_logits.2} parent=0 // pred_check
    _
  $region55: #{marian_logits.2} parent=0 // pred_check_branch
    %47 = sbr.rel (0) target = $region57
  $region56: #{marian_logits.2} parent=0 // pred_region
    _
  $region57: #{marian_logits.2} parent=0 // pred_fallthru
    _
  // Predicated region
  $region58: #{marian_logits.2} parent=0 // pred_check
    _
  $region59: #{marian_logits.2} parent=0 // pred_check_branch
    %49 = sbr.rel (0) target = $region61
  $region60: #{marian_logits.2} parent=0 // pred_region
    _
  $region61: #{marian_logits.2} parent=0 // pred_fallthru
    _
  %v51 = vld [vmem:[%s0] sm:$0xff]
  %v52 = vld [vmem:[%s0 + $0x8] sm:$0xff]
  %v53 = vld [vmem:[%s1] sm:$0x3]
  %v54 = vsub.f32 1.0, %v53
  %v55 = vmul.f32 %v54, -1e+09
  %v58 = vunpack.c.l.s4 1966171168
  %v59 = vunpack.c.0.s8 %v58
  %v60 = vlaneseq
  %v61 = vshrl.u32 %v60, 7
  %v62 = vsub.s32 %v59, %v61
  %v63 = vrot.slane %v55, %v62
  %v64 = vcombine.high %v63, %v63
  %v66 = vunpack.c.l.s4 1966171168
  %v67 = vunpack.c.0.s8 %v66
  %v68 = vlaneseq
  %v69 = vshrl.u32 %v68, 7
  %v70 = vsub.s32 %v67, %v69
  %v71 = vrot.slane %v63, %v70
  %v73 = vunpack.c.l.s4 1966171168
  %v74 = vunpack.c.0.s8 %v73
  %v75 = vlaneseq
  %v76 = vshrl.u32 %v75, 7
  %v77 = vsub.s32 %v74, %v76
  %v78 = vrot.slane %v64, %v77
  %v79 = vlaneseq
  %v80 = vshrl.u32 %v79, 7
  %v81 = vsub.s32 0, %v80
  %v82 = vrot.slane %v71, %v81
  %v83 = vlaneseq
  %v84 = vshrl.u32 %v83, 7
  %v85 = vsub.s32 0, %v84
  %v86 = vrot.slane %v78, %v85
  %v89 = vld [vmem:[%s2] sm:$0xf]
  %v90 = vld [vmem:[%s2 + $0x4] sm:$0xf]
  %v91 = vld [vmem:[%s2 + $0x8] sm:$0xf]
  %v92 = vld [vmem:[%s2 + $0xc] sm:$0xf]
  %v93 = vpack.c.bf16 %v52, %v51
  %v94 = vld [vmem:[%s3] sm:$0x1]
  %v96 = vlaneseq
  %v97 = vshrl.u32 %v96, 7
  %v98 = vsub.s32 0, %v97
  %v99 = vrot.slane %v94, %v98
  %v105 = vunpack.c.l.b16 %v89
  %v106 = vunpack.c.l.b16 %v90
  %v107 = vunpack.c.l.b16 %v91
  %v108 = vunpack.c.l.b16 %v92
  %v109 = vpack.c.b16 %v106, %v105
  %v110 = vpack.c.b16 %v108, %v107
  %vm113 = vcmask 261120
  %v115 = vsel %vm113, %v93, 0
  %117 = vmatprep.subr.bf16.mxu0 0
  %118 = vmatpush1.bf16.msra.mxu0 %v109
  %119 = vmatprep.subr.bf16.mxu0 0
  %120 = vmatpush1.bf16.msra.mxu0 %v110
  %121 = vmatprep.subr.bf16.mxu0 0
  %122 = vmatpush1.bf16.msra.mxu0 0
  %123 = vmatprep.subr.bf16.mxu0 0
  %124 = vmatpush1.bf16.msra.mxu0 0
  %125 = vmatprep.subr.bf16.mxu0 0
  %126 = vmatpush1.bf16.msra.mxu0 0
  %127 = vmatprep.subr.bf16.mxu0 0
  %128 = vmatpush1.bf16.msra.mxu0 0
  %129 = vmatprep.subr.bf16.mxu0 0
  %130 = vmatpush1.bf16.msra.mxu0 0
  %131 = vmatprep.subr.bf16.mxu0 0
  %132 = vmatpush1.bf16.msra.mxu0 0
  %133 = vmatprep.subr.bf16.mxu0 0
  %134 = vmatpush1.bf16.msra.mxu0 0
  %135 = vmatprep.subr.bf16.mxu0 0
  %136 = vmatpush1.bf16.msra.mxu0 0
  %137 = vmatprep.subr.bf16.mxu0 0
  %138 = vmatpush1.bf16.msra.mxu0 0
  %139 = vmatprep.subr.bf16.mxu0 0
  %140 = vmatpush1.bf16.msra.mxu0 0
  %141 = vmatprep.subr.bf16.mxu0 0
  %142 = vmatpush1.bf16.msra.mxu0 0
  %143 = vmatprep.subr.bf16.mxu0 0
  %144 = vmatpush1.bf16.msra.mxu0 0
  %145 = vmatprep.subr.bf16.mxu0 0
  %146 = vmatpush1.bf16.msra.mxu0 0
  %147 = vmatprep.subr.bf16.mxu0 0
  %148 = vmatpush1.bf16.msra.mxu0 0
  %149 = vmatprep.mubr.bf16.mxu0 0
  %150 = vmatmul.mubr.bf16.gmra.mrb[0].mxu0 %v115
  %v151 = vpop.f32.mrb[0].mxu0
  %v152 = vadd.f32 %v99, %v151
  %v153 = vpop.f32.mrb[0].mxu0
  %v154 = vpop.f32.mrb[0].mxu0
  %v155 = vadd.f32 %v99, %v154
  %v156 = vpop.f32.mrb[0].mxu0
  %157 = vdwg.mxu0
  %v158 = vld [vmem:[%s4] sm:$0xf]
  %v159 = vld [vmem:[%s4 + $0x4] sm:$0xf]
  %v160 = vld [vmem:[%s4 + $0x8] sm:$0xf]
  %v161 = vld [vmem:[%s4 + $0xc] sm:$0xf]
  %v162 = vld [vmem:[%s5] sm:$0x1]
  %v163 = vpack.c.bf16 %v152, %v152
  %v164 = vpack.c.bf16 %v155, %v155
  %166 = vrot.lane.b32.xlu0 %v163, 96
  %v167 = vpop.permute.xlu0 %166
  %vm168 = vcmask 64512
  %v170 = vsel %vm168, %v163, 0
  %v173 = vsel %vm168, %v167, 0
  %175 = vmatprep.subr.bf16.mxu0 0
  %176 = vmatpush1.bf16.xpose.msra.mxu0 %v173
  %177 = vmatprep.subr.bf16.mxu0 0
  %178 = vmatpush1.bf16.xpose.msra.mxu0 0
  %179 = vmatprep.subr.bf16.mxu0 0
  %180 = vmatpush1.bf16.xpose.msra.mxu0 0
  %181 = vmatprep.subr.bf16.mxu0 0
  %182 = vmatpush1.bf16.xpose.msra.mxu0 0
  %183 = vmatprep.subr.bf16.mxu0 0
  %184 = vmatpush1.bf16.xpose.msra.mxu0 0
  %185 = vmatprep.subr.bf16.mxu0 0
  %186 = vmatpush1.bf16.xpose.msra.mxu0 0
  %187 = vmatprep.subr.bf16.mxu0 0
  %188 = vmatpush1.bf16.xpose.msra.mxu0 0
  %189 = vmatprep.subr.bf16.mxu0 0
  %190 = vmatpush1.bf16.xpose.msra.mxu0 0
  %191 = vmatprep.subr.bf16.mxu0 0
  %192 = vmatpush1.bf16.xpose.msra.mxu0 0
  %193 = vmatprep.subr.bf16.mxu0 0
  %194 = vmatpush1.bf16.xpose.msra.mxu0 0
  %195 = vmatprep.subr.bf16.mxu0 0
  %196 = vmatpush1.bf16.xpose.msra.mxu0 0
  %197 = vmatprep.subr.bf16.mxu0 0
  %198 = vmatpush1.bf16.xpose.msra.mxu0 0
  %199 = vmatprep.subr.bf16.mxu0 0
  %200 = vmatpush1.bf16.xpose.msra.mxu0 0
  %201 = vmatprep.subr.bf16.mxu0 0
  %202 = vmatpush1.bf16.xpose.msra.mxu0 0
  %203 = vmatprep.subr.bf16.mxu0 0
  %204 = vmatpush1.bf16.xpose.msra.mxu0 0
  %205 = vmatprep.subr.bf16.mxu0 0
  %206 = vmatpush1.bf16.xpose.msra.mxu0 0
  %207 = vmatprep.mubr.bf16.mxu0 0
  %208 = vmatmul.mubr.bf16.gmra.mrb[0].mxu0 %v170
  %v209 = vpop.f32.mrb[0].mxu0
  %v210 = vadd.f32 0.0, %v209
  %v211 = vpop.f32.mrb[0].mxu0
  %v212 = vpop.f32.mrb[0].mxu0
  %v213 = vpop.f32.mrb[0].mxu0
  %214 = vdwg.mxu0
  %216 = vrot.lane.b32.xlu0 %v164, 96
  %v217 = vpop.permute.xlu0 %216
  %v219 = vsel %vm168, %v164, 0
  %v222 = vsel %vm168, %v217, 0
  %224 = vmatprep.subr.bf16.mxu0 0
  %225 = vmatpush1.bf16.xpose.msra.mxu0 %v222
  %226 = vmatprep.subr.bf16.mxu0 0
  %227 = vmatpush1.bf16.xpose.msra.mxu0 0
  %228 = vmatprep.subr.bf16.mxu0 0
  %229 = vmatpush1.bf16.xpose.msra.mxu0 0
  %230 = vmatprep.subr.bf16.mxu0 0
  %231 = vmatpush1.bf16.xpose.msra.mxu0 0
  %232 = vmatprep.subr.bf16.mxu0 0
  %233 = vmatpush1.bf16.xpose.msra.mxu0 0
  %234 = vmatprep.subr.bf16.mxu0 0
  %235 = vmatpush1.bf16.xpose.msra.mxu0 0
  %236 = vmatprep.subr.bf16.mxu0 0
  %237 = vmatpush1.bf16.xpose.msra.mxu0 0
  %238 = vmatprep.subr.bf16.mxu0 0
  %239 = vmatpush1.bf16.xpose.msra.mxu0 0
  %240 = vmatprep.subr.bf16.mxu0 0
  %241 = vmatpush1.bf16.xpose.msra.mxu0 0
  %242 = vmatprep.subr.bf16.mxu0 0
  %243 = vmatpush1.bf16.xpose.msra.mxu0 0
  %244 = vmatprep.subr.bf16.mxu0 0
  %245 = vmatpush1.bf16.xpose.msra.mxu0 0
  %246 = vmatprep.subr.bf16.mxu0 0
  %247 = vmatpush1.bf16.xpose.msra.mxu0 0
  %248 = vmatprep.subr.bf16.mxu0 0
  %249 = vmatpush1.bf16.xpose.msra.mxu0 0
  %250 = vmatprep.subr.bf16.mxu0 0
  %251 = vmatpush1.bf16.xpose.msra.mxu0 0
  %252 = vmatprep.subr.bf16.mxu0 0
  %253 = vmatpush1.bf16.xpose.msra.mxu0 0
  %254 = vmatprep.subr.bf16.mxu0 0
  %255 = vmatpush1.bf16.xpose.msra.mxu0 0
  %256 = vmatprep.mubr.bf16.mxu0 0
  %257 = vmatmul.mubr.bf16.gmra.mrb[0].mxu0 %v219
  %v258 = vpop.f32.mrb[0].mxu0
  %v259 = vadd.f32 0.0, %v258
  %v260 = vpop.f32.mrb[0].mxu0
  %v261 = vpop.f32.mrb[0].mxu0
  %v262 = vpop.f32.mrb[0].mxu0
  %263 = vdwg.mxu0
  %v264 = vmul.f32 %v210, 0.35355338
  %v265 = vmul.f32 %v259, 0.35355338
  %v266 = vadd.f32 %v264, %v82
  %v267 = vadd.f32 %v265, %v86
  %v268 = vsel %vm168, %v266, -inf
  %269 = vmax.xlane.f32.xlu0 %v268
  %v270 = vpop.xlane.xlu0 %269
  %v271 = vsel %vm168, %v267, -inf
  %272 = vmax.xlane.f32.xlu0 %v271
  %v273 = vpop.xlane.xlu0 %272
  %v274 = vsub.f32 %v266, %v270
  %v275 = vsub.f32 %v267, %v273
  %v276 = vmul.f32 %v274, 1.442695
  %v277 = vpow.pop %v276
  %v278 = vmul.f32 %v275, 1.442695
  %v279 = vpow.pop %v278
  %v280 = vsel %vm168, %v277, 0.0
  %281 = vadd.xlane.f32.xlu0 %v280
  %v282 = vpop.xlane.xlu0 %281
  %v283 = vsel %vm168, %v279, 0.0
  %284 = vadd.xlane.f32.xlu0 %v283
  %v285 = vpop.xlane.xlu0 %284
  %v286 = vrcp.pop %v282
  %v287 = vrcp.pop %v285
  %v288 = vmul.f32 %v277, %v286
  %v289 = vmul.f32 %v279, %v287
  %v290 = vpack.c.bf16 %v288, %v288
  %v291 = vpack.c.bf16 %v289, %v289
  %292 = vrot.lane.b32.xlu0 %v163, 64
  %v293 = vpop.permute.xlu0 %292
  %v295 = vsel %vm168, %v290, 0
  %vm297 = vcmask 1043456
  %v299 = vsel %vm297, %v293, 0
  %301 = vmatprep.subr.bf16.mxu0 0
  %302 = vmatpush1.bf16.msra.mxu0 %v299
  %303 = vmatprep.subr.bf16.mxu0 0
  %304 = vmatpush1.bf16.msra.mxu0 0
  %305 = vmatprep.subr.bf16.mxu0 0
  %306 = vmatpush1.bf16.msra.mxu0 0
  %307 = vmatprep.subr.bf16.mxu0 0
  %308 = vmatpush1.bf16.msra.mxu0 0
  %309 = vmatprep.subr.bf16.mxu0 0
  %310 = vmatpush1.bf16.msra.mxu0 0
  %311 = vmatprep.subr.bf16.mxu0 0
  %312 = vmatpush1.bf16.msra.mxu0 0
  %313 = vmatprep.subr.bf16.mxu0 0
  %314 = vmatpush1.bf16.msra.mxu0 0
  %315 = vmatprep.subr.bf16.mxu0 0
  %316 = vmatpush1.bf16.msra.mxu0 0
  %317 = vmatprep.subr.bf16.mxu0 0
  %318 = vmatpush1.bf16.msra.mxu0 0
  %319 = vmatprep.subr.bf16.mxu0 0
  %320 = vmatpush1.bf16.msra.mxu0 0
  %321 = vmatprep.subr.bf16.mxu0 0
  %322 = vmatpush1.bf16.msra.mxu0 0
  %323 = vmatprep.subr.bf16.mxu0 0
  %324 = vmatpush1.bf16.msra.mxu0 0
  %325 = vmatprep.subr.bf16.mxu0 0
  %326 = vmatpush1.bf16.msra.mxu0 0
  %327 = vmatprep.subr.bf16.mxu0 0
  %328 = vmatpush1.bf16.msra.mxu0 0
  %329 = vmatprep.subr.bf16.mxu0 0
  %330 = vmatpush1.bf16.msra.mxu0 0
  %331 = vmatprep.subr.bf16.mxu0 0
  %332 = vmatpush1.bf16.msra.mxu0 0
  %333 = vmatprep.mubr.bf16.mxu0 0
  %334 = vmatmul.mubr.bf16.gmra.mrb[0].mxu0 %v295
  %v335 = vpop.f32.mrb[0].mxu0
  %v336 = vadd.f32 0.0, %v335
  %v337 = vpop.f32.mrb[0].mxu0
  %v338 = vpop.f32.mrb[0].mxu0
  %v339 = vpop.f32.mrb[0].mxu0
  %340 = vdwg.mxu0
  %341 = vrot.lane.b32.xlu0 %v164, 64
  %v342 = vpop.permute.xlu0 %341
  %v344 = vsel %vm168, %v291, 0
  %v347 = vsel %vm297, %v342, 0
  %349 = vmatprep.subr.bf16.mxu0 0
  %350 = vmatpush1.bf16.msra.mxu0 %v347
  %351 = vmatprep.subr.bf16.mxu0 0
  %352 = vmatpush1.bf16.msra.mxu0 0
  %353 = vmatprep.subr.bf16.mxu0 0
  %354 = vmatpush1.bf16.msra.mxu0 0
  %355 = vmatprep.subr.bf16.mxu0 0
  %356 = vmatpush1.bf16.msra.mxu0 0
  %357 = vmatprep.subr.bf16.mxu0 0
  %358 = vmatpush1.bf16.msra.mxu0 0
  %359 = vmatprep.subr.bf16.mxu0 0
  %360 = vmatpush1.bf16.msra.mxu0 0
  %361 = vmatprep.subr.bf16.mxu0 0
  %362 = vmatpush1.bf16.msra.mxu0 0
  %363 = vmatprep.subr.bf16.mxu0 0
  %364 = vmatpush1.bf16.msra.mxu0 0
  %365 = vmatprep.subr.bf16.mxu0 0
  %366 = vmatpush1.bf16.msra.mxu0 0
  %367 = vmatprep.subr.bf16.mxu0 0
  %368 = vmatpush1.bf16.msra.mxu0 0
  %369 = vmatprep.subr.bf16.mxu0 0
  %370 = vmatpush1.bf16.msra.mxu0 0
  %371 = vmatprep.subr.bf16.mxu0 0
  %372 = vmatpush1.bf16.msra.mxu0 0
  %373 = vmatprep.subr.bf16.mxu0 0
  %374 = vmatpush1.bf16.msra.mxu0 0
  %375 = vmatprep.subr.bf16.mxu0 0
  %376 = vmatpush1.bf16.msra.mxu0 0
  %377 = vmatprep.subr.bf16.mxu0 0
  %378 = vmatpush1.bf16.msra.mxu0 0
  %379 = vmatprep.subr.bf16.mxu0 0
  %380 = vmatpush1.bf16.msra.mxu0 0
  %381 = vmatprep.mubr.bf16.mxu0 0
  %382 = vmatmul.mubr.bf16.gmra.mrb[0].mxu0 %v344
  %v383 = vpop.f32.mrb[0].mxu0
  %v384 = vadd.f32 0.0, %v383
  %v385 = vpop.f32.mrb[0].mxu0
  %v386 = vpop.f32.mrb[0].mxu0
  %v387 = vpop.f32.mrb[0].mxu0
  %388 = vdwg.mxu0
  %389 = vst.msk [vmem:[#allocation2] sm:$0xff] %vm168, %v336
  %390 = vst.msk [vmem:[#allocation2 + $0x8] sm:$0xff] %vm168, %v384
  %391 = vrot.lane.b32.xlu0 %v163, 120
  %v392 = vpop.permute.xlu0 %391
  %393 = vrot.lane.b32.xlu0 %v163, 88
  %v394 = vpop.permute.xlu0 %393
  %v396 = vsel %vm168, %v392, 0
  %v399 = vsel %vm168, %v394, 0
  %401 = vmatprep.subr.bf16.mxu0 0
  %402 = vmatpush1.bf16.xpose.msra.mxu0 %v399
  %403 = vmatprep.subr.bf16.mxu0 0
  %404 = vmatpush1.bf16.xpose.msra.mxu0 0
  %405 = vmatprep.subr.bf16.mxu0 0
  %406 = vmatpush1.bf16.xpose.msra.mxu0 0
  %407 = vmatprep.subr.bf16.mxu0 0
  %408 = vmatpush1.bf16.xpose.msra.mxu0 0
  %409 = vmatprep.subr.bf16.mxu0 0
  %410 = vmatpush1.bf16.xpose.msra.mxu0 0
  %411 = vmatprep.subr.bf16.mxu0 0
  %412 = vmatpush1.bf16.xpose.msra.mxu0 0
  %413 = vmatprep.subr.bf16.mxu0 0
  %414 = vmatpush1.bf16.xpose.msra.mxu0 0
  %415 = vmatprep.subr.bf16.mxu0 0
  %416 = vmatpush1.bf16.xpose.msra.mxu0 0
  %417 = vmatprep.subr.bf16.mxu0 0
  %418 = vmatpush1.bf16.xpose.msra.mxu0 0
  %419 = vmatprep.subr.bf16.mxu0 0
  %420 = vmatpush1.bf16.xpose.msra.mxu0 0
  %421 = vmatprep.subr.bf16.mxu0 0
  %422 = vmatpush1.bf16.xpose.msra.mxu0 0
  %423 = vmatprep.subr.bf16.mxu0 0
  %424 = vmatpush1.bf16.xpose.msra.mxu0 0
  %425 = vmatprep.subr.bf16.mxu0 0
  %426 = vmatpush1.bf16.xpose.msra.mxu0 0
  %427 = vmatprep.subr.bf16.mxu0 0
  %428 = vmatpush1.bf16.xpose.msra.mxu0 0
  %429 = vmatprep.subr.bf16.mxu0 0
  %430 = vmatpush1.bf16.xpose.msra.mxu0 0
  %431 = vmatprep.subr.bf16.mxu0 0
  %432 = vmatpush1.bf16.xpose.msra.mxu0 0
  %433 = vmatprep.mubr.bf16.mxu0 0
  %434 = vmatmul.mubr.bf16.gmra.mrb[0].mxu0 %v396
  %v435 = vpop.f32.mrb[0].mxu0
  %v436 = vadd.f32 0.0, %v435
  %v437 = vpop.f32.mrb[0].mxu0
  %v438 = vpop.f32.mrb[0].mxu0
  %v439 = vpop.f32.mrb[0].mxu0
  %440 = vdwg.mxu0
  %441 = vrot.lane.b32.xlu0 %v164, 120
  %v442 = vpop.permute.xlu0 %441
  %443 = vrot.lane.b32.xlu0 %v164, 88
  %v444 = vpop.permute.xlu0 %443
  %v446 = vsel %vm168, %v442, 0
  %v449 = vsel %vm168, %v444, 0
  %451 = vmatprep.subr.bf16.mxu0 0
  %452 = vmatpush1.bf16.xpose.msra.mxu0 %v449
  %453 = vmatprep.subr.bf16.mxu0 0
  %454 = vmatpush1.bf16.xpose.msra.mxu0 0
  %455 = vmatprep.subr.bf16.mxu0 0
  %456 = vmatpush1.bf16.xpose.msra.mxu0 0
  %457 = vmatprep.subr.bf16.mxu0 0
  %458 = vmatpush1.bf16.xpose.msra.mxu0 0
  %459 = vmatprep.subr.bf16.mxu0 0
  %460 = vmatpush1.bf16.xpose.msra.mxu0 0
  %461 = vmatprep.subr.bf16.mxu0 0
  %462 = vmatpush1.bf16.xpose.msra.mxu0 0
  %463 = vmatprep.subr.bf16.mxu0 0
  %464 = vmatpush1.bf16.xpose.msra.mxu0 0
  %465 = vmatprep.subr.bf16.mxu0 0
  %466 = vmatpush1.bf16.xpose.msra.mxu0 0
  %467 = vmatprep.subr.bf16.mxu0 0
  %468 = vmatpush1.bf16.xpose.msra.mxu0 0
  %469 = vmatprep.subr.bf16.mxu0 0
  %470 = vmatpush1.bf16.xpose.msra.mxu0 0
  %471 = vmatprep.subr.bf16.mxu0 0
  %472 = vmatpush1.bf16.xpose.msra.mxu0 0
  %473 = vmatprep.subr.bf16.mxu0 0
  %474 = vmatpush1.bf16.xpose.msra.mxu0 0
  %475 = vmatprep.subr.bf16.mxu0 0
  %476 = vmatpush1.bf16.xpose.msra.mxu0 0
  %477 = vmatprep.subr.bf16.mxu0 0
  %478 = vmatpush1.bf16.xpose.msra.mxu0 0
  %479 = vmatprep.subr.bf16.mxu0 0
  %480 = vmatpush1.bf16.xpose.msra.mxu0 0
  %481 = vmatprep.subr.bf16.mxu0 0
  %482 = vmatpush1.bf16.xpose.msra.mxu0 0
  %483 = vmatprep.mubr.bf16.mxu0 0
  %484 = vmatmul.mubr.bf16.gmra.mrb[0].mxu0 %v446
  %v485 = vpop.f32.mrb[0].mxu0
  %v486 = vadd.f32 0.0, %v485
  %v487 = vpop.f32.mrb[0].mxu0
  %v488 = vpop.f32.mrb[0].mxu0
  %v489 = vpop.f32.mrb[0].mxu0
  %490 = vdwg.mxu0
  %v491 = vmul.f32 %v436, 0.35355338
  %v492 = vmul.f32 %v486, 0.35355338
  %v493 = vadd.f32 %v491, %v82
  %v494 = vadd.f32 %v492, %v86
  %v495 = vsel %vm168, %v493, -inf
  %496 = vmax.xlane.f32.xlu0 %v495
  %v497 = vpop.xlane.xlu0 %496
  %v498 = vsel %vm168, %v494, -inf
  %499 = vmax.xlane.f32.xlu0 %v498
  %v500 = vpop.xlane.xlu0 %499
  %v501 = vsub.f32 %v493, %v497
  %v502 = vsub.f32 %v494, %v500
  %v503 = vmul.f32 %v501, 1.442695
  %v504 = vpow.pop %v503
  %v505 = vmul.f32 %v502, 1.442695
  %v506 = vpow.pop %v505
  %v507 = vsel %vm168, %v504, 0.0
  %508 = vadd.xlane.f32.xlu0 %v507
  %v509 = vpop.xlane.xlu0 %508
  %v510 = vsel %vm168, %v506, 0.0
  %511 = vadd.xlane.f32.xlu0 %v510
  %v512 = vpop.xlane.xlu0 %511
  %v513 = vrcp.pop %v509
  %v514 = vrcp.pop %v512
  %v515 = vmul.f32 %v504, %v513
  %v516 = vmul.f32 %v506, %v514
  %v517 = vpack.c.bf16 %v515, %v515
  %v518 = vpack.c.bf16 %v516, %v516
  %519 = vrot.lane.b32.xlu0 %v163, 56
  %v520 = vpop.permute.xlu0 %519
  %v522 = vsel %vm168, %v517, 0
  %v525 = vsel %vm297, %v520, 0
  %527 = vmatprep.subr.bf16.mxu0 0
  %528 = vmatpush1.bf16.msra.mxu0 %v525
  %529 = vmatprep.subr.bf16.mxu0 0
  %530 = vmatpush1.bf16.msra.mxu0 0
  %531 = vmatprep.subr.bf16.mxu0 0
  %532 = vmatpush1.bf16.msra.mxu0 0
  %533 = vmatprep.subr.bf16.mxu0 0
  %534 = vmatpush1.bf16.msra.mxu0 0
  %535 = vmatprep.subr.bf16.mxu0 0
  %536 = vmatpush1.bf16.msra.mxu0 0
  %537 = vmatprep.subr.bf16.mxu0 0
  %538 = vmatpush1.bf16.msra.mxu0 0
  %539 = vmatprep.subr.bf16.mxu0 0
  %540 = vmatpush1.bf16.msra.mxu0 0
  %541 = vmatprep.subr.bf16.mxu0 0
  %542 = vmatpush1.bf16.msra.mxu0 0
  %543 = vmatprep.subr.bf16.mxu0 0
  %544 = vmatpush1.bf16.msra.mxu0 0
  %545 = vmatprep.subr.bf16.mxu0 0
  %546 = vmatpush1.bf16.msra.mxu0 0
  %547 = vmatprep.subr.bf16.mxu0 0
  %548 = vmatpush1.bf16.msra.mxu0 0
  %549 = vmatprep.subr.bf16.mxu0 0
  %550 = vmatpush1.bf16.msra.mxu0 0
  %551 = vmatprep.subr.bf16.mxu0 0
  %552 = vmatpush1.bf16.msra.mxu0 0
  %553 = vmatprep.subr.bf16.mxu0 0
  %554 = vmatpush1.bf16.msra.mxu0 0
  %555 = vmatprep.subr.bf16.mxu0 0
  %556 = vmatpush1.bf16.msra.mxu0 0
  %557 = vmatprep.subr.bf16.mxu0 0
  %558 = vmatpush1.bf16.msra.mxu0 0
  %559 = vmatprep.mubr.bf16.mxu0 0
  %560 = vmatmul.mubr.bf16.gmra.mrb[0].mxu0 %v522
  %v561 = vpop.f32.mrb[0].mxu0
  %v562 = vadd.f32 0.0, %v561
  %v563 = vpop.f32.mrb[0].mxu0
  %v564 = vpop.f32.mrb[0].mxu0
  %v565 = vpop.f32.mrb[0].mxu0
  %566 = vdwg.mxu0
  %567 = vrot.lane.b32.xlu0 %v164, 56
  %v568 = vpop.permute.xlu0 %567
  %v570 = vsel %vm168, %v518, 0
  %v573 = vsel %vm297, %v568, 0
  %575 = vmatprep.subr.bf16.mxu0 0
  %576 = vmatpush1.bf16.msra.mxu0 %v573
  %577 = vmatprep.subr.bf16.mxu0 0
  %578 = vmatpush1.bf16.msra.mxu0 0
  %579 = vmatprep.subr.bf16.mxu0 0
  %580 = vmatpush1.bf16.msra.mxu0 0
  %581 = vmatprep.subr.bf16.mxu0 0
  %582 = vmatpush1.bf16.msra.mxu0 0
  %583 = vmatprep.subr.bf16.mxu0 0
  %584 = vmatpush1.bf16.msra.mxu0 0
  %585 = vmatprep.subr.bf16.mxu0 0
  %586 = vmatpush1.bf16.msra.mxu0 0
  %587 = vmatprep.subr.bf16.mxu0 0
  %588 = vmatpush1.bf16.msra.mxu0 0
  %589 = vmatprep.subr.bf16.mxu0 0
  %590 = vmatpush1.bf16.msra.mxu0 0
  %591 = vmatprep.subr.bf16.mxu0 0
  %592 = vmatpush1.bf16.msra.mxu0 0
  %593 = vmatprep.subr.bf16.mxu0 0
  %594 = vmatpush1.bf16.msra.mxu0 0
  %595 = vmatprep.subr.bf16.mxu0 0
  %596 = vmatpush1.bf16.msra.mxu0 0
  %597 = vmatprep.subr.bf16.mxu0 0
  %598 = vmatpush1.bf16.msra.mxu0 0
  %599 = vmatprep.subr.bf16.mxu0 0
  %600 = vmatpush1.bf16.msra.mxu0 0
  %601 = vmatprep.subr.bf16.mxu0 0
  %602 = vmatpush1.bf16.msra.mxu0 0
  %603 = vmatprep.subr.bf16.mxu0 0
  %604 = vmatpush1.bf16.msra.mxu0 0
  %605 = vmatprep.subr.bf16.mxu0 0
  %606 = vmatpush1.bf16.msra.mxu0 0
  %607 = vmatprep.mubr.bf16.mxu0 0
  %608 = vmatmul.mubr.bf16.gmra.mrb[0].mxu0 %v570
  %v609 = vpop.f32.mrb[0].mxu0
  %v610 = vadd.f32 0.0, %v609
  %v611 = vpop.f32.mrb[0].mxu0
  %v612 = vpop.f32.mrb[0].mxu0
  %v613 = vpop.f32.mrb[0].mxu0
  %614 = vdwg.mxu0
  %617 = vrot.lane.b32.xlu0 %v562, 8
  %v618 = vpop.permute.xlu0 %617
  %619 = vrot.lane.b32.xlu0 %v610, 8
  %v620 = vpop.permute.xlu0 %619
  %vm623 = vcmask 130112
  %624 = vst.msk [vmem:[#allocation2] sm:$0xff] %vm623, %v618
  %625 = vst.msk [vmem:[#allocation2 + $0x8] sm:$0xff] %vm623, %v620
  %626 = vrot.lane.b32.xlu0 %v163, 112
  %v627 = vpop.permute.xlu0 %626
  %628 = vrot.lane.b32.xlu0 %v163, 80
  %v629 = vpop.permute.xlu0 %628
  %v631 = vsel %vm168, %v627, 0
  %v634 = vsel %vm168, %v629, 0
  %636 = vmatprep.subr.bf16.mxu0 0
  %637 = vmatpush1.bf16.xpose.msra.mxu0 %v634
  %638 = vmatprep.subr.bf16.mxu0 0
  %639 = vmatpush1.bf16.xpose.msra.mxu0 0
  %640 = vmatprep.subr.bf16.mxu0 0
  %641 = vmatpush1.bf16.xpose.msra.mxu0 0
  %642 = vmatprep.subr.bf16.mxu0 0
  %643 = vmatpush1.bf16.xpose.msra.mxu0 0
  %644 = vmatprep.subr.bf16.mxu0 0
  %645 = vmatpush1.bf16.xpose.msra.mxu0 0
  %646 = vmatprep.subr.bf16.mxu0 0
  %647 = vmatpush1.bf16.xpose.msra.mxu0 0
  %648 = vmatprep.subr.bf16.mxu0 0
  %649 = vmatpush1.bf16.xpose.msra.mxu0 0
  %650 = vmatprep.subr.bf16.mxu0 0
  %651 = vmatpush1.bf16.xpose.msra.mxu0 0
  %652 = vmatprep.subr.bf16.mxu0 0
  %653 = vmatpush1.bf16.xpose.msra.mxu0 0
  %654 = vmatprep.subr.bf16.mxu0 0
  %655 = vmatpush1.bf16.xpose.msra.mxu0 0
  %656 = vmatprep.subr.bf16.mxu0 0
  %657 = vmatpush1.bf16.xpose.msra.mxu0 0
  %658 = vmatprep.subr.bf16.mxu0 0
  %659 = vmatpush1.bf16.xpose.msra.mxu0 0
  %660 = vmatprep.subr.bf16.mxu0 0
  %661 = vmatpush1.bf16.xpose.msra.mxu0 0
  %662 = vmatprep.subr.bf16.mxu0 0
  %663 = vmatpush1.bf16.xpose.msra.mxu0 0
  %664 = vmatprep.subr.bf16.mxu0 0
  %665 = vmatpush1.bf16.xpose.msra.mxu0 0
  %666 = vmatprep.subr.bf16.mxu0 0
  %667 = vmatpush1.bf16.xpose.msra.mxu0 0
  %668 = vmatprep.mubr.bf16.mxu0 0
  %669 = vmatmul.mubr.bf16.gmra.mrb[0].mxu0 %v631
  %v670 = vpop.f32.mrb[0].mxu0
  %v671 = vadd.f32 0.0, %v670
  %v672 = vpop.f32.mrb[0].mxu0
  %v673 = vpop.f32.mrb[0].mxu0
  %v674 = vpop.f32.mrb[0].mxu0
  %675 = vdwg.mxu0
  %676 = vrot.lane.b32.xlu0 %v164, 112
  %v677 = vpop.permute.xlu0 %676
  %678 = vrot.lane.b32.xlu0 %v164, 80
  %v679 = vpop.permute.xlu0 %678
  %v681 = vsel %vm168, %v677, 0
  %v684 = vsel %vm168, %v679, 0
  %686 = vmatprep.subr.bf16.mxu0 0
  %687 = vmatpush1.bf16.xpose.msra.mxu0 %v684
  %688 = vmatprep.subr.bf16.mxu0 0
  %689 = vmatpush1.bf16.xpose.msra.mxu0 0
  %690 = vmatprep.subr.bf16.mxu0 0
  %691 = vmatpush1.bf16.xpose.msra.mxu0 0
  %692 = vmatprep.subr.bf16.mxu0 0
  %693 = vmatpush1.bf16.xpose.msra.mxu0 0
  %694 = vmatprep.subr.bf16.mxu0 0
  %695 = vmatpush1.bf16.xpose.msra.mxu0 0
  %696 = vmatprep.subr.bf16.mxu0 0
  %697 = vmatpush1.bf16.xpose.msra.mxu0 0
  %698 = vmatprep.subr.bf16.mxu0 0
  %699 = vmatpush1.bf16.xpose.msra.mxu0 0
  %700 = vmatprep.subr.bf16.mxu0 0
  %701 = vmatpush1.bf16.xpose.msra.mxu0 0
  %702 = vmatprep.subr.bf16.mxu0 0
  %703 = vmatpush1.bf16.xpose.msra.mxu0 0
  %704 = vmatprep.subr.bf16.mxu0 0
  %705 = vmatpush1.bf16.xpose.msra.mxu0 0
  %706 = vmatprep.subr.bf16.mxu0 0
  %707 = vmatpush1.bf16.xpose.msra.mxu0 0
  %708 = vmatprep.subr.bf16.mxu0 0
  %709 = vmatpush1.bf16.xpose.msra.mxu0 0
  %710 = vmatprep.subr.bf16.mxu0 0
  %711 = vmatpush1.bf16.xpose.msra.mxu0 0
  %712 = vmatprep.subr.bf16.mxu0 0
  %713 = vmatpush1.bf16.xpose.msra.mxu0 0
  %714 = vmatprep.subr.bf16.mxu0 0
  %715 = vmatpush1.bf16.xpose.msra.mxu0 0
  %716 = vmatprep.subr.bf16.mxu0 0
  %717 = vmatpush1.bf16.xpose.msra.mxu0 0
  %718 = vmatprep.mubr.bf16.mxu0 0
  %719 = vmatmul.mubr.bf16.gmra.mrb[0].mxu0 %v681
  %v720 = vpop.f32.mrb[0].mxu0
  %v721 = vadd.f32 0.0, %v720
  %v722 = vpop.f32.mrb[0].mxu0
  %v723 = vpop.f32.mrb[0].mxu0
  %v724 = vpop.f32.mrb[0].mxu0
  %725 = vdwg.mxu0
  %v726 = vmul.f32 %v671, 0.35355338
  %v727 = vmul.f32 %v721, 0.35355338
  %v728 = vadd.f32 %v726, %v82
  %v729 = vadd.f32 %v727, %v86
  %v730 = vsel %vm168, %v728, -inf
  %731 = vmax.xlane.f32.xlu0 %v730
  %v732 = vpop.xlane.xlu0 %731
  %v733 = vsel %vm168, %v729, -inf
  %734 = vmax.xlane.f32.xlu0 %v733
  %v735 = vpop.xlane.xlu0 %734
  %v736 = vsub.f32 %v728, %v732
  %v737 = vsub.f32 %v729, %v735
  %v738 = vmul.f32 %v736, 1.442695
  %v739 = vpow.pop %v738
  %v740 = vmul.f32 %v737, 1.442695
  %v741 = vpow.pop %v740
  %v742 = vsel %vm168, %v739, 0.0
  %743 = vadd.xlane.f32.xlu0 %v742
  %v744 = vpop.xlane.xlu0 %743
  %v745 = vsel %vm168, %v741, 0.0
  %746 = vadd.xlane.f32.xlu0 %v745
  %v747 = vpop.xlane.xlu0 %746
  %v748 = vrcp.pop %v744
  %v749 = vrcp.pop %v747
  %v750 = vmul.f32 %v739, %v748
  %v751 = vmul.f32 %v741, %v749
  %v752 = vpack.c.bf16 %v750, %v750
  %v753 = vpack.c.bf16 %v751, %v751
  %754 = vrot.lane.b32.xlu0 %v163, 48
  %v755 = vpop.permute.xlu0 %754
  %v757 = vsel %vm168, %v752, 0
  %v760 = vsel %vm297, %v755, 0
  %762 = vmatprep.subr.bf16.mxu0 0
  %763 = vmatpush1.bf16.msra.mxu0 %v760
  %764 = vmatprep.subr.bf16.mxu0 0
  %765 = vmatpush1.bf16.msra.mxu0 0
  %766 = vmatprep.subr.bf16.mxu0 0
  %767 = vmatpush1.bf16.msra.mxu0 0
  %768 = vmatprep.subr.bf16.mxu0 0
  %769 = vmatpush1.bf16.msra.mxu0 0
  %770 = vmatprep.subr.bf16.mxu0 0
  %771 = vmatpush1.bf16.msra.mxu0 0
  %772 = vmatprep.subr.bf16.mxu0 0
  %773 = vmatpush1.bf16.msra.mxu0 0
  %774 = vmatprep.subr.bf16.mxu0 0
  %775 = vmatpush1.bf16.msra.mxu0 0
  %776 = vmatprep.subr.bf16.mxu0 0
  %777 = vmatpush1.bf16.msra.mxu0 0
  %778 = vmatprep.subr.bf16.mxu0 0
  %779 = vmatpush1.bf16.msra.mxu0 0
  %780 = vmatprep.subr.bf16.mxu0 0
  %781 = vmatpush1.bf16.msra.mxu0 0
  %782 = vmatprep.subr.bf16.mxu0 0
  %783 = vmatpush1.bf16.msra.mxu0 0
  %784 = vmatprep.subr.bf16.mxu0 0
  %785 = vmatpush1.bf16.msra.mxu0 0
  %786 = vmatprep.subr.bf16.mxu0 0
  %787 = vmatpush1.bf16.msra.mxu0 0
  %788 = vmatprep.subr.bf16.mxu0 0
  %789 = vmatpush1.bf16.msra.mxu0 0
  %790 = vmatprep.subr.bf16.mxu0 0
  %791 = vmatpush1.bf16.msra.mxu0 0
  %792 = vmatprep.subr.bf16.mxu0 0
  %793 = vmatpush1.bf16.msra.mxu0 0
  %794 = vmatprep.mubr.bf16.mxu0 0
  %795 = vmatmul.mubr.bf16.gmra.mrb[0].mxu0 %v757
  %v796 = vpop.f32.mrb[0].mxu0
  %v797 = vadd.f32 0.0, %v796
  %v798 = vpop.f32.mrb[0].mxu0
  %v799 = vpop.f32.mrb[0].mxu0
  %v800 = vpop.f32.mrb[0].mxu0
  %801 = vdwg.mxu0
  %802 = vrot.lane.b32.xlu0 %v164, 48
  %v803 = vpop.permute.xlu0 %802
  %v805 = vsel %vm168, %v753, 0
  %v808 = vsel %vm297, %v803, 0
  %810 = vmatprep.subr.bf16.mxu0 0
  %811 = vmatpush1.bf16.msra.mxu0 %v808
  %812 = vmatprep.subr.bf16.mxu0 0
  %813 = vmatpush1.bf16.msra.mxu0 0
  %814 = vmatprep.subr.bf16.mxu0 0
  %815 = vmatpush1.bf16.msra.mxu0 0
  %816 = vmatprep.subr.bf16.mxu0 0
  %817 = vmatpush1.bf16.msra.mxu0 0
  %818 = vmatprep.subr.bf16.mxu0 0
  %819 = vmatpush1.bf16.msra.mxu0 0
  %820 = vmatprep.subr.bf16.mxu0 0
  %821 = vmatpush1.bf16.msra.mxu0 0
  %822 = vmatprep.subr.bf16.mxu0 0
  %823 = vmatpush1.bf16.msra.mxu0 0
  %824 = vmatprep.subr.bf16.mxu0 0
  %825 = vmatpush1.bf16.msra.mxu0 0
  %826 = vmatprep.subr.bf16.mxu0 0
  %827 = vmatpush1.bf16.msra.mxu0 0
  %828 = vmatprep.subr.bf16.mxu0 0
  %829 = vmatpush1.bf16.msra.mxu0 0
  %830 = vmatprep.subr.bf16.mxu0 0
  %831 = vmatpush1.bf16.msra.mxu0 0
  %832 = vmatprep.subr.bf16.mxu0 0
  %833 = vmatpush1.bf16.msra.mxu0 0
  %834 = vmatprep.subr.bf16.mxu0 0
  %835 = vmatpush1.bf16.msra.mxu0 0
  %836 = vmatprep.subr.bf16.mxu0 0
  %837 = vmatpush1.bf16.msra.mxu0 0
  %838 = vmatprep.subr.bf16.mxu0 0
  %839 = vmatpush1.bf16.msra.mxu0 0
  %840 = vmatprep.subr.bf16.mxu0 0
  %841 = vmatpush1.bf16.msra.mxu0 0
  %842 = vmatprep.mubr.bf16.mxu0 0
  %843 = vmatmul.mubr.bf16.gmra.mrb[0].mxu0 %v805
  %v844 = vpop.f32.mrb[0].mxu0
  %v845 = vadd.f32 0.0, %v844
  %v846 = vpop.f32.mrb[0].mxu0
  %v847 = vpop.f32.mrb[0].mxu0
  %v848 = vpop.f32.mrb[0].mxu0
  %849 = vdwg.mxu0
  %852 = vrot.lane.b32.xlu0 %v797, 16
  %v853 = vpop.permute.xlu0 %852
  %854 = vrot.lane.b32.xlu0 %v845, 16
  %v855 = vpop.permute.xlu0 %854
  %vm858 = vcmask 195712
  %859 = vst.msk [vmem:[#allocation2] sm:$0xff] %vm858, %v853
  %860 = vst.msk [vmem:[#allocation2 + $0x8] sm:$0xff] %vm858, %v855
  %861 = vrot.lane.b32.xlu0 %v163, 104
  %v862 = vpop.permute.xlu0 %861
  %863 = vrot.lane.b32.xlu0 %v163, 72
  %v864 = vpop.permute.xlu0 %863
  %v866 = vsel %vm168, %v862, 0
  %v869 = vsel %vm168, %v864, 0
  %871 = vmatprep.subr.bf16.mxu0 0
  %872 = vmatpush1.bf16.xpose.msra.mxu0 %v869
  %873 = vmatprep.subr.bf16.mxu0 0
  %874 = vmatpush1.bf16.xpose.msra.mxu0 0
  %875 = vmatprep.subr.bf16.mxu0 0
  %876 = vmatpush1.bf16.xpose.msra.mxu0 0
  %877 = vmatprep.subr.bf16.mxu0 0
  %878 = vmatpush1.bf16.xpose.msra.mxu0 0
  %879 = vmatprep.subr.bf16.mxu0 0
  %880 = vmatpush1.bf16.xpose.msra.mxu0 0
  %881 = vmatprep.subr.bf16.mxu0 0
  %882 = vmatpush1.bf16.xpose.msra.mxu0 0
  %883 = vmatprep.subr.bf16.mxu0 0
  %884 = vmatpush1.bf16.xpose.msra.mxu0 0
  %885 = vmatprep.subr.bf16.mxu0 0
  %886 = vmatpush1.bf16.xpose.msra.mxu0 0
  %887 = vmatprep.subr.bf16.mxu0 0
  %888 = vmatpush1.bf16.xpose.msra.mxu0 0
  %889 = vmatprep.subr.bf16.mxu0 0
  %890 = vmatpush1.bf16.xpose.msra.mxu0 0
  %891 = vmatprep.subr.bf16.mxu0 0
  %892 = vmatpush1.bf16.xpose.msra.mxu0 0
  %893 = vmatprep.subr.bf16.mxu0 0
  %894 = vmatpush1.bf16.xpose.msra.mxu0 0
  %895 = vmatprep.subr.bf16.mxu0 0
  %896 = vmatpush1.bf16.xpose.msra.mxu0 0
  %897 = vmatprep.subr.bf16.mxu0 0
  %898 = vmatpush1.bf16.xpose.msra.mxu0 0
  %899 = vmatprep.subr.bf16.mxu0 0
  %900 = vmatpush1.bf16.xpose.msra.mxu0 0
  %901 = vmatprep.subr.bf16.mxu0 0
  %902 = vmatpush1.bf16.xpose.msra.mxu0 0
  %903 = vmatprep.mubr.bf16.mxu0 0
  %904 = vmatmul.mubr.bf16.gmra.mrb[0].mxu0 %v866
  %v905 = vpop.f32.mrb[0].mxu0
  %v906 = vadd.f32 0.0, %v905
  %v907 = vpop.f32.mrb[0].mxu0
  %v908 = vpop.f32.mrb[0].mxu0
  %v909 = vpop.f32.mrb[0].mxu0
  %910 = vdwg.mxu0
  %911 = vrot.lane.b32.xlu0 %v164, 104
  %v912 = vpop.permute.xlu0 %911
  %913 = vrot.lane.b32.xlu0 %v164, 72
  %v914 = vpop.permute.xlu0 %913
  %v916 = vsel %vm168, %v912, 0
  %v919 = vsel %vm168, %v914, 0
  %921 = vmatprep.subr.bf16.mxu0 0
  %922 = vmatpush1.bf16.xpose.msra.mxu0 %v919
  %923 = vmatprep.subr.bf16.mxu0 0
  %924 = vmatpush1.bf16.xpose.msra.mxu0 0
  %925 = vmatprep.subr.bf16.mxu0 0
  %926 = vmatpush1.bf16.xpose.msra.mxu0 0
  %927 = vmatprep.subr.bf16.mxu0 0
  %928 = vmatpush1.bf16.xpose.msra.mxu0 0
  %929 = vmatprep.subr.bf16.mxu0 0
  %930 = vmatpush1.bf16.xpose.msra.mxu0 0
  %931 = vmatprep.subr.bf16.mxu0 0
  %932 = vmatpush1.bf16.xpose.msra.mxu0 0
  %933 = vmatprep.subr.bf16.mxu0 0
  %934 = vmatpush1.bf16.xpose.msra.mxu0 0
  %935 = vmatprep.subr.bf16.mxu0 0
  %936 = vmatpush1.bf16.xpose.msra.mxu0 0
  %937 = vmatprep.subr.bf16.mxu0 0
  %938 = vmatpush1.bf16.xpose.msra.mxu0 0
  %939 = vmatprep.subr.bf16.mxu0 0
  %940 = vmatpush1.bf16.xpose.msra.mxu0 0
  %941 = vmatprep.subr.bf16.mxu0 0
  %942 = vmatpush1.bf16.xpose.msra.mxu0 0
  %943 = vmatprep.subr.bf16.mxu0 0
  %944 = vmatpush1.bf16.xpose.msra.mxu0 0
  %945 = vmatprep.subr.bf16.mxu0 0
  %946 = vmatpush1.bf16.xpose.msra.mxu0 0
  %947 = vmatprep.subr.bf16.mxu0 0
  %948 = vmatpush1.bf16.xpose.msra.mxu0 0
  %949 = vmatprep.subr.bf16.mxu0 0
  %950 = vmatpush1.bf16.xpose.msra.mxu0 0
  %951 = vmatprep.subr.bf16.mxu0 0
  %952 = vmatpush1.bf16.xpose.msra.mxu0 0
  %953 = vmatprep.mubr.bf16.mxu0 0
  %954 = vmatmul.mubr.bf16.gmra.mrb[0].mxu0 %v916
  %v955 = vpop.f32.mrb[0].mxu0
  %v956 = vadd.f32 0.0, %v955
  %v957 = vpop.f32.mrb[0].mxu0
  %v958 = vpop.f32.mrb[0].mxu0
  %v959 = vpop.f32.mrb[0].mxu0
  %960 = vdwg.mxu0
  %v961 = vmul.f32 %v906, 0.35355338
  %v962 = vmul.f32 %v956, 0.35355338
  %v963 = vadd.f32 %v961, %v82
  %v964 = vadd.f32 %v962, %v86
  %v965 = vsel %vm168, %v963, -inf
  %966 = vmax.xlane.f32.xlu0 %v965
  %v967 = vpop.xlane.xlu0 %966
  %v968 = vsel %vm168, %v964, -inf
  %969 = vmax.xlane.f32.xlu0 %v968
  %v970 = vpop.xlane.xlu0 %969
  %v971 = vsub.f32 %v963, %v967
  %v972 = vsub.f32 %v964, %v970
  %v973 = vmul.f32 %v971, 1.442695
  %v974 = vpow.pop %v973
  %v975 = vmul.f32 %v972, 1.442695
  %v976 = vpow.pop %v975
  %v977 = vsel %vm168, %v974, 0.0
  %978 = vadd.xlane.f32.xlu0 %v977
  %v979 = vpop.xlane.xlu0 %978
  %v980 = vsel %vm168, %v976, 0.0
  %981 = vadd.xlane.f32.xlu0 %v980
  %v982 = vpop.xlane.xlu0 %981
  %v983 = vrcp.pop %v979
  %v984 = vrcp.pop %v982
  %v985 = vmul.f32 %v974, %v983
  %v986 = vmul.f32 %v976, %v984
  %v987 = vpack.c.bf16 %v985, %v985
  %v988 = vpack.c.bf16 %v986, %v986
  %989 = vrot.lane.b32.xlu0 %v163, 40
  %v990 = vpop.permute.xlu0 %989
  %v992 = vsel %vm168, %v987, 0
  %v995 = vsel %vm297, %v990, 0
  %997 = vmatprep.subr.bf16.mxu0 0
  %998 = vmatpush1.bf16.msra.mxu0 %v995
  %999 = vmatprep.subr.bf16.mxu0 0
  %1000 = vmatpush1.bf16.msra.mxu0 0
  %1001 = vmatprep.subr.bf16.mxu0 0
  %1002 = vmatpush1.bf16.msra.mxu0 0
  %1003 = vmatprep.subr.bf16.mxu0 0
  %1004 = vmatpush1.bf16.msra.mxu0 0
  %1005 = vmatprep.subr.bf16.mxu0 0
  %1006 = vmatpush1.bf16.msra.mxu0 0
  %1007 = vmatprep.subr.bf16.mxu0 0
  %1008 = vmatpush1.bf16.msra.mxu0 0
  %1009 = vmatprep.subr.bf16.mxu0 0
  %1010 = vmatpush1.bf16.msra.mxu0 0
  %1011 = vmatprep.subr.bf16.mxu0 0
  %1012 = vmatpush1.bf16.msra.mxu0 0
  %1013 = vmatprep.subr.bf16.mxu0 0
  %1014 = vmatpush1.bf16.msra.mxu0 0
  %1015 = vmatprep.subr.bf16.mxu0 0
  %1016 = vmatpush1.bf16.msra.mxu0 0
  %1017 = vmatprep.subr.bf16.mxu0 0
  %1018 = vmatpush1.bf16.msra.mxu0 0
  %1019 = vmatprep.subr.bf16.mxu0 0
  %1020 = vmatpush1.bf16.msra.mxu0 0
  %1021 = vmatprep.subr.bf16.mxu0 0
  %1022 = vmatpush1.bf16.msra.mxu0 0
  %1023 = vmatprep.subr.bf16.mxu0 0
  %1024 = vmatpush1.bf16.msra.mxu0 0
  %1025 = vmatprep.subr.bf16.mxu0 0
  %1026 = vmatpush1.bf16.msra.mxu0 0
  %1027 = vmatprep.subr.bf16.mxu0 0
  %1028 = vmatpush1.bf16.msra.mxu0 0
  %1029 = vmatprep.mubr.bf16.mxu0 0
  %1030 = vmatmul.mubr.bf16.gmra.mrb[0].mxu0 %v992
  %v1031 = vpop.f32.mrb[0].mxu0
  %v1032 = vadd.f32 0.0, %v1031
  %v1033 = vpop.f32.mrb[0].mxu0
  %v1034 = vpop.f32.mrb[0].mxu0
  %v1035 = vpop.f32.mrb[0].mxu0
  %1036 = vdwg.mxu0
  %1037 = vrot.lane.b32.xlu0 %v164, 40
  %v1038 = vpop.permute.xlu0 %1037
  %v1040 = vsel %vm168, %v988, 0
  %v1043 = vsel %vm297, %v1038, 0
  %1045 = vmatprep.subr.bf16.mxu0 0
  %1046 = vmatpush1.bf16.msra.mxu0 %v1043
  %1047 = vmatprep.subr.bf16.mxu0 0
  %1048 = vmatpush1.bf16.msra.mxu0 0
  %1049 = vmatprep.subr.bf16.mxu0 0
  %1050 = vmatpush1.bf16.msra.mxu0 0
  %1051 = vmatprep.subr.bf16.mxu0 0
  %1052 = vmatpush1.bf16.msra.mxu0 0
  %1053 = vmatprep.subr.bf16.mxu0 0
  %1054 = vmatpush1.bf16.msra.mxu0 0
  %1055 = vmatprep.subr.bf16.mxu0 0
  %1056 = vmatpush1.bf16.msra.mxu0 0
  %1057 = vmatprep.subr.bf16.mxu0 0
  %1058 = vmatpush1.bf16.msra.mxu0 0
  %1059 = vmatprep.subr.bf16.mxu0 0
  %1060 = vmatpush1.bf16.msra.mxu0 0
  %1061 = vmatprep.subr.bf16.mxu0 0
  %1062 = vmatpush1.bf16.msra.mxu0 0
  %1063 = vmatprep.subr.bf16.mxu0 0
  %1064 = vmatpush1.bf16.msra.mxu0 0
  %1065 = vmatprep.subr.bf16.mxu0 0
  %1066 = vmatpush1.bf16.msra.mxu0 0
  %1067 = vmatprep.subr.bf16.mxu0 0
  %1068 = vmatpush1.bf16.msra.mxu0 0
  %1069 = vmatprep.subr.bf16.mxu0 0
  %1070 = vmatpush1.bf16.msra.mxu0 0
  %1071 = vmatprep.subr.bf16.mxu0 0
  %1072 = vmatpush1.bf16.msra.mxu0 0
  %1073 = vmatprep.subr.bf16.mxu0 0
  %1074 = vmatpush1.bf16.msra.mxu0 0
  %1075 = vmatprep.subr.bf16.mxu0 0
  %1076 = vmatpush1.bf16.msra.mxu0 0
  %1077 = vmatprep.mubr.bf16.mxu0 0
  %1078 = vmatmul.mubr.bf16.gmra.mrb[0].mxu0 %v1040
  %v1079 = vpop.f32.mrb[0].mxu0
  %v1080 = vadd.f32 0.0, %v1079
  %v1081 = vpop.f32.mrb[0].mxu0
  %v1082 = vpop.f32.mrb[0].mxu0
  %v1083 = vpop.f32.mrb[0].mxu0
  %1084 = vdwg.mxu0
  %1087 = vrot.lane.b32.xlu0 %v1032, 24
  %v1088 = vpop.permute.xlu0 %1087
  %1089 = vrot.lane.b32.xlu0 %v1080, 24
  %v1090 = vpop.permute.xlu0 %1089
  %vm1093 = vcmask 261312
  %1094 = vst.msk [vmem:[#allocation2] sm:$0xff] %vm1093, %v1088
  %1095 = vst.msk [vmem:[#allocation2 + $0x8] sm:$0xff] %vm1093, %v1090
  %v1096 = vld [vmem:[#allocation2] sm:$0xff]
  %v1097 = vld [vmem:[#allocation2 + $0x8] sm:$0xff]
  %v1098 = vpack.c.bf16 %v1097, %v1096
  %v1100 = vlaneseq
  %v1101 = vshrl.u32 %v1100, 7
  %v1102 = vsub.s32 0, %v1101
  %v1103 = vrot.slane %v162, %v1102
  %v1109 = vunpack.c.l.b16 %v158
  %v1110 = vunpack.c.l.b16 %v159
  %v1111 = vunpack.c.l.b16 %v160
  %v1112 = vunpack.c.l.b16 %v161
  %v1113 = vpack.c.b16 %v1110, %v1109
  %v1114 = vpack.c.b16 %v1112, %v1111
  %v1118 = vsel %vm113, %v1098, 0
  %1120 = vmatprep.subr.bf16.mxu0 0
  %1121 = vmatpush1.bf16.msra.mxu0 %v1113
  %1122 = vmatprep.subr.bf16.mxu0 0
  %1123 = vmatpush1.bf16.msra.mxu0 %v1114
  %1124 = vmatprep.subr.bf16.mxu0 0
  %1125 = vmatpush1.bf16.msra.mxu0 0
  %1126 = vmatprep.subr.bf16.mxu0 0
  %1127 = vmatpush1.bf16.msra.mxu0 0
  %1128 = vmatprep.subr.bf16.mxu0 0
  %1129 = vmatpush1.bf16.msra.mxu0 0
  %1130 = vmatprep.subr.bf16.mxu0 0
  %1131 = vmatpush1.bf16.msra.mxu0 0
  %1132 = vmatprep.subr.bf16.mxu0 0
  %1133 = vmatpush1.bf16.msra.mxu0 0
  %1134 = vmatprep.subr.bf16.mxu0 0
  %1135 = vmatpush1.bf16.msra.mxu0 0
  %1136 = vmatprep.subr.bf16.mxu0 0
  %1137 = vmatpush1.bf16.msra.mxu0 0
  %1138 = vmatprep.subr.bf16.mxu0 0
  %1139 = vmatpush1.bf16.msra.mxu0 0
  %1140 = vmatprep.subr.bf16.mxu0 0
  %1141 = vmatpush1.bf16.msra.mxu0 0
  %1142 = vmatprep.subr.bf16.mxu0 0
  %1143 = vmatpush1.bf16.msra.mxu0 0
  %1144 = vmatprep.subr.bf16.mxu0 0
  %1145 = vmatpush1.bf16.msra.mxu0 0
  %1146 = vmatprep.subr.bf16.mxu0 0
  %1147 = vmatpush1.bf16.msra.mxu0 0
  %1148 = vmatprep.subr.bf16.mxu0 0
  %1149 = vmatpush1.bf16.msra.mxu0 0
  %1150 = vmatprep.subr.bf16.mxu0 0
  %1151 = vmatpush1.bf16.msra.mxu0 0
  %1152 = vmatprep.mubr.bf16.mxu0 0
  %1153 = vmatmul.mubr.bf16.gmra.mrb[0].mxu0 %v1118
  %v1154 = vpop.f32.mrb[0].mxu0
  %v1155 = vadd.f32 %v1103, %v1154
  %v1156 = vpop.f32.mrb[0].mxu0
  %v1157 = vpop.f32.mrb[0].mxu0
  %v1158 = vadd.f32 %v1103, %v1157
  %v1159 = vpop.f32.mrb[0].mxu0
  %1160 = vdwg.mxu0
  %v1161 = vadd.f32 %v51, %v1155
  %v1162 = vadd.f32 %v52, %v1158
  %v1163 = vld [vmem:[%s6] sm:$0x1]
  %v1164 = vld [vmem:[%s7] sm:$0x1]
  %v1165 = vsel %vm113, %v1161, 0.0
  %1166 = vadd.xlane.f32.xlu0 %v1165
  %v1167 = vpop.xlane.xlu0 %1166
  %v1168 = vsel %vm113, %v1162, 0.0
  %1169 = vadd.xlane.f32.xlu0 %v1168
  %v1170 = vpop.xlane.xlu0 %1169
  %v1171 = vrcp.pop 32.0
  %v1172 = vmul.f32 %v1167, %v1171
  %v1173 = vmul.f32 %v1170, %v1171
  %v1174 = vsub.f32 %v1161, %v1172
  %v1175 = vsub.f32 %v1162, %v1173
  %v1176 = vmul.f32 %v1174, %v1174
  %v1177 = vmul.f32 %v1175, %v1175
  %v1178 = vsel %vm113, %v1176, 0.0
  %1179 = vadd.xlane.f32.xlu0 %v1178
  %v1180 = vpop.xlane.xlu0 %1179
  %v1181 = vsel %vm113, %v1177, 0.0
  %1182 = vadd.xlane.f32.xlu0 %v1181
  %v1183 = vpop.xlane.xlu0 %1182
  %v1184 = vmul.f32 %v1180, %v1171
  %v1185 = vmul.f32 %v1183, %v1171
  %v1186 = vadd.f32 %v1184, 1e-05
  %v1187 = vadd.f32 %v1185, 1e-05
  %v1188 = vrsqrt.pop %v1186
  %v1189 = vrsqrt.pop %v1187
  %v1190 = vmul.f32 %v1174, %v1188
  %v1191 = vmul.f32 %v1175, %v1189
  %v1193 = vlaneseq
  %v1194 = vshrl.u32 %v1193, 7
  %v1195 = vsub.s32 0, %v1194
  %v1196 = vrot.slane %v1163, %v1195
  %v1198 = vmul.f32 %v1190, %v1196
  %v1199 = vmul.f32 %v1191, %v1196
  %v1201 = vlaneseq
  %v1202 = vshrl.u32 %v1201, 7
  %v1203 = vsub.s32 0, %v1202
  %v1204 = vrot.slane %v1164, %v1203
  %v1206 = vadd.f32 %v1198, %v1204
  %v1207 = vadd.f32 %v1199, %v1204
  %v1208 = vld [vmem:[%s8] sm:$0xf]
  %v1209 = vld [vmem:[%s8 + $0x4] sm:$0xf]
  %v1210 = vld [vmem:[%s8 + $0x8] sm:$0xf]
  %v1211 = vld [vmem:[%s8 + $0xc] sm:$0xf]
  %v1212 = vld [vmem:[%s9] sm:$0x1]
  %v1213 = vld [vmem:[%s10] sm:$0xf]
  %v1214 = vld [vmem:[%s10 + $0x4] sm:$0xf]
  %v1215 = vld [vmem:[%s10 + $0x8] sm:$0xf]
  %v1216 = vld [vmem:[%s10 + $0xc] sm:$0xf]
  %v1217 = vld [vmem:[%s10 + $0x10] sm:$0xf]
  %v1218 = vld [vmem:[%s10 + $0x14] sm:$0xf]
  %v1219 = vld [vmem:[%s10 + $0x18] sm:$0xf]
  %v1220 = vld [vmem:[%s10 + $0x1c] sm:$0xf]
  %v1221 = vld [vmem:[%s11] sm:$0x1]
  %v1222 = vpack.c.bf16 %v1207, %v1206
  %v1224 = vlaneseq
  %v1225 = vshrl.u32 %v1224, 7
  %v1226 = vsub.s32 0, %v1225
  %v1227 = vrot.slane %v1212, %v1226
  %v1233 = vunpack.c.l.b16 %v1208
  %v1234 = vunpack.c.l.b16 %v1209
  %v1235 = vunpack.c.l.b16 %v1210
  %v1236 = vunpack.c.l.b16 %v1211
  %v1237 = vpack.c.b16 %v1234, %v1233
  %v1238 = vpack.c.b16 %v1236, %v1235
  %v1242 = vsel %vm113, %v1222, 0
  %1244 = vmatprep.subr.bf16.mxu0 0
  %1245 = vmatpush1.bf16.msra.mxu0 %v1237
  %1246 = vmatprep.subr.bf16.mxu0 0
  %1247 = vmatpush1.bf16.msra.mxu0 %v1238
  %1248 = vmatprep.subr.bf16.mxu0 0
  %1249 = vmatpush1.bf16.msra.mxu0 0
  %1250 = vmatprep.subr.bf16.mxu0 0
  %1251 = vmatpush1.bf16.msra.mxu0 0
  %1252 = vmatprep.subr.bf16.mxu0 0
  %1253 = vmatpush1.bf16.msra.mxu0 0
  %1254 = vmatprep.subr.bf16.mxu0 0
  %1255 = vmatpush1.bf16.msra.mxu0 0
  %1256 = vmatprep.subr.bf16.mxu0 0
  %1257 = vmatpush1.bf16.msra.mxu0 0
  %1258 = vmatprep.subr.bf16.mxu0 0
  %1259 = vmatpush1.bf16.msra.mxu0 0
  %1260 = vmatprep.subr.bf16.mxu0 0
  %1261 = vmatpush1.bf16.msra.mxu0 0
  %1262 = vmatprep.subr.bf16.mxu0 0
  %1263 = vmatpush1.bf16.msra.mxu0 0
  %1264 = vmatprep.subr.bf16.mxu0 0
  %1265 = vmatpush1.bf16.msra.mxu0 0
  %1266 = vmatprep.subr.bf16.mxu0 0
  %1267 = vmatpush1.bf16.msra.mxu0 0
  %1268 = vmatprep.subr.bf16.mxu0 0
  %1269 = vmatpush1.bf16.msra.mxu0 0
  %1270 = vmatprep.subr.bf16.mxu0 0
  %1271 = vmatpush1.bf16.msra.mxu0 0
  %1272 = vmatprep.subr.bf16.mxu0 0
  %1273 = vmatpush1.bf16.msra.mxu0 0
  %1274 = vmatprep.subr.bf16.mxu0 0
  %1275 = vmatpush1.bf16.msra.mxu0 0
  %1276 = vmatprep.mubr.bf16.mxu0 0
  %1277 = vmatmul.mubr.bf16.gmra.mrb[0].mxu0 %v1242
  %v1278 = vpop.f32.mrb[0].mxu0
  %v1279 = vadd.f32 %v1227, %v1278
  %v1280 = vpop.f32.mrb[0].mxu0
  %v1281 = vpop.f32.mrb[0].mxu0
  %v1282 = vadd.f32 %v1227, %v1281
  %v1283 = vpop.f32.mrb[0].mxu0
  %1284 = vdwg.mxu0
  %v1285 = vxor.u32 %v1279, 2147483648
  %v1286 = vxor.u32 %v1282, 2147483648
  %v1287 = vmul.f32 %v1285, 1.442695
  %v1288 = vpow.pop %v1287
  %v1289 = vmul.f32 %v1286, 1.442695
  %v1290 = vpow.pop %v1289
  %v1291 = vadd.f32 %v1288, 1.0
  %v1292 = vadd.f32 %v1290, 1.0
  %v1293 = vrcp.pop %v1291
  %v1294 = vmul.f32 1.0, %v1293
  %v1295 = vrcp.pop %v1292
  %v1296 = vmul.f32 1.0, %v1295
  %v1297 = vmul.f32 %v1279, %v1294
  %v1298 = vmul.f32 %v1282, %v1296
  %v1299 = vpack.c.bf16 %v1298, %v1297
  %v1301 = vlaneseq
  %v1302 = vshrl.u32 %v1301, 7
  %v1303 = vsub.s32 0, %v1302
  %v1304 = vrot.slane %v1221, %v1303
  %v1314 = vunpack.c.l.b16 %v1213
  %v1315 = vunpack.c.l.b16 %v1214
  %v1316 = vunpack.c.l.b16 %v1215
  %v1317 = vunpack.c.l.b16 %v1216
  %v1318 = vunpack.c.l.b16 %v1217
  %v1319 = vunpack.c.l.b16 %v1218
  %v1320 = vunpack.c.l.b16 %v1219
  %v1321 = vunpack.c.l.b16 %v1220
  %v1322 = vpack.c.b16 %v1315, %v1314
  %v1323 = vpack.c.b16 %v1317, %v1316
  %v1324 = vpack.c.b16 %v1319, %v1318
  %v1325 = vpack.c.b16 %v1321, %v1320
  %vm1330 = vcmask 523264
  %v1332 = vsel %vm1330, %v1299, 0
  %1334 = vmatprep.subr.bf16.mxu0 0
  %1335 = vmatpush1.bf16.msra.mxu0 %v1322
  %1336 = vmatprep.subr.bf16.mxu0 0
  %1337 = vmatpush1.bf16.msra.mxu0 %v1323
  %1338 = vmatprep.subr.bf16.mxu0 0
  %1339 = vmatpush1.bf16.msra.mxu0 %v1324
  %1340 = vmatprep.subr.bf16.mxu0 0
  %1341 = vmatpush1.bf16.msra.mxu0 %v1325
  %1342 = vmatprep.subr.bf16.mxu0 0
  %1343 = vmatpush1.bf16.msra.mxu0 0
  %1344 = vmatprep.subr.bf16.mxu0 0
  %1345 = vmatpush1.bf16.msra.mxu0 0
  %1346 = vmatprep.subr.bf16.mxu0 0
  %1347 = vmatpush1.bf16.msra.mxu0 0
  %1348 = vmatprep.subr.bf16.mxu0 0
  %1349 = vmatpush1.bf16.msra.mxu0 0
  %1350 = vmatprep.subr.bf16.mxu0 0
  %1351 = vmatpush1.bf16.msra.mxu0 0
  %1352 = vmatprep.subr.bf16.mxu0 0
  %1353 = vmatpush1.bf16.msra.mxu0 0
  %1354 = vmatprep.subr.bf16.mxu0 0
  %1355 = vmatpush1.bf16.msra.mxu0 0
  %1356 = vmatprep.subr.bf16.mxu0 0
  %1357 = vmatpush1.bf16.msra.mxu0 0
  %1358 = vmatprep.subr.bf16.mxu0 0
  %1359 = vmatpush1.bf16.msra.mxu0 0
  %1360 = vmatprep.subr.bf16.mxu0 0
  %1361 = vmatpush1.bf16.msra.mxu0 0
  %1362 = vmatprep.subr.bf16.mxu0 0
  %1363 = vmatpush1.bf16.msra.mxu0 0
  %1364 = vmatprep.subr.bf16.mxu0 0
  %1365 = vmatpush1.bf16.msra.mxu0 0
  %1366 = vmatprep.mubr.bf16.mxu0 0
  %1367 = vmatmul.mubr.bf16.gmra.mrb[0].mxu0 %v1332
  %v1368 = vpop.f32.mrb[0].mxu0
  %v1369 = vadd.f32 %v1304, %v1368
  %v1370 = vpop.f32.mrb[0].mxu0
  %v1371 = vpop.f32.mrb[0].mxu0
  %v1372 = vadd.f32 %v1304, %v1371
  %v1373 = vpop.f32.mrb[0].mxu0
  %1374 = vdwg.mxu0
  %v1375 = vadd.f32 %v1206, %v1369
  %v1376 = vadd.f32 %v1207, %v1372
  %v1377 = vld [vmem:[%s12] sm:$0x1]
  %v1378 = vld [vmem:[%s13] sm:$0x1]
  %v1379 = vsel %vm113, %v1375, 0.0
  %1380 = vadd.xlane.f32.xlu0 %v1379
  %v1381 = vpop.xlane.xlu0 %1380
  %v1382 = vsel %vm113, %v1376, 0.0
  %1383 = vadd.xlane.f32.xlu0 %v1382
  %v1384 = vpop.xlane.xlu0 %1383
  %v1385 = vmul.f32 %v1381, %v1171
  %v1386 = vmul.f32 %v1384, %v1171
  %v1387 = vsub.f32 %v1375, %v1385
  %v1388 = vsub.f32 %v1376, %v1386
  %v1389 = vmul.f32 %v1387, %v1387
  %v1390 = vmul.f32 %v1388, %v1388
  %v1391 = vsel %vm113, %v1389, 0.0
  %1392 = vadd.xlane.f32.xlu0 %v1391
  %v1393 = vpop.xlane.xlu0 %1392
  %v1394 = vsel %vm113, %v1390, 0.0
  %1395 = vadd.xlane.f32.xlu0 %v1394
  %v1396 = vpop.xlane.xlu0 %1395
  %v1397 = vmul.f32 %v1393, %v1171
  %v1398 = vmul.f32 %v1396, %v1171
  %v1399 = vadd.f32 %v1397, 1e-05
  %v1400 = vadd.f32 %v1398, 1e-05
  %v1401 = vrsqrt.pop %v1399
  %v1402 = vrsqrt.pop %v1400
  %v1403 = vmul.f32 %v1387, %v1401
  %v1404 = vmul.f32 %v1388, %v1402
  %v1406 = vlaneseq
  %v1407 = vshrl.u32 %v1406, 7
  %v1408 = vsub.s32 0, %v1407
  %v1409 = vrot.slane %v1377, %v1408
  %v1411 = vmul.f32 %v1403, %v1409
  %v1412 = vmul.f32 %v1404, %v1409
  %v1414 = vlaneseq
  %v1415 = vshrl.u32 %v1414, 7
  %v1416 = vsub.s32 0, %v1415
  %v1417 = vrot.slane %v1378, %v1416
  %v1419 = vadd.f32 %v1411, %v1417
  %v1420 = vadd.f32 %v1412, %v1417
  %v1421 = vld [vmem:[%s14] sm:$0xf]
  %v1422 = vld [vmem:[%s14 + $0x4] sm:$0xf]
  %v1423 = vld [vmem:[%s14 + $0x8] sm:$0xf]
  %v1424 = vld [vmem:[%s14 + $0xc] sm:$0xf]
  %v1425 = vpack.c.bf16 %v1420, %v1419
  %v1430 = vunpack.c.l.b16 %v1421
  %v1431 = vunpack.c.l.b16 %v1422
  %v1432 = vunpack.c.l.b16 %v1423
  %v1433 = vunpack.c.l.b16 %v1424
  %v1434 = vpack.c.b16 %v1431, %v1430
  %v1435 = vpack.c.b16 %v1433, %v1432
  %v1439 = vsel %vm113, %v1425, 0
  %1441 = vmatprep.subr.bf16.mxu0 0
  %1442 = vmatpush1.bf16.msra.mxu0 %v1434
  %1443 = vmatprep.subr.bf16.mxu0 0
  %1444 = vmatpush1.bf16.msra.mxu0 %v1435
  %1445 = vmatprep.subr.bf16.mxu0 0
  %1446 = vmatpush1.bf16.msra.mxu0 0
  %1447 = vmatprep.subr.bf16.mxu0 0
  %1448 = vmatpush1.bf16.msra.mxu0 0
  %1449 = vmatprep.subr.bf16.mxu0 0
  %1450 = vmatpush1.bf16.msra.mxu0 0
  %1451 = vmatprep.subr.bf16.mxu0 0
  %1452 = vmatpush1.bf16.msra.mxu0 0
  %1453 = vmatprep.subr.bf16.mxu0 0
  %1454 = vmatpush1.bf16.msra.mxu0 0
  %1455 = vmatprep.subr.bf16.mxu0 0
  %1456 = vmatpush1.bf16.msra.mxu0 0
  %1457 = vmatprep.subr.bf16.mxu0 0
  %1458 = vmatpush1.bf16.msra.mxu0 0
  %1459 = vmatprep.subr.bf16.mxu0 0
  %1460 = vmatpush1.bf16.msra.mxu0 0
  %1461 = vmatprep.subr.bf16.mxu0 0
  %1462 = vmatpush1.bf16.msra.mxu0 0
  %1463 = vmatprep.subr.bf16.mxu0 0
  %1464 = vmatpush1.bf16.msra.mxu0 0
  %1465 = vmatprep.subr.bf16.mxu0 0
  %1466 = vmatpush1.bf16.msra.mxu0 0
  %1467 = vmatprep.subr.bf16.mxu0 0
  %1468 = vmatpush1.bf16.msra.mxu0 0
  %1469 = vmatprep.subr.bf16.mxu0 0
  %1470 = vmatpush1.bf16.msra.mxu0 0
  %1471 = vmatprep.subr.bf16.mxu0 0
  %1472 = vmatpush1.bf16.msra.mxu0 0
  %1473 = vmatprep.mubr.bf16.mxu0 0
  %1474 = vmatmul.mubr.bf16.gmra.mrb[0].mxu0 %v1439
  %v1475 = vpop.f32.mrb[0].mxu0
  %v1476 = vadd.f32 0.0, %v1475
  %v1477 = vpop.f32.mrb[0].mxu0
  %v1478 = vpop.f32.mrb[0].mxu0
  %v1479 = vadd.f32 0.0, %v1478
  %v1480 = vpop.f32.mrb[0].mxu0
  %1481 = vdwg.mxu0
  %v1482 = vpack.c.bf16 %v1479, %v1476
  %v1484 = vunpack.c.l.b16 %v1482
  %v1485 = vunpack.c.h.b16 %v1482
  %v1486 = vpack.c.b16 %v1484, %v1484
  %v1487 = vpack.c.b16 %v1485, %v1485
  %1490 = vst [vmem:[%s15] sm:$0xf] %v1486
  %1491 = vst [vmem:[%s15 + $0x4] sm:$0xf] %v1487
  // Predicated region
  $region62: #{marian_logits.2} parent=0 // pred_check
    _
  $region63: #{marian_logits.2} parent=0 // pred_check_branch
    %1493 = sbr.rel (0) target = $region65
  $region64: #{marian_logits.2} parent=0 // pred_region
    _
  $region65: #{marian_logits.2} parent=0 // pred_fallthru
    _
  // Predicated region
  $region66: #{marian_logits.2} parent=0 // pred_check
    _
  $region67: #{marian_logits.2} parent=0 // pred_check_branch
    %1495 = sbr.rel (0) target = $region69
  $region68: #{marian_logits.2} parent=0 // pred_region
    _
  $region69: #{marian_logits.2} parent=0 // pred_fallthru
    _

// kernel: marian_logits.3
$region0: #{marian_logits.3}
  #allocation0 [shape = 'u32[]', space=smem, size = 0x4, offset = 0x4, fixed_abs, tag = 'smem constant byte address 0x4 - core index']
  #allocation1 [shape = 'u32[144,128]{1,0:T(1,128)}', space=vmem, size = 0x12000, scoped, tag = 'internal scratch']
  #allocation2 [shape = 'f32[16,32]{1,0:T(8,128)}', space=vmem, size = 0x2000, scoped, tag = 'scratch operand']
  %s0 = inlined_call_operand.vmem [shape: f32[16,32], index: 0, kind: input, shape index: {}]
  %s1 = inlined_call_operand.vmem [shape: bf16[16,128], index: 1, kind: input, shape index: {}]
  %s2 = inlined_call_operand.vmem [shape: f32[2,8], index: 2, kind: input, shape index: {}]
  %s3 = inlined_call_operand.vmem [shape: bf16[32,96], index: 3, kind: input, shape index: {}]
  %s4 = inlined_call_operand.vmem [shape: f32[1,96], index: 4, kind: input, shape index: {}]
  %s5 = inlined_call_operand.vmem [shape: bf16[32,32], index: 5, kind: input, shape index: {}]
  %s6 = inlined_call_operand.vmem [shape: f32[1,32], index: 6, kind: input, shape index: {}]
  %s7 = inlined_call_operand.vmem [shape: f32[1,32], index: 7, kind: input, shape index: {}]
  %s8 = inlined_call_operand.vmem [shape: f32[1,32], index: 8, kind: input, shape index: {}]
  %s9 = inlined_call_operand.vmem [shape: bf16[32,32], index: 9, kind: input, shape index: {}]
  %s10 = inlined_call_operand.vmem [shape: f32[1,32], index: 10, kind: input, shape index: {}]
  %s11 = inlined_call_operand.vmem [shape: bf16[128,64], index: 11, kind: input, shape index: {}]
  %s12 = inlined_call_operand.vmem [shape: f32[1,64], index: 12, kind: input, shape index: {}]
  %s13 = inlined_call_operand.vmem [shape: bf16[32,32], index: 13, kind: input, shape index: {}]
  %s14 = inlined_call_operand.vmem [shape: f32[1,32], index: 14, kind: input, shape index: {}]
  %s15 = inlined_call_operand.vmem [shape: f32[1,32], index: 15, kind: input, shape index: {}]
  %s16 = inlined_call_operand.vmem [shape: f32[1,32], index: 16, kind: input, shape index: {}]
  %s17 = inlined_call_operand.vmem [shape: bf16[32,64], index: 17, kind: input, shape index: {}]
  %s18 = inlined_call_operand.vmem [shape: f32[1,64], index: 18, kind: input, shape index: {}]
  %s19 = inlined_call_operand.vmem [shape: bf16[64,32], index: 19, kind: input, shape index: {}]
  %s20 = inlined_call_operand.vmem [shape: f32[1,32], index: 20, kind: input, shape index: {}]
  %s21 = inlined_call_operand.vmem [shape: f32[1,32], index: 21, kind: input, shape index: {}]
  %s22 = inlined_call_operand.vmem [shape: f32[1,32], index: 22, kind: input, shape index: {}]
  %s23 = inlined_call_operand.vmem [shape: bf16[128,32], index: 23, kind: input, shape index: {}]
  %s24 = inlined_call_operand.vmem [shape: f32[1,128], index: 24, kind: input, shape index: {}]
  %s25 = inlined_call_operand.hbm [shape: f32[16,128], index: 25, kind: output, shape index: {}]
  %s26 = sld [smem:[#allocation0]]
  $region110: #{marian_logits.3} parent=0
    _
  %s28 = ssub.s32 1, %s26
  %s29 = scalar_select 0, %s28, %s26
  $region1: #{marian_logits.3} parent=0
    #allocation3 [shape = 'u8[8192]{0}', space=vmem, size = 0x2000, scoped, tag = 'output window, operand 0, single buffered']
    #allocation4 [shape = 's32[1]{0}', space=sflag, size = 0x4, scoped, tag = 'scoped memory for marian_logits.3']
    %30 = vsyncpa [#allocation4], 0
    // Predicated region
    $region2: #{marian_logits.3} parent=1 // pred_check
      _
    $region3: #{marian_logits.3} parent=1 // pred_check_branch
      %32 = sbr.rel (0) target = $region5
    $region4: #{marian_logits.3} parent=1 // pred_region
      _
    $region5: #{marian_logits.3} parent=1 // pred_fallthru
      _
    // Predicated region
    $region6: #{marian_logits.3} parent=1 // pred_check
      _
    $region7: #{marian_logits.3} parent=1 // pred_check_branch
      %34 = sbr.rel (0) target = $region9
    $region8: #{marian_logits.3} parent=1 // pred_region
      _
    $region9: #{marian_logits.3} parent=1 // pred_fallthru
      _
    // Predicated region
    $region10: #{marian_logits.3} parent=1 // pred_check
      _
    $region11: #{marian_logits.3} parent=1 // pred_check_branch
      %36 = sbr.rel (0) target = $region13
    $region12: #{marian_logits.3} parent=1 // pred_region
      _
    $region13: #{marian_logits.3} parent=1 // pred_fallthru
      _
    // Predicated region
    $region14: #{marian_logits.3} parent=1 // pred_check
      _
    $region15: #{marian_logits.3} parent=1 // pred_check_branch
      %38 = sbr.rel (0) target = $region17
    $region16: #{marian_logits.3} parent=1 // pred_region
      _
    $region17: #{marian_logits.3} parent=1 // pred_fallthru
      _
    // Predicated region
    $region18: #{marian_logits.3} parent=1 // pred_check
      _
    $region19: #{marian_logits.3} parent=1 // pred_check_branch
      %40 = sbr.rel (0) target = $region21
    $region20: #{marian_logits.3} parent=1 // pred_region
      _
    $region21: #{marian_logits.3} parent=1 // pred_fallthru
      _
    // Predicated region
    $region22: #{marian_logits.3} parent=1 // pred_check
      _
    $region23: #{marian_logits.3} parent=1 // pred_check_branch
      %42 = sbr.rel (0) target = $region25
    $region24: #{marian_logits.3} parent=1 // pred_region
      _
    $region25: #{marian_logits.3} parent=1 // pred_fallthru
      _
    // Predicated region
    $region26: #{marian_logits.3} parent=1 // pred_check
      _
    $region27: #{marian_logits.3} parent=1 // pred_check_branch
      %44 = sbr.rel (0) target = $region29
    $region28: #{marian_logits.3} parent=1 // pred_region
      _
    $region29: #{marian_logits.3} parent=1 // pred_fallthru
      _
    // Predicated region
    $region30: #{marian_logits.3} parent=1 // pred_check
      _
    $region31: #{marian_logits.3} parent=1 // pred_check_branch
      %46 = sbr.rel (0) target = $region33
    $region32: #{marian_logits.3} parent=1 // pred_region
      _
    $region33: #{marian_logits.3} parent=1 // pred_fallthru
      _
    // Predicated region
    $region34: #{marian_logits.3} parent=1 // pred_check
      _
    $region35: #{marian_logits.3} parent=1 // pred_check_branch
      %48 = sbr.rel (0) target = $region37
    $region36: #{marian_logits.3} parent=1 // pred_region
      _
    $region37: #{marian_logits.3} parent=1 // pred_fallthru
      _
    // Predicated region
    $region38: #{marian_logits.3} parent=1 // pred_check
      _
    $region39: #{marian_logits.3} parent=1 // pred_check_branch
      %50 = sbr.rel (0) target = $region41
    $region40: #{marian_logits.3} parent=1 // pred_region
      _
    $region41: #{marian_logits.3} parent=1 // pred_fallthru
      _
    // Predicated region
    $region42: #{marian_logits.3} parent=1 // pred_check
      _
    $region43: #{marian_logits.3} parent=1 // pred_check_branch
      %52 = sbr.rel (0) target = $region45
    $region44: #{marian_logits.3} parent=1 // pred_region
      _
    $region45: #{marian_logits.3} parent=1 // pred_fallthru
      _
    // Predicated region
    $region46: #{marian_logits.3} parent=1 // pred_check
      _
    $region47: #{marian_logits.3} parent=1 // pred_check_branch
      %54 = sbr.rel (0) target = $region49
    $region48: #{marian_logits.3} parent=1 // pred_region
      _
    $region49: #{marian_logits.3} parent=1 // pred_fallthru
      _
    // Predicated region
    $region50: #{marian_logits.3} parent=1 // pred_check
      _
    $region51: #{marian_logits.3} parent=1 // pred_check_branch
      %56 = sbr.rel (0) target = $region53
    $region52: #{marian_logits.3} parent=1 // pred_region
      _
    $region53: #{marian_logits.3} parent=1 // pred_fallthru
      _
    // Predicated region
    $region54: #{marian_logits.3} parent=1 // pred_check
      _
    $region55: #{marian_logits.3} parent=1 // pred_check_branch
      %58 = sbr.rel (0) target = $region57
    $region56: #{marian_logits.3} parent=1 // pred_region
      _
    $region57: #{marian_logits.3} parent=1 // pred_fallthru
      _
    // Predicated region
    $region58: #{marian_logits.3} parent=1 // pred_check
      _
    $region59: #{marian_logits.3} parent=1 // pred_check_branch
      %60 = sbr.rel (0) target = $region61
    $region60: #{marian_logits.3} parent=1 // pred_region
      _
    $region61: #{marian_logits.3} parent=1 // pred_fallthru
      _
    // Predicated region
    $region62: #{marian_logits.3} parent=1 // pred_check
      _
    $region63: #{marian_logits.3} parent=1 // pred_check_branch
      %62 = sbr.rel (0) target = $region65
    $region64: #{marian_logits.3} parent=1 // pred_region
      _
    $region65: #{marian_logits.3} parent=1 // pred_fallthru
      _
    // Predicated region
    $region66: #{marian_logits.3} parent=1 // pred_check
      _
    $region67: #{marian_logits.3} parent=1 // pred_check_branch
      %64 = sbr.rel (0) target = $region69
    $region68: #{marian_logits.3} parent=1 // pred_region
      _
    $region69: #{marian_logits.3} parent=1 // pred_fallthru
      _
    // Predicated region
    $region70: #{marian_logits.3} parent=1 // pred_check
      _
    $region71: #{marian_logits.3} parent=1 // pred_check_branch
      %66 = sbr.rel (0) target = $region73
    $region72: #{marian_logits.3} parent=1 // pred_region
      _
    $region73: #{marian_logits.3} parent=1 // pred_fallthru
      _
    // Predicated region
    $region74: #{marian_logits.3} parent=1 // pred_check
      _
    $region75: #{marian_logits.3} parent=1 // pred_check_branch
      %68 = sbr.rel (0) target = $region77
    $region76: #{marian_logits.3} parent=1 // pred_region
      _
    $region77: #{marian_logits.3} parent=1 // pred_fallthru
      _
    // Predicated region
    $region78: #{marian_logits.3} parent=1 // pred_check
      _
    $region79: #{marian_logits.3} parent=1 // pred_check_branch
      %70 = sbr.rel (0) target = $region81
    $region80: #{marian_logits.3} parent=1 // pred_region
      _
    $region81: #{marian_logits.3} parent=1 // pred_fallthru
      _
    // Predicated region
    $region82: #{marian_logits.3} parent=1 // pred_check
      _
    $region83: #{marian_logits.3} parent=1 // pred_check_branch
      %72 = sbr.rel (0) target = $region85
    $region84: #{marian_logits.3} parent=1 // pred_region
      _
    $region85: #{marian_logits.3} parent=1 // pred_fallthru
      _
    // Predicated region
    $region86: #{marian_logits.3} parent=1 // pred_check
      _
    $region87: #{marian_logits.3} parent=1 // pred_check_branch
      %74 = sbr.rel (0) target = $region89
    $region88: #{marian_logits.3} parent=1 // pred_region
      _
    $region89: #{marian_logits.3} parent=1 // pred_fallthru
      _
    // Predicated region
    $region90: #{marian_logits.3} parent=1 // pred_check
      _
    $region91: #{marian_logits.3} parent=1 // pred_check_branch
      %76 = sbr.rel (0) target = $region93
    $region92: #{marian_logits.3} parent=1 // pred_region
      _
    $region93: #{marian_logits.3} parent=1 // pred_fallthru
      _
    // Predicated region
    $region94: #{marian_logits.3} parent=1 // pred_check
      _
    $region95: #{marian_logits.3} parent=1 // pred_check_branch
      %78 = sbr.rel (0) target = $region97
    $region96: #{marian_logits.3} parent=1 // pred_region
      _
    $region97: #{marian_logits.3} parent=1 // pred_fallthru
      _
    // Predicated region
    $region98: #{marian_logits.3} parent=1 // pred_check
      _
    $region99: #{marian_logits.3} parent=1 // pred_check_branch
      %80 = sbr.rel (0) target = $region101
    $region100: #{marian_logits.3} parent=1 // pred_region
      _
    $region101: #{marian_logits.3} parent=1 // pred_fallthru
      _
    %v82 = vld [vmem:[%s0] sm:$0xff]
    %v83 = vld [vmem:[%s0 + $0x8] sm:$0xff]
    %v84 = vld [vmem:[%s1] sm:$0xf]
    %v85 = vld [vmem:[%s1 + $0x4] sm:$0xf]
    %v86 = vlaneseq
    %v87 = vshrl.u32 %v86, 7
    %v88 = vlaneseq
    %v89 = vand.u32 %v88, 127
    %vm90 = vcmp.gt.s32.totalorder %v89, %v87
    %v91 = vsel %vm90, -1e+09, 0.0
    %v92 = vld [vmem:[%s2] sm:$0x3]
    %v93 = vsub.f32 1.0, %v92
    %v94 = vmul.f32 %v93, -1e+09
    %v97 = vunpack.c.l.s4 1966171168
    %v98 = vunpack.c.0.s8 %v97
    %v99 = vlaneseq
    %v100 = vshrl.u32 %v99, 7
    %v101 = vsub.s32 %v98, %v100
    %v102 = vrot.slane %v94, %v101
    %v103 = vcombine.high %v102, %v102
    %v105 = vunpack.c.l.s4 1966171168
    %v106 = vunpack.c.0.s8 %v105
    %v107 = vlaneseq
    %v108 = vshrl.u32 %v107, 7
    %v109 = vsub.s32 %v106, %v108
    %v110 = vrot.slane %v102, %v109
    %v112 = vunpack.c.l.s4 1966171168
    %v113 = vunpack.c.0.s8 %v112
    %v114 = vlaneseq
    %v115 = vshrl.u32 %v114, 7
    %v116 = vsub.s32 %v113, %v115
    %v117 = vrot.slane %v103, %v116
    %v118 = vlaneseq
    %v119 = vshrl.u32 %v118, 7
    %v120 = vsub.s32 0, %v119
    %v121 = vrot.slane %v110, %v120
    %v122 = vlaneseq
    %v123 = vshrl.u32 %v122, 7
    %v124 = vsub.s32 0, %v123
    %v125 = vrot.slane %v117, %v124
    %v128 = vld [vmem:[%s3] sm:$0xf]
    %v129 = vld [vmem:[%s3 + $0x4] sm:$0xf]
    %v130 = vld [vmem:[%s3 + $0x8] sm:$0xf]
    %v131 = vld [vmem:[%s3 + $0xc] sm:$0xf]
    %v132 = vpack.c.bf16 %v83, %v82
    %v133 = vld [vmem:[%s4] sm:$0x1]
    %v135 = vlaneseq
    %v136 = vshrl.u32 %v135, 7
    %v137 = vsub.s32 0, %v136
    %v138 = vrot.slane %v133, %v137
    %v144 = vunpack.c.l.b16 %v128
    %v145 = vunpack.c.l.b16 %v129
    %v146 = vunpack.c.l.b16 %v130
    %v147 = vunpack.c.l.b16 %v131
    %v148 = vpack.c.b16 %v145, %v144
    %v149 = vpack.c.b16 %v147, %v146
    %vm152 = vcmask 261120
    %v154 = vsel %vm152, %v132, 0
    %156 = vmatprep.subr.bf16.mxu0 0
    %157 = vmatpush1.bf16.msra.mxu0 %v148
    %158 = vmatprep.subr.bf16.mxu0 0
    %159 = vmatpush1.bf16.msra.mxu0 %v149
    %160 = vmatprep.subr.bf16.mxu0 0
    %161 = vmatpush1.bf16.msra.mxu0 0
    %162 = vmatprep.subr.bf16.mxu0 0
    %163 = vmatpush1.bf16.msra.mxu0 0
    %164 = vmatprep.subr.bf16.mxu0 0
    %165 = vmatpush1.bf16.msra.mxu0 0
    %166 = vmatprep.subr.bf16.mxu0 0
    %167 = vmatpush1.bf16.msra.mxu0 0
    %168 = vmatprep.subr.bf16.mxu0 0
    %169 = vmatpush1.bf16.msra.mxu0 0
    %170 = vmatprep.subr.bf16.mxu0 0
    %171 = vmatpush1.bf16.msra.mxu0 0
    %172 = vmatprep.subr.bf16.mxu0 0
    %173 = vmatpush1.bf16.msra.mxu0 0
    %174 = vmatprep.subr.bf16.mxu0 0
    %175 = vmatpush1.bf16.msra.mxu0 0
    %176 = vmatprep.subr.bf16.mxu0 0
    %177 = vmatpush1.bf16.msra.mxu0 0
    %178 = vmatprep.subr.bf16.mxu0 0
    %179 = vmatpush1.bf16.msra.mxu0 0
    %180 = vmatprep.subr.bf16.mxu0 0
    %181 = vmatpush1.bf16.msra.mxu0 0
    %182 = vmatprep.subr.bf16.mxu0 0
    %183 = vmatpush1.bf16.msra.mxu0 0
    %184 = vmatprep.subr.bf16.mxu0 0
    %185 = vmatpush1.bf16.msra.mxu0 0
    %186 = vmatprep.subr.bf16.mxu0 0
    %187 = vmatpush1.bf16.msra.mxu0 0
    %188 = vmatprep.mubr.bf16.mxu0 0
    %189 = vmatmul.mubr.bf16.gmra.mrb[0].mxu0 %v154
    %v190 = vpop.f32.mrb[0].mxu0
    %v191 = vadd.f32 %v138, %v190
    %v192 = vpop.f32.mrb[0].mxu0
    %v193 = vpop.f32.mrb[0].mxu0
    %v194 = vadd.f32 %v138, %v193
    %v195 = vpop.f32.mrb[0].mxu0
    %196 = vdwg.mxu0
    %v197 = vld [vmem:[%s5] sm:$0xf]
    %v198 = vld [vmem:[%s5 + $0x4] sm:$0xf]
    %v199 = vld [vmem:[%s5 + $0x8] sm:$0xf]
    %v200 = vld [vmem:[%s5 + $0xc] sm:$0xf]
    %v201 = vld [vmem:[%s6] sm:$0x1]
    %v202 = vpack.c.bf16 %v191, %v191
    %v203 = vpack.c.bf16 %v194, %v194
    %205 = vrot.lane.b32.xlu0 %v202, 96
    %v206 = vpop.permute.xlu0 %205
    %vm207 = vcmask 64512
    %v209 = vsel %vm207, %v202, 0
    %v212 = vsel %vm207, %v206, 0
    %214 = vmatprep.subr.bf16.mxu0 0
    %215 = vmatpush1.bf16.xpose.msra.mxu0 %v212
    %216 = vmatprep.subr.bf16.mxu0 0
    %217 = vmatpush1.bf16.xpose.msra.mxu0 0
    %218 = vmatprep.subr.bf16.mxu0 0
    %219 = vmatpush1.bf16.xpose.msra.mxu0 0
    %220 = vmatprep.subr.bf16.mxu0 0
    %221 = vmatpush1.bf16.xpose.msra.mxu0 0
    %222 = vmatprep.subr.bf16.mxu0 0
    %223 = vmatpush1.bf16.xpose.msra.mxu0 0
    %224 = vmatprep.subr.bf16.mxu0 0
    %225 = vmatpush1.bf16.xpose.msra.mxu0 0
    %226 = vmatprep.subr.bf16.mxu0 0
    %227 = vmatpush1.bf16.xpose.msra.mxu0 0
    %228 = vmatprep.subr.bf16.mxu0 0
    %229 = vmatpush1.bf16.xpose.msra.mxu0 0
    %230 = vmatprep.subr.bf16.mxu0 0
    %231 = vmatpush1.bf16.xpose.msra.mxu0 0
    %232 = vmatprep.subr.bf16.mxu0 0
    %233 = vmatpush1.bf16.xpose.msra.mxu0 0
    %234 = vmatprep.subr.bf16.mxu0 0
    %235 = vmatpush1.bf16.xpose.msra.mxu0 0
    %236 = vmatprep.subr.bf16.mxu0 0
    %237 = vmatpush1.bf16.xpose.msra.mxu0 0
    %238 = vmatprep.subr.bf16.mxu0 0
    %239 = vmatpush1.bf16.xpose.msra.mxu0 0
    %240 = vmatprep.subr.bf16.mxu0 0
    %241 = vmatpush1.bf16.xpose.msra.mxu0 0
    %242 = vmatprep.subr.bf16.mxu0 0
    %243 = vmatpush1.bf16.xpose.msra.mxu0 0
    %244 = vmatprep.subr.bf16.mxu0 0
    %245 = vmatpush1.bf16.xpose.msra.mxu0 0
    %246 = vmatprep.mubr.bf16.mxu0 0
    %247 = vmatmul.mubr.bf16.gmra.mrb[0].mxu0 %v209
    %v248 = vpop.f32.mrb[0].mxu0
    %v249 = vadd.f32 0.0, %v248
    %v250 = vpop.f32.mrb[0].mxu0
    %v251 = vpop.f32.mrb[0].mxu0
    %v252 = vpop.f32.mrb[0].mxu0
    %253 = vdwg.mxu0
    %255 = vrot.lane.b32.xlu0 %v203, 96
    %v256 = vpop.permute.xlu0 %255
    %v258 = vsel %vm207, %v203, 0
    %v261 = vsel %vm207, %v256, 0
    %263 = vmatprep.subr.bf16.mxu0 0
    %264 = vmatpush1.bf16.xpose.msra.mxu0 %v261
    %265 = vmatprep.subr.bf16.mxu0 0
    %266 = vmatpush1.bf16.xpose.msra.mxu0 0
    %267 = vmatprep.subr.bf16.mxu0 0
    %268 = vmatpush1.bf16.xpose.msra.mxu0 0
    %269 = vmatprep.subr.bf16.mxu0 0
    %270 = vmatpush1.bf16.xpose.msra.mxu0 0
    %271 = vmatprep.subr.bf16.mxu0 0
    %272 = vmatpush1.bf16.xpose.msra.mxu0 0
    %273 = vmatprep.subr.bf16.mxu0 0
    %274 = vmatpush1.bf16.xpose.msra.mxu0 0
    %275 = vmatprep.subr.bf16.mxu0 0
    %276 = vmatpush1.bf16.xpose.msra.mxu0 0
    %277 = vmatprep.subr.bf16.mxu0 0
    %278 = vmatpush1.bf16.xpose.msra.mxu0 0
    %279 = vmatprep.subr.bf16.mxu0 0
    %280 = vmatpush1.bf16.xpose.msra.mxu0 0
    %281 = vmatprep.subr.bf16.mxu0 0
    %282 = vmatpush1.bf16.xpose.msra.mxu0 0
    %283 = vmatprep.subr.bf16.mxu0 0
    %284 = vmatpush1.bf16.xpose.msra.mxu0 0
    %285 = vmatprep.subr.bf16.mxu0 0
    %286 = vmatpush1.bf16.xpose.msra.mxu0 0
    %287 = vmatprep.subr.bf16.mxu0 0
    %288 = vmatpush1.bf16.xpose.msra.mxu0 0
    %289 = vmatprep.subr.bf16.mxu0 0
    %290 = vmatpush1.bf16.xpose.msra.mxu0 0
    %291 = vmatprep.subr.bf16.mxu0 0
    %292 = vmatpush1.bf16.xpose.msra.mxu0 0
    %293 = vmatprep.subr.bf16.mxu0 0
    %294 = vmatpush1.bf16.xpose.msra.mxu0 0
    %295 = vmatprep.mubr.bf16.mxu0 0
    %296 = vmatmul.mubr.bf16.gmra.mrb[0].mxu0 %v258
    %v297 = vpop.f32.mrb[0].mxu0
    %v298 = vadd.f32 0.0, %v297
    %v299 = vpop.f32.mrb[0].mxu0
    %v300 = vpop.f32.mrb[0].mxu0
    %v301 = vpop.f32.mrb[0].mxu0
    %302 = vdwg.mxu0
    %v303 = vmul.f32 %v249, 0.35355338
    %v304 = vmul.f32 %v298, 0.35355338
    %v305 = vadd.f32 %v303, %v91
    %v306 = vadd.f32 %v304, %v91
    %v307 = vsel %vm207, %v305, -inf
    %308 = vmax.xlane.f32.xlu0 %v307
    %v309 = vpop.xlane.xlu0 %308
    %v310 = vsel %vm207, %v306, -inf
    %311 = vmax.xlane.f32.xlu0 %v310
    %v312 = vpop.xlane.xlu0 %311
    %v313 = vsub.f32 %v305, %v309
    %v314 = vsub.f32 %v306, %v312
    %v315 = vmul.f32 %v313, 1.442695
    %v316 = vpow.pop %v315
    %v317 = vmul.f32 %v314, 1.442695
    %v318 = vpow.pop %v317
    %v319 = vsel %vm207, %v316, 0.0
    %320 = vadd.xlane.f32.xlu0 %v319
    %v321 = vpop.xlane.xlu0 %320
    %v322 = vsel %vm207, %v318, 0.0
    %323 = vadd.xlane.f32.xlu0 %v322
    %v324 = vpop.xlane.xlu0 %323
    %v325 = vrcp.pop %v321
    %v326 = vrcp.pop %v324
    %v327 = vmul.f32 %v316, %v325
    %v328 = vmul.f32 %v318, %v326
    %v329 = vpack.c.bf16 %v327, %v327
    %v330 = vpack.c.bf16 %v328, %v328
    %331 = vrot.lane.b32.xlu0 %v202, 64
    %v332 = vpop.permute.xlu0 %331
    %v334 = vsel %vm207, %v329, 0
    %vm336 = vcmask 1043456
    %v338 = vsel %vm336, %v332, 0
    %340 = vmatprep.subr.bf16.mxu0 0
    %341 = vmatpush1.bf16.msra.mxu0 %v338
    %342 = vmatprep.subr.bf16.mxu0 0
    %343 = vmatpush1.bf16.msra.mxu0 0
    %344 = vmatprep.subr.bf16.mxu0 0
    %345 = vmatpush1.bf16.msra.mxu0 0
    %346 = vmatprep.subr.bf16.mxu0 0
    %347 = vmatpush1.bf16.msra.mxu0 0
    %348 = vmatprep.subr.bf16.mxu0 0
    %349 = vmatpush1.bf16.msra.mxu0 0
    %350 = vmatprep.subr.bf16.mxu0 0
    %351 = vmatpush1.bf16.msra.mxu0 0
    %352 = vmatprep.subr.bf16.mxu0 0
    %353 = vmatpush1.bf16.msra.mxu0 0
    %354 = vmatprep.subr.bf16.mxu0 0
    %355 = vmatpush1.bf16.msra.mxu0 0
    %356 = vmatprep.subr.bf16.mxu0 0
    %357 = vmatpush1.bf16.msra.mxu0 0
    %358 = vmatprep.subr.bf16.mxu0 0
    %359 = vmatpush1.bf16.msra.mxu0 0
    %360 = vmatprep.subr.bf16.mxu0 0
    %361 = vmatpush1.bf16.msra.mxu0 0
    %362 = vmatprep.subr.bf16.mxu0 0
    %363 = vmatpush1.bf16.msra.mxu0 0
    %364 = vmatprep.subr.bf16.mxu0 0
    %365 = vmatpush1.bf16.msra.mxu0 0
    %366 = vmatprep.subr.bf16.mxu0 0
    %367 = vmatpush1.bf16.msra.mxu0 0
    %368 = vmatprep.subr.bf16.mxu0 0
    %369 = vmatpush1.bf16.msra.mxu0 0
    %370 = vmatprep.subr.bf16.mxu0 0
    %371 = vmatpush1.bf16.msra.mxu0 0
    %372 = vmatprep.mubr.bf16.mxu0 0
    %373 = vmatmul.mubr.bf16.gmra.mrb[0].mxu0 %v334
    %v374 = vpop.f32.mrb[0].mxu0
    %v375 = vadd.f32 0.0, %v374
    %v376 = vpop.f32.mrb[0].mxu0
    %v377 = vpop.f32.mrb[0].mxu0
    %v378 = vpop.f32.mrb[0].mxu0
    %379 = vdwg.mxu0
    %380 = vrot.lane.b32.xlu0 %v203, 64
    %v381 = vpop.permute.xlu0 %380
    %v383 = vsel %vm207, %v330, 0
    %v386 = vsel %vm336, %v381, 0
    %388 = vmatprep.subr.bf16.mxu0 0
    %389 = vmatpush1.bf16.msra.mxu0 %v386
    %390 = vmatprep.subr.bf16.mxu0 0
    %391 = vmatpush1.bf16.msra.mxu0 0
    %392 = vmatprep.subr.bf16.mxu0 0
    %393 = vmatpush1.bf16.msra.mxu0 0
    %394 = vmatprep.subr.bf16.mxu0 0
    %395 = vmatpush1.bf16.msra.mxu0 0
    %396 = vmatprep.subr.bf16.mxu0 0
    %397 = vmatpush1.bf16.msra.mxu0 0
    %398 = vmatprep.subr.bf16.mxu0 0
    %399 = vmatpush1.bf16.msra.mxu0 0
    %400 = vmatprep.subr.bf16.mxu0 0
    %401 = vmatpush1.bf16.msra.mxu0 0
    %402 = vmatprep.subr.bf16.mxu0 0
    %403 = vmatpush1.bf16.msra.mxu0 0
    %404 = vmatprep.subr.bf16.mxu0 0
    %405 = vmatpush1.bf16.msra.mxu0 0
    %406 = vmatprep.subr.bf16.mxu0 0
    %407 = vmatpush1.bf16.msra.mxu0 0
    %408 = vmatprep.subr.bf16.mxu0 0
    %409 = vmatpush1.bf16.msra.mxu0 0
    %410 = vmatprep.subr.bf16.mxu0 0
    %411 = vmatpush1.bf16.msra.mxu0 0
    %412 = vmatprep.subr.bf16.mxu0 0
    %413 = vmatpush1.bf16.msra.mxu0 0
    %414 = vmatprep.subr.bf16.mxu0 0
    %415 = vmatpush1.bf16.msra.mxu0 0
    %416 = vmatprep.subr.bf16.mxu0 0
    %417 = vmatpush1.bf16.msra.mxu0 0
    %418 = vmatprep.subr.bf16.mxu0 0
    %419 = vmatpush1.bf16.msra.mxu0 0
    %420 = vmatprep.mubr.bf16.mxu0 0
    %421 = vmatmul.mubr.bf16.gmra.mrb[0].mxu0 %v383
    %v422 = vpop.f32.mrb[0].mxu0
    %v423 = vadd.f32 0.0, %v422
    %v424 = vpop.f32.mrb[0].mxu0
    %v425 = vpop.f32.mrb[0].mxu0
    %v426 = vpop.f32.mrb[0].mxu0
    %427 = vdwg.mxu0
    %428 = vst.msk [vmem:[#allocation2] sm:$0xff] %vm207, %v375
    %429 = vst.msk [vmem:[#allocation2 + $0x8] sm:$0xff] %vm207, %v423
    %430 = vrot.lane.b32.xlu0 %v202, 120
    %v431 = vpop.permute.xlu0 %430
    %432 = vrot.lane.b32.xlu0 %v202, 88
    %v433 = vpop.permute.xlu0 %432
    %v435 = vsel %vm207, %v431, 0
    %v438 = vsel %vm207, %v433, 0
    %440 = vmatprep.subr.bf16.mxu0 0
    %441 = vmatpush1.bf16.xpose.msra.mxu0 %v438
    %442 = vmatprep.subr.bf16.mxu0 0
    %443 = vmatpush1.bf16.xpose.msra.mxu0 0
    %444 = vmatprep.subr.bf16.mxu0 0
    %445 = vmatpush1.bf16.xpose.msra.mxu0 0
    %446 = vmatprep.subr.bf16.mxu0 0
    %447 = vmatpush1.bf16.xpose.msra.mxu0 0
    %448 = vmatprep.subr.bf16.mxu0 0
    %449 = vmatpush1.bf16.xpose.msra.mxu0 0
    %450 = vmatprep.subr.bf16.mxu0 0
    %451 = vmatpush1.bf16.xpose.msra.mxu0 0
    %452 = vmatprep.subr.bf16.mxu0 0
    %453 = vmatpush1.bf16.xpose.msra.mxu0 0
    %454 = vmatprep.subr.bf16.mxu0 0
    %455 = vmatpush1.bf16.xpose.msra.mxu0 0
    %456 = vmatprep.subr.bf16.mxu0 0
    %457 = vmatpush1.bf16.xpose.msra.mxu0 0
    %458 = vmatprep.subr.bf16.mxu0 0
    %459 = vmatpush1.bf16.xpose.msra.mxu0 0
    %460 = vmatprep.subr.bf16.mxu0 0
    %461 = vmatpush1.bf16.xpose.msra.mxu0 0
    %462 = vmatprep.subr.bf16.mxu0 0
    %463 = vmatpush1.bf16.xpose.msra.mxu0 0
    %464 = vmatprep.subr.bf16.mxu0 0
    %465 = vmatpush1.bf16.xpose.msra.mxu0 0
    %466 = vmatprep.subr.bf16.mxu0 0
    %467 = vmatpush1.bf16.xpose.msra.mxu0 0
    %468 = vmatprep.subr.bf16.mxu0 0
    %469 = vmatpush1.bf16.xpose.msra.mxu0 0
    %470 = vmatprep.subr.bf16.mxu0 0
    %471 = vmatpush1.bf16.xpose.msra.mxu0 0
    %472 = vmatprep.mubr.bf16.mxu0 0
    %473 = vmatmul.mubr.bf16.gmra.mrb[0].mxu0 %v435
    %v474 = vpop.f32.mrb[0].mxu0
    %v475 = vadd.f32 0.0, %v474
    %v476 = vpop.f32.mrb[0].mxu0
    %v477 = vpop.f32.mrb[0].mxu0
    %v478 = vpop.f32.mrb[0].mxu0
    %479 = vdwg.mxu0
    %480 = vrot.lane.b32.xlu0 %v203, 120
    %v481 = vpop.permute.xlu0 %480
    %482 = vrot.lane.b32.xlu0 %v203, 88
    %v483 = vpop.permute.xlu0 %482
    %v485 = vsel %vm207, %v481, 0
    %v488 = vsel %vm207, %v483, 0
    %490 = vmatprep.subr.bf16.mxu0 0
    %491 = vmatpush1.bf16.xpose.msra.mxu0 %v488
    %492 = vmatprep.subr.bf16.mxu0 0
    %493 = vmatpush1.bf16.xpose.msra.mxu0 0
    %494 = vmatprep.subr.bf16.mxu0 0
    %495 = vmatpush1.bf16.xpose.msra.mxu0 0
    %496 = vmatprep.subr.bf16.mxu0 0
    %497 = vmatpush1.bf16.xpose.msra.mxu0 0
    %498 = vmatprep.subr.bf16.mxu0 0
    %499 = vmatpush1.bf16.xpose.msra.mxu0 0
    %500 = vmatprep.subr.bf16.mxu0 0
    %501 = vmatpush1.bf16.xpose.msra.mxu0 0
    %502 = vmatprep.subr.bf16.mxu0 0
    %503 = vmatpush1.bf16.xpose.msra.mxu0 0
    %504 = vmatprep.subr.bf16.mxu0 0
    %505 = vmatpush1.bf16.xpose.msra.mxu0 0
    %506 = vmatprep.subr.bf16.mxu0 0
    %507 = vmatpush1.bf16.xpose.msra.mxu0 0
    %508 = vmatprep.subr.bf16.mxu0 0
    %509 = vmatpush1.bf16.xpose.msra.mxu0 0
    %510 = vmatprep.subr.bf16.mxu0 0
    %511 = vmatpush1.bf16.xpose.msra.mxu0 0
    %512 = vmatprep.subr.bf16.mxu0 0
    %513 = vmatpush1.bf16.xpose.msra.mxu0 0
    %514 = vmatprep.subr.bf16.mxu0 0
    %515 = vmatpush1.bf16.xpose.msra.mxu0 0
    %516 = vmatprep.subr.bf16.mxu0 0
    %517 = vmatpush1.bf16.xpose.msra.mxu0 0
    %518 = vmatprep.subr.bf16.mxu0 0
    %519 = vmatpush1.bf16.xpose.msra.mxu0 0
    %520 = vmatprep.subr.bf16.mxu0 0
    %521 = vmatpush1.bf16.xpose.msra.mxu0 0
    %522 = vmatprep.mubr.bf16.mxu0 0
    %523 = vmatmul.mubr.bf16.gmra.mrb[0].mxu0 %v485
    %v524 = vpop.f32.mrb[0].mxu0
    %v525 = vadd.f32 0.0, %v524
    %v526 = vpop.f32.mrb[0].mxu0
    %v527 = vpop.f32.mrb[0].mxu0
    %v528 = vpop.f32.mrb[0].mxu0
    %529 = vdwg.mxu0
    %v530 = vmul.f32 %v475, 0.35355338
    %v531 = vmul.f32 %v525, 0.35355338
    %v532 = vadd.f32 %v530, %v91
    %v533 = vadd.f32 %v531, %v91
    %v534 = vsel %vm207, %v532, -inf
    %535 = vmax.xlane.f32.xlu0 %v534
    %v536 = vpop.xlane.xlu0 %535
    %v537 = vsel %vm207, %v533, -inf
    %538 = vmax.xlane.f32.xlu0 %v537
    %v539 = vpop.xlane.xlu0 %538
    %v540 = vsub.f32 %v532, %v536
    %v541 = vsub.f32 %v533, %v539
    %v542 = vmul.f32 %v540, 1.442695
    %v543 = vpow.pop %v542
    %v544 = vmul.f32 %v541, 1.442695
    %v545 = vpow.pop %v544
    %v546 = vsel %vm207, %v543, 0.0
    %547 = vadd.xlane.f32.xlu0 %v546
    %v548 = vpop.xlane.xlu0 %547
    %v549 = vsel %vm207, %v545, 0.0
    %550 = vadd.xlane.f32.xlu0 %v549
    %v551 = vpop.xlane.xlu0 %550
    %v552 = vrcp.pop %v548
    %v553 = vrcp.pop %v551
    %v554 = vmul.f32 %v543, %v552
    %v555 = vmul.f32 %v545, %v553
    %v556 = vpack.c.bf16 %v554, %v554
    %v557 = vpack.c.bf16 %v555, %v555
    %558 = vrot.lane.b32.xlu0 %v202, 56
    %v559 = vpop.permute.xlu0 %558
    %v561 = vsel %vm207, %v556, 0
    %v564 = vsel %vm336, %v559, 0
    %566 = vmatprep.subr.bf16.mxu0 0
    %567 = vmatpush1.bf16.msra.mxu0 %v564
    %568 = vmatprep.subr.bf16.mxu0 0
    %569 = vmatpush1.bf16.msra.mxu0 0
    %570 = vmatprep.subr.bf16.mxu0 0
    %571 = vmatpush1.bf16.msra.mxu0 0
    %572 = vmatprep.subr.bf16.mxu0 0
    %573 = vmatpush1.bf16.msra.mxu0 0
    %574 = vmatprep.subr.bf16.mxu0 0
    %575 = vmatpush1.bf16.msra.mxu0 0
    %576 = vmatprep.subr.bf16.mxu0 0
    %577 = vmatpush1.bf16.msra.mxu0 0
    %578 = vmatprep.subr.bf16.mxu0 0
    %579 = vmatpush1.bf16.msra.mxu0 0
    %580 = vmatprep.subr.bf16.mxu0 0
    %581 = vmatpush1.bf16.msra.mxu0 0
    %582 = vmatprep.subr.bf16.mxu0 0
    %583 = vmatpush1.bf16.msra.mxu0 0
    %584 = vmatprep.subr.bf16.mxu0 0
    %585 = vmatpush1.bf16.msra.mxu0 0
    %586 = vmatprep.subr.bf16.mxu0 0
    %587 = vmatpush1.bf16.msra.mxu0 0
    %588 = vmatprep.subr.bf16.mxu0 0
    %589 = vmatpush1.bf16.msra.mxu0 0
    %590 = vmatprep.subr.bf16.mxu0 0
    %591 = vmatpush1.bf16.msra.mxu0 0
    %592 = vmatprep.subr.bf16.mxu0 0
    %593 = vmatpush1.bf16.msra.mxu0 0
    %594 = vmatprep.subr.bf16.mxu0 0
    %595 = vmatpush1.bf16.msra.mxu0 0
    %596 = vmatprep.subr.bf16.mxu0 0
    %597 = vmatpush1.bf16.msra.mxu0 0
    %598 = vmatprep.mubr.bf16.mxu0 0
    %599 = vmatmul.mubr.bf16.gmra.mrb[0].mxu0 %v561
    %v600 = vpop.f32.mrb[0].mxu0
    %v601 = vadd.f32 0.0, %v600
    %v602 = vpop.f32.mrb[0].mxu0
    %v603 = vpop.f32.mrb[0].mxu0
    %v604 = vpop.f32.mrb[0].mxu0
    %605 = vdwg.mxu0
    %606 = vrot.lane.b32.xlu0 %v203, 56
    %v607 = vpop.permute.xlu0 %606
    %v609 = vsel %vm207, %v557, 0
    %v612 = vsel %vm336, %v607, 0
    %614 = vmatprep.subr.bf16.mxu0 0
    %615 = vmatpush1.bf16.msra.mxu0 %v612
    %616 = vmatprep.subr.bf16.mxu0 0
    %617 = vmatpush1.bf16.msra.mxu0 0
    %618 = vmatprep.subr.bf16.mxu0 0
    %619 = vmatpush1.bf16.msra.mxu0 0
    %620 = vmatprep.subr.bf16.mxu0 0
    %621 = vmatpush1.bf16.msra.mxu0 0
    %622 = vmatprep.subr.bf16.mxu0 0
    %623 = vmatpush1.bf16.msra.mxu0 0
    %624 = vmatprep.subr.bf16.mxu0 0
    %625 = vmatpush1.bf16.msra.mxu0 0
    %626 = vmatprep.subr.bf16.mxu0 0
    %627 = vmatpush1.bf16.msra.mxu0 0
    %628 = vmatprep.subr.bf16.mxu0 0
    %629 = vmatpush1.bf16.msra.mxu0 0
    %630 = vmatprep.subr.bf16.mxu0 0
    %631 = vmatpush1.bf16.msra.mxu0 0
    %632 = vmatprep.subr.bf16.mxu0 0
    %633 = vmatpush1.bf16.msra.mxu0 0
    %634 = vmatprep.subr.bf16.mxu0 0
    %635 = vmatpush1.bf16.msra.mxu0 0
    %636 = vmatprep.subr.bf16.mxu0 0
    %637 = vmatpush1.bf16.msra.mxu0 0
    %638 = vmatprep.subr.bf16.mxu0 0
    %639 = vmatpush1.bf16.msra.mxu0 0
    %640 = vmatprep.subr.bf16.mxu0 0
    %641 = vmatpush1.bf16.msra.mxu0 0
    %642 = vmatprep.subr.bf16.mxu0 0
    %643 = vmatpush1.bf16.msra.mxu0 0
    %644 = vmatprep.subr.bf16.mxu0 0
    %645 = vmatpush1.bf16.msra.mxu0 0
    %646 = vmatprep.mubr.bf16.mxu0 0
    %647 = vmatmul.mubr.bf16.gmra.mrb[0].mxu0 %v609
    %v648 = vpop.f32.mrb[0].mxu0
    %v649 = vadd.f32 0.0, %v648
    %v650 = vpop.f32.mrb[0].mxu0
    %v651 = vpop.f32.mrb[0].mxu0
    %v652 = vpop.f32.mrb[0].mxu0
    %653 = vdwg.mxu0
    %656 = vrot.lane.b32.xlu0 %v601, 8
    %v657 = vpop.permute.xlu0 %656
    %658 = vrot.lane.b32.xlu0 %v649, 8
    %v659 = vpop.permute.xlu0 %658
    %vm662 = vcmask 130112
    %663 = vst.msk [vmem:[#allocation2] sm:$0xff] %vm662, %v657
    %664 = vst.msk [vmem:[#allocation2 + $0x8] sm:$0xff] %vm662, %v659
    %665 = vrot.lane.b32.xlu0 %v202, 112
    %v666 = vpop.permute.xlu0 %665
    %667 = vrot.lane.b32.xlu0 %v202, 80
    %v668 = vpop.permute.xlu0 %667
    %v670 = vsel %vm207, %v666, 0
    %v673 = vsel %vm207, %v668, 0
    %675 = vmatprep.subr.bf16.mxu0 0
    %676 = vmatpush1.bf16.xpose.msra.mxu0 %v673
    %677 = vmatprep.subr.bf16.mxu0 0
    %678 = vmatpush1.bf16.xpose.msra.mxu0 0
    %679 = vmatprep.subr.bf16.mxu0 0
    %680 = vmatpush1.bf16.xpose.msra.mxu0 0
    %681 = vmatprep.subr.bf16.mxu0 0
    %682 = vmatpush1.bf16.xpose.msra.mxu0 0
    %683 = vmatprep.subr.bf16.mxu0 0
    %684 = vmatpush1.bf16.xpose.msra.mxu0 0
    %685 = vmatprep.subr.bf16.mxu0 0
    %686 = vmatpush1.bf16.xpose.msra.mxu0 0
    %687 = vmatprep.subr.bf16.mxu0 0
    %688 = vmatpush1.bf16.xpose.msra.mxu0 0
    %689 = vmatprep.subr.bf16.mxu0 0
    %690 = vmatpush1.bf16.xpose.msra.mxu0 0
    %691 = vmatprep.subr.bf16.mxu0 0
    %692 = vmatpush1.bf16.xpose.msra.mxu0 0
    %693 = vmatprep.subr.bf16.mxu0 0
    %694 = vmatpush1.bf16.xpose.msra.mxu0 0
    %695 = vmatprep.subr.bf16.mxu0 0
    %696 = vmatpush1.bf16.xpose.msra.mxu0 0
    %697 = vmatprep.subr.bf16.mxu0 0
    %698 = vmatpush1.bf16.xpose.msra.mxu0 0
    %699 = vmatprep.subr.bf16.mxu0 0
    %700 = vmatpush1.bf16.xpose.msra.mxu0 0
    %701 = vmatprep.subr.bf16.mxu0 0
    %702 = vmatpush1.bf16.xpose.msra.mxu0 0
    %703 = vmatprep.subr.bf16.mxu0 0
    %704 = vmatpush1.bf16.xpose.msra.mxu0 0
    %705 = vmatprep.subr.bf16.mxu0 0
    %706 = vmatpush1.bf16.xpose.msra.mxu0 0
    %707 = vmatprep.mubr.bf16.mxu0 0
    %708 = vmatmul.mubr.bf16.gmra.mrb[0].mxu0 %v670
    %v709 = vpop.f32.mrb[0].mxu0
    %v710 = vadd.f32 0.0, %v709
    %v711 = vpop.f32.mrb[0].mxu0
    %v712 = vpop.f32.mrb[0].mxu0
    %v713 = vpop.f32.mrb[0].mxu0
    %714 = vdwg.mxu0
    %715 = vrot.lane.b32.xlu0 %v203, 112
    %v716 = vpop.permute.xlu0 %715
    %717 = vrot.lane.b32.xlu0 %v203, 80
    %v718 = vpop.permute.xlu0 %717
    %v720 = vsel %vm207, %v716, 0
    %v723 = vsel %vm207, %v718, 0
    %725 = vmatprep.subr.bf16.mxu0 0
    %726 = vmatpush1.bf16.xpose.msra.mxu0 %v723
    %727 = vmatprep.subr.bf16.mxu0 0
    %728 = vmatpush1.bf16.xpose.msra.mxu0 0
    %729 = vmatprep.subr.bf16.mxu0 0
    %730 = vmatpush1.bf16.xpose.msra.mxu0 0
    %731 = vmatprep.subr.bf16.mxu0 0
    %732 = vmatpush1.bf16.xpose.msra.mxu0 0
    %733 = vmatprep.subr.bf16.mxu0 0
    %734 = vmatpush1.bf16.xpose.msra.mxu0 0
    %735 = vmatprep.subr.bf16.mxu0 0
    %736 = vmatpush1.bf16.xpose.msra.mxu0 0
    %737 = vmatprep.subr.bf16.mxu0 0
    %738 = vmatpush1.bf16.xpose.msra.mxu0 0
    %739 = vmatprep.subr.bf16.mxu0 0
    %740 = vmatpush1.bf16.xpose.msra.mxu0 0
    %741 = vmatprep.subr.bf16.mxu0 0
    %742 = vmatpush1.bf16.xpose.msra.mxu0 0
    %743 = vmatprep.subr.bf16.mxu0 0
    %744 = vmatpush1.bf16.xpose.msra.mxu0 0
    %745 = vmatprep.subr.bf16.mxu0 0
    %746 = vmatpush1.bf16.xpose.msra.mxu0 0
    %747 = vmatprep.subr.bf16.mxu0 0
    %748 = vmatpush1.bf16.xpose.msra.mxu0 0
    %749 = vmatprep.subr.bf16.mxu0 0
    %750 = vmatpush1.bf16.xpose.msra.mxu0 0
    %751 = vmatprep.subr.bf16.mxu0 0
    %752 = vmatpush1.bf16.xpose.msra.mxu0 0
    %753 = vmatprep.subr.bf16.mxu0 0
    %754 = vmatpush1.bf16.xpose.msra.mxu0 0
    %755 = vmatprep.subr.bf16.mxu0 0
    %756 = vmatpush1.bf16.xpose.msra.mxu0 0
    %757 = vmatprep.mubr.bf16.mxu0 0
    %758 = vmatmul.mubr.bf16.gmra.mrb[0].mxu0 %v720
    %v759 = vpop.f32.mrb[0].mxu0
    %v760 = vadd.f32 0.0, %v759
    %v761 = vpop.f32.mrb[0].mxu0
    %v762 = vpop.f32.mrb[0].mxu0
    %v763 = vpop.f32.mrb[0].mxu0
    %764 = vdwg.mxu0
    %v765 = vmul.f32 %v710, 0.35355338
    %v766 = vmul.f32 %v760, 0.35355338
    %v767 = vadd.f32 %v765, %v91
    %v768 = vadd.f32 %v766, %v91
    %v769 = vsel %vm207, %v767, -inf
    %770 = vmax.xlane.f32.xlu0 %v769
    %v771 = vpop.xlane.xlu0 %770
    %v772 = vsel %vm207, %v768, -inf
    %773 = vmax.xlane.f32.xlu0 %v772
    %v774 = vpop.xlane.xlu0 %773
    %v775 = vsub.f32 %v767, %v771
    %v776 = vsub.f32 %v768, %v774
    %v777 = vmul.f32 %v775, 1.442695
    %v778 = vpow.pop %v777
    %v779 = vmul.f32 %v776, 1.442695
    %v780 = vpow.pop %v779
    %v781 = vsel %vm207, %v778, 0.0
    %782 = vadd.xlane.f32.xlu0 %v781
    %v783 = vpop.xlane.xlu0 %782
    %v784 = vsel %vm207, %v780, 0.0
    %785 = vadd.xlane.f32.xlu0 %v784
    %v786 = vpop.xlane.xlu0 %785
    %v787 = vrcp.pop %v783
    %v788 = vrcp.pop %v786
    %v789 = vmul.f32 %v778, %v787
    %v790 = vmul.f32 %v780, %v788
    %v791 = vpack.c.bf16 %v789, %v789
    %v792 = vpack.c.bf16 %v790, %v790
    %793 = vrot.lane.b32.xlu0 %v202, 48
    %v794 = vpop.permute.xlu0 %793
    %v796 = vsel %vm207, %v791, 0
    %v799 = vsel %vm336, %v794, 0
    %801 = vmatprep.subr.bf16.mxu0 0
    %802 = vmatpush1.bf16.msra.mxu0 %v799
    %803 = vmatprep.subr.bf16.mxu0 0
    %804 = vmatpush1.bf16.msra.mxu0 0
    %805 = vmatprep.subr.bf16.mxu0 0
    %806 = vmatpush1.bf16.msra.mxu0 0
    %807 = vmatprep.subr.bf16.mxu0 0
    %808 = vmatpush1.bf16.msra.mxu0 0
    %809 = vmatprep.subr.bf16.mxu0 0
    %810 = vmatpush1.bf16.msra.mxu0 0
    %811 = vmatprep.subr.bf16.mxu0 0
    %812 = vmatpush1.bf16.msra.mxu0 0
    %813 = vmatprep.subr.bf16.mxu0 0
    %814 = vmatpush1.bf16.msra.mxu0 0
    %815 = vmatprep.subr.bf16.mxu0 0
    %816 = vmatpush1.bf16.msra.mxu0 0
    %817 = vmatprep.subr.bf16.mxu0 0
    %818 = vmatpush1.bf16.msra.mxu0 0
    %819 = vmatprep.subr.bf16.mxu0 0
    %820 = vmatpush1.bf16.msra.mxu0 0
    %821 = vmatprep.subr.bf16.mxu0 0
    %822 = vmatpush1.bf16.msra.mxu0 0
    %823 = vmatprep.subr.bf16.mxu0 0
    %824 = vmatpush1.bf16.msra.mxu0 0
    %825 = vmatprep.subr.bf16.mxu0 0
    %826 = vmatpush1.bf16.msra.mxu0 0
    %827 = vmatprep.subr.bf16.mxu0 0
    %828 = vmatpush1.bf16.msra.mxu0 0
    %829 = vmatprep.subr.bf16.mxu0 0
    %830 = vmatpush1.bf16.msra.mxu0 0
    %831 = vmatprep.subr.bf16.mxu0 0
    %832 = vmatpush1.bf16.msra.mxu0 0
    %833 = vmatprep.mubr.bf16.mxu0 0
    %834 = vmatmul.mubr.bf16.gmra.mrb[0].mxu0 %v796
    %v835 = vpop.f32.mrb[0].mxu0
    %v836 = vadd.f32 0.0, %v835
    %v837 = vpop.f32.mrb[0].mxu0
    %v838 = vpop.f32.mrb[0].mxu0
    %v839 = vpop.f32.mrb[0].mxu0
    %840 = vdwg.mxu0
    %841 = vrot.lane.b32.xlu0 %v203, 48
    %v842 = vpop.permute.xlu0 %841
    %v844 = vsel %vm207, %v792, 0
    %v847 = vsel %vm336, %v842, 0
    %849 = vmatprep.subr.bf16.mxu0 0
    %850 = vmatpush1.bf16.msra.mxu0 %v847
    %851 = vmatprep.subr.bf16.mxu0 0
    %852 = vmatpush1.bf16.msra.mxu0 0
    %853 = vmatprep.subr.bf16.mxu0 0
    %854 = vmatpush1.bf16.msra.mxu0 0
    %855 = vmatprep.subr.bf16.mxu0 0
    %856 = vmatpush1.bf16.msra.mxu0 0
    %857 = vmatprep.subr.bf16.mxu0 0
    %858 = vmatpush1.bf16.msra.mxu0 0
    %859 = vmatprep.subr.bf16.mxu0 0
    %860 = vmatpush1.bf16.msra.mxu0 0
    %861 = vmatprep.subr.bf16.mxu0 0
    %862 = vmatpush1.bf16.msra.mxu0 0
    %863 = vmatprep.subr.bf16.mxu0 0
    %864 = vmatpush1.bf16.msra.mxu0 0
    %865 = vmatprep.subr.bf16.mxu0 0
    %866 = vmatpush1.bf16.msra.mxu0 0
    %867 = vmatprep.subr.bf16.mxu0 0
    %868 = vmatpush1.bf16.msra.mxu0 0
    %869 = vmatprep.subr.bf16.mxu0 0
    %870 = vmatpush1.bf16.msra.mxu0 0
    %871 = vmatprep.subr.bf16.mxu0 0
    %872 = vmatpush1.bf16.msra.mxu0 0
    %873 = vmatprep.subr.bf16.mxu0 0
    %874 = vmatpush1.bf16.msra.mxu0 0
    %875 = vmatprep.subr.bf16.mxu0 0
    %876 = vmatpush1.bf16.msra.mxu0 0
    %877 = vmatprep.subr.bf16.mxu0 0
    %878 = vmatpush1.bf16.msra.mxu0 0
    %879 = vmatprep.subr.bf16.mxu0 0
    %880 = vmatpush1.bf16.msra.mxu0 0
    %881 = vmatprep.mubr.bf16.mxu0 0
    %882 = vmatmul.mubr.bf16.gmra.mrb[0].mxu0 %v844
    %v883 = vpop.f32.mrb[0].mxu0
    %v884 = vadd.f32 0.0, %v883
    %v885 = vpop.f32.mrb[0].mxu0
    %v886 = vpop.f32.mrb[0].mxu0
    %v887 = vpop.f32.mrb[0].mxu0
    %888 = vdwg.mxu0
    %891 = vrot.lane.b32.xlu0 %v836, 16
    %v892 = vpop.permute.xlu0 %891
    %893 = vrot.lane.b32.xlu0 %v884, 16
    %v894 = vpop.permute.xlu0 %893
    %vm897 = vcmask 195712
    %898 = vst.msk [vmem:[#allocation2] sm:$0xff] %vm897, %v892
    %899 = vst.msk [vmem:[#allocation2 + $0x8] sm:$0xff] %vm897, %v894
    %900 = vrot.lane.b32.xlu0 %v202, 104
    %v901 = vpop.permute.xlu0 %900
    %902 = vrot.lane.b32.xlu0 %v202, 72
    %v903 = vpop.permute.xlu0 %902
    %v905 = vsel %vm207, %v901, 0
    %v908 = vsel %vm207, %v903, 0
    %910 = vmatprep.subr.bf16.mxu0 0
    %911 = vmatpush1.bf16.xpose.msra.mxu0 %v908
    %912 = vmatprep.subr.bf16.mxu0 0
    %913 = vmatpush1.bf16.xpose.msra.mxu0 0
    %914 = vmatprep.subr.bf16.mxu0 0
    %915 = vmatpush1.bf16.xpose.msra.mxu0 0
    %916 = vmatprep.subr.bf16.mxu0 0
    %917 = vmatpush1.bf16.xpose.msra.mxu0 0
    %918 = vmatprep.subr.bf16.mxu0 0
    %919 = vmatpush1.bf16.xpose.msra.mxu0 0
    %920 = vmatprep.subr.bf16.mxu0 0
    %921 = vmatpush1.bf16.xpose.msra.mxu0 0
    %922 = vmatprep.subr.bf16.mxu0 0
    %923 = vmatpush1.bf16.xpose.msra.mxu0 0
    %924 = vmatprep.subr.bf16.mxu0 0
    %925 = vmatpush1.bf16.xpose.msra.mxu0 0
    %926 = vmatprep.subr.bf16.mxu0 0
    %927 = vmatpush1.bf16.xpose.msra.mxu0 0
    %928 = vmatprep.subr.bf16.mxu0 0
    %929 = vmatpush1.bf16.xpose.msra.mxu0 0
    %930 = vmatprep.subr.bf16.mxu0 0
    %931 = vmatpush1.bf16.xpose.msra.mxu0 0
    %932 = vmatprep.subr.bf16.mxu0 0
    %933 = vmatpush1.bf16.xpose.msra.mxu0 0
    %934 = vmatprep.subr.bf16.mxu0 0
    %935 = vmatpush1.bf16.xpose.msra.mxu0 0
    %936 = vmatprep.subr.bf16.mxu0 0
    %937 = vmatpush1.bf16.xpose.msra.mxu0 0
    %938 = vmatprep.subr.bf16.mxu0 0
    %939 = vmatpush1.bf16.xpose.msra.mxu0 0
    %940 = vmatprep.subr.bf16.mxu0 0
    %941 = vmatpush1.bf16.xpose.msra.mxu0 0
    %942 = vmatprep.mubr.bf16.mxu0 0
    %943 = vmatmul.mubr.bf16.gmra.mrb[0].mxu0 %v905
    %v944 = vpop.f32.mrb[0].mxu0
    %v945 = vadd.f32 0.0, %v944
    %v946 = vpop.f32.mrb[0].mxu0
    %v947 = vpop.f32.mrb[0].mxu0
    %v948 = vpop.f32.mrb[0].mxu0
    %949 = vdwg.mxu0
    %950 = vrot.lane.b32.xlu0 %v203, 104
    %v951 = vpop.permute.xlu0 %950
    %952 = vrot.lane.b32.xlu0 %v203, 72
    %v953 = vpop.permute.xlu0 %952
    %v955 = vsel %vm207, %v951, 0
    %v958 = vsel %vm207, %v953, 0
    %960 = vmatprep.subr.bf16.mxu0 0
    %961 = vmatpush1.bf16.xpose.msra.mxu0 %v958
    %962 = vmatprep.subr.bf16.mxu0 0
    %963 = vmatpush1.bf16.xpose.msra.mxu0 0
    %964 = vmatprep.subr.bf16.mxu0 0
    %965 = vmatpush1.bf16.xpose.msra.mxu0 0
    %966 = vmatprep.subr.bf16.mxu0 0
    %967 = vmatpush1.bf16.xpose.msra.mxu0 0
    %968 = vmatprep.subr.bf16.mxu0 0
    %969 = vmatpush1.bf16.xpose.msra.mxu0 0
    %970 = vmatprep.subr.bf16.mxu0 0
    %971 = vmatpush1.bf16.xpose.msra.mxu0 0
    %972 = vmatprep.subr.bf16.mxu0 0
    %973 = vmatpush1.bf16.xpose.msra.mxu0 0
    %974 = vmatprep.subr.bf16.mxu0 0
    %975 = vmatpush1.bf16.xpose.msra.mxu0 0
    %976 = vmatprep.subr.bf16.mxu0 0
    %977 = vmatpush1.bf16.xpose.msra.mxu0 0
    %978 = vmatprep.subr.bf16.mxu0 0
    %979 = vmatpush1.bf16.xpose.msra.mxu0 0
    %980 = vmatprep.subr.bf16.mxu0 0
    %981 = vmatpush1.bf16.xpose.msra.mxu0 0
    %982 = vmatprep.subr.bf16.mxu0 0
    %983 = vmatpush1.bf16.xpose.msra.mxu0 0
    %984 = vmatprep.subr.bf16.mxu0 0
    %985 = vmatpush1.bf16.xpose.msra.mxu0 0
    %986 = vmatprep.subr.bf16.mxu0 0
    %987 = vmatpush1.bf16.xpose.msra.mxu0 0
    %988 = vmatprep.subr.bf16.mxu0 0
    %989 = vmatpush1.bf16.xpose.msra.mxu0 0
    %990 = vmatprep.subr.bf16.mxu0 0
    %991 = vmatpush1.bf16.xpose.msra.mxu0 0
    %992 = vmatprep.mubr.bf16.mxu0 0
    %993 = vmatmul.mubr.bf16.gmra.mrb[0].mxu0 %v955
    %v994 = vpop.f32.mrb[0].mxu0
    %v995 = vadd.f32 0.0, %v994
    %v996 = vpop.f32.mrb[0].mxu0
    %v997 = vpop.f32.mrb[0].mxu0
    %v998 = vpop.f32.mrb[0].mxu0
    %999 = vdwg.mxu0
    %v1000 = vmul.f32 %v945, 0.35355338
    %v1001 = vmul.f32 %v995, 0.35355338
    %v1002 = vadd.f32 %v1000, %v91
    %v1003 = vadd.f32 %v1001, %v91
    %v1004 = vsel %vm207, %v1002, -inf
    %1005 = vmax.xlane.f32.xlu0 %v1004
    %v1006 = vpop.xlane.xlu0 %1005
    %v1007 = vsel %vm207, %v1003, -inf
    %1008 = vmax.xlane.f32.xlu0 %v1007
    %v1009 = vpop.xlane.xlu0 %1008
    %v1010 = vsub.f32 %v1002, %v1006
    %v1011 = vsub.f32 %v1003, %v1009
    %v1012 = vmul.f32 %v1010, 1.442695
    %v1013 = vpow.pop %v1012
    %v1014 = vmul.f32 %v1011, 1.442695
    %v1015 = vpow.pop %v1014
    %v1016 = vsel %vm207, %v1013, 0.0
    %1017 = vadd.xlane.f32.xlu0 %v1016
    %v1018 = vpop.xlane.xlu0 %1017
    %v1019 = vsel %vm207, %v1015, 0.0
    %1020 = vadd.xlane.f32.xlu0 %v1019
    %v1021 = vpop.xlane.xlu0 %1020
    %v1022 = vrcp.pop %v1018
    %v1023 = vrcp.pop %v1021
    %v1024 = vmul.f32 %v1013, %v1022
    %v1025 = vmul.f32 %v1015, %v1023
    %v1026 = vpack.c.bf16 %v1024, %v1024
    %v1027 = vpack.c.bf16 %v1025, %v1025
    %1028 = vrot.lane.b32.xlu0 %v202, 40
    %v1029 = vpop.permute.xlu0 %1028
    %v1031 = vsel %vm207, %v1026, 0
    %v1034 = vsel %vm336, %v1029, 0
    %1036 = vmatprep.subr.bf16.mxu0 0
    %1037 = vmatpush1.bf16.msra.mxu0 %v1034
    %1038 = vmatprep.subr.bf16.mxu0 0
    %1039 = vmatpush1.bf16.msra.mxu0 0
    %1040 = vmatprep.subr.bf16.mxu0 0
    %1041 = vmatpush1.bf16.msra.mxu0 0
    %1042 = vmatprep.subr.bf16.mxu0 0
    %1043 = vmatpush1.bf16.msra.mxu0 0
    %1044 = vmatprep.subr.bf16.mxu0 0
    %1045 = vmatpush1.bf16.msra.mxu0 0
    %1046 = vmatprep.subr.bf16.mxu0 0
    %1047 = vmatpush1.bf16.msra.mxu0 0
    %1048 = vmatprep.subr.bf16.mxu0 0
    %1049 = vmatpush1.bf16.msra.mxu0 0
    %1050 = vmatprep.subr.bf16.mxu0 0
    %1051 = vmatpush1.bf16.msra.mxu0 0
    %1052 = vmatprep.subr.bf16.mxu0 0
    %1053 = vmatpush1.bf16.msra.mxu0 0
    %1054 = vmatprep.subr.bf16.mxu0 0
    %1055 = vmatpush1.bf16.msra.mxu0 0
    %1056 = vmatprep.subr.bf16.mxu0 0
    %1057 = vmatpush1.bf16.msra.mxu0 0
    %1058 = vmatprep.subr.bf16.mxu0 0
    %1059 = vmatpush1.bf16.msra.mxu0 0
    %1060 = vmatprep.subr.bf16.mxu0 0
    %1061 = vmatpush1.bf16.msra.mxu0 0
    %1062 = vmatprep.subr.bf16.mxu0 0
    %1063 = vmatpush1.bf16.msra.mxu0 0
    %1064 = vmatprep.subr.bf16.mxu0 0
    %1065 = vmatpush1.bf16.msra.mxu0 0
    %1066 = vmatprep.subr.bf16.mxu0 0
    %1067 = vmatpush1.bf16.msra.mxu0 0
    %1068 = vmatprep.mubr.bf16.mxu0 0
    %1069 = vmatmul.mubr.bf16.gmra.mrb[0].mxu0 %v1031
    %v1070 = vpop.f32.mrb[0].mxu0
    %v1071 = vadd.f32 0.0, %v1070
    %v1072 = vpop.f32.mrb[0].mxu0
    %v1073 = vpop.f32.mrb[0].mxu0
    %v1074 = vpop.f32.mrb[0].mxu0
    %1075 = vdwg.mxu0
    %1076 = vrot.lane.b32.xlu0 %v203, 40
    %v1077 = vpop.permute.xlu0 %1076
    %v1079 = vsel %vm207, %v1027, 0
    %v1082 = vsel %vm336, %v1077, 0
    %1084 = vmatprep.subr.bf16.mxu0 0
    %1085 = vmatpush1.bf16.msra.mxu0 %v1082
    %1086 = vmatprep.subr.bf16.mxu0 0
    %1087 = vmatpush1.bf16.msra.mxu0 0
    %1088 = vmatprep.subr.bf16.mxu0 0
    %1089 = vmatpush1.bf16.msra.mxu0 0
    %1090 = vmatprep.subr.bf16.mxu0 0
    %1091 = vmatpush1.bf16.msra.mxu0 0
    %1092 = vmatprep.subr.bf16.mxu0 0
    %1093 = vmatpush1.bf16.msra.mxu0 0
    %1094 = vmatprep.subr.bf16.mxu0 0
    %1095 = vmatpush1.bf16.msra.mxu0 0
    %1096 = vmatprep.subr.bf16.mxu0 0
    %1097 = vmatpush1.bf16.msra.mxu0 0
    %1098 = vmatprep.subr.bf16.mxu0 0
    %1099 = vmatpush1.bf16.msra.mxu0 0
    %1100 = vmatprep.subr.bf16.mxu0 0
    %1101 = vmatpush1.bf16.msra.mxu0 0
    %1102 = vmatprep.subr.bf16.mxu0 0
    %1103 = vmatpush1.bf16.msra.mxu0 0
    %1104 = vmatprep.subr.bf16.mxu0 0
    %1105 = vmatpush1.bf16.msra.mxu0 0
    %1106 = vmatprep.subr.bf16.mxu0 0
    %1107 = vmatpush1.bf16.msra.mxu0 0
    %1108 = vmatprep.subr.bf16.mxu0 0
    %1109 = vmatpush1.bf16.msra.mxu0 0
    %1110 = vmatprep.subr.bf16.mxu0 0
    %1111 = vmatpush1.bf16.msra.mxu0 0
    %1112 = vmatprep.subr.bf16.mxu0 0
    %1113 = vmatpush1.bf16.msra.mxu0 0
    %1114 = vmatprep.subr.bf16.mxu0 0
    %1115 = vmatpush1.bf16.msra.mxu0 0
    %1116 = vmatprep.mubr.bf16.mxu0 0
    %1117 = vmatmul.mubr.bf16.gmra.mrb[0].mxu0 %v1079
    %v1118 = vpop.f32.mrb[0].mxu0
    %v1119 = vadd.f32 0.0, %v1118
    %v1120 = vpop.f32.mrb[0].mxu0
    %v1121 = vpop.f32.mrb[0].mxu0
    %v1122 = vpop.f32.mrb[0].mxu0
    %1123 = vdwg.mxu0
    %1126 = vrot.lane.b32.xlu0 %v1071, 24
    %v1127 = vpop.permute.xlu0 %1126
    %1128 = vrot.lane.b32.xlu0 %v1119, 24
    %v1129 = vpop.permute.xlu0 %1128
    %vm1132 = vcmask 261312
    %1133 = vst.msk [vmem:[#allocation2] sm:$0xff] %vm1132, %v1127
    %1134 = vst.msk [vmem:[#allocation2 + $0x8] sm:$0xff] %vm1132, %v1129
    %v1135 = vld [vmem:[#allocation2] sm:$0xff]
    %v1136 = vld [vmem:[#allocation2 + $0x8] sm:$0xff]
    %v1137 = vpack.c.bf16 %v1136, %v1135
    %v1139 = vlaneseq
    %v1140 = vshrl.u32 %v1139, 7
    %v1141 = vsub.s32 0, %v1140
    %v1142 = vrot.slane %v201, %v1141
    %v1148 = vunpack.c.l.b16 %v197
    %v1149 = vunpack.c.l.b16 %v198
    %v1150 = vunpack.c.l.b16 %v199
    %v1151 = vunpack.c.l.b16 %v200
    %v1152 = vpack.c.b16 %v1149, %v1148
    %v1153 = vpack.c.b16 %v1151, %v1150
    %v1157 = vsel %vm152, %v1137, 0
    %1159 = vmatprep.subr.bf16.mxu0 0
    %1160 = vmatpush1.bf16.msra.mxu0 %v1152
    %1161 = vmatprep.subr.bf16.mxu0 0
    %1162 = vmatpush1.bf16.msra.mxu0 %v1153
    %1163 = vmatprep.subr.bf16.mxu0 0
    %1164 = vmatpush1.bf16.msra.mxu0 0
    %1165 = vmatprep.subr.bf16.mxu0 0
    %1166 = vmatpush1.bf16.msra.mxu0 0
    %1167 = vmatprep.subr.bf16.mxu0 0
    %1168 = vmatpush1.bf16.msra.mxu0 0
    %1169 = vmatprep.subr.bf16.mxu0 0
    %1170 = vmatpush1.bf16.msra.mxu0 0
    %1171 = vmatprep.subr.bf16.mxu0 0
    %1172 = vmatpush1.bf16.msra.mxu0 0
    %1173 = vmatprep.subr.bf16.mxu0 0
    %1174 = vmatpush1.bf16.msra.mxu0 0
    %1175 = vmatprep.subr.bf16.mxu0 0
    %1176 = vmatpush1.bf16.msra.mxu0 0
    %1177 = vmatprep.subr.bf16.mxu0 0
    %1178 = vmatpush1.bf16.msra.mxu0 0
    %1179 = vmatprep.subr.bf16.mxu0 0
    %1180 = vmatpush1.bf16.msra.mxu0 0
    %1181 = vmatprep.subr.bf16.mxu0 0
    %1182 = vmatpush1.bf16.msra.mxu0 0
    %1183 = vmatprep.subr.bf16.mxu0 0
    %1184 = vmatpush1.bf16.msra.mxu0 0
    %1185 = vmatprep.subr.bf16.mxu0 0
    %1186 = vmatpush1.bf16.msra.mxu0 0
    %1187 = vmatprep.subr.bf16.mxu0 0
    %1188 = vmatpush1.bf16.msra.mxu0 0
    %1189 = vmatprep.subr.bf16.mxu0 0
    %1190 = vmatpush1.bf16.msra.mxu0 0
    %1191 = vmatprep.mubr.bf16.mxu0 0
    %1192 = vmatmul.mubr.bf16.gmra.mrb[0].mxu0 %v1157
    %v1193 = vpop.f32.mrb[0].mxu0
    %v1194 = vadd.f32 %v1142, %v1193
    %v1195 = vpop.f32.mrb[0].mxu0
    %v1196 = vpop.f32.mrb[0].mxu0
    %v1197 = vadd.f32 %v1142, %v1196
    %v1198 = vpop.f32.mrb[0].mxu0
    %1199 = vdwg.mxu0
    %v1200 = vadd.f32 %v82, %v1194
    %v1201 = vadd.f32 %v83, %v1197
    %v1202 = vld [vmem:[%s7] sm:$0x1]
    %v1203 = vld [vmem:[%s8] sm:$0x1]
    %v1204 = vsel %vm152, %v1200, 0.0
    %1205 = vadd.xlane.f32.xlu0 %v1204
    %v1206 = vpop.xlane.xlu0 %1205
    %v1207 = vsel %vm152, %v1201, 0.0
    %1208 = vadd.xlane.f32.xlu0 %v1207
    %v1209 = vpop.xlane.xlu0 %1208
    %v1210 = vrcp.pop 32.0
    %v1211 = vmul.f32 %v1206, %v1210
    %v1212 = vmul.f32 %v1209, %v1210
    %v1213 = vsub.f32 %v1200, %v1211
    %v1214 = vsub.f32 %v1201, %v1212
    %v1215 = vmul.f32 %v1213, %v1213
    %v1216 = vmul.f32 %v1214, %v1214
    %v1217 = vsel %vm152, %v1215, 0.0
    %1218 = vadd.xlane.f32.xlu0 %v1217
    %v1219 = vpop.xlane.xlu0 %1218
    %v1220 = vsel %vm152, %v1216, 0.0
    %1221 = vadd.xlane.f32.xlu0 %v1220
    %v1222 = vpop.xlane.xlu0 %1221
    %v1223 = vmul.f32 %v1219, %v1210
    %v1224 = vmul.f32 %v1222, %v1210
    %v1225 = vadd.f32 %v1223, 1e-05
    %v1226 = vadd.f32 %v1224, 1e-05
    %v1227 = vrsqrt.pop %v1225
    %v1228 = vrsqrt.pop %v1226
    %v1229 = vmul.f32 %v1213, %v1227
    %v1230 = vmul.f32 %v1214, %v1228
    %v1232 = vlaneseq
    %v1233 = vshrl.u32 %v1232, 7
    %v1234 = vsub.s32 0, %v1233
    %v1235 = vrot.slane %v1202, %v1234
    %v1237 = vmul.f32 %v1229, %v1235
    %v1238 = vmul.f32 %v1230, %v1235
    %v1240 = vlaneseq
    %v1241 = vshrl.u32 %v1240, 7
    %v1242 = vsub.s32 0, %v1241
    %v1243 = vrot.slane %v1203, %v1242
    %v1245 = vadd.f32 %v1237, %v1243
    %v1246 = vadd.f32 %v1238, %v1243
    %v1247 = vld [vmem:[%s9] sm:$0xf]
    %v1248 = vld [vmem:[%s9 + $0x4] sm:$0xf]
    %v1249 = vld [vmem:[%s9 + $0x8] sm:$0xf]
    %v1250 = vld [vmem:[%s9 + $0xc] sm:$0xf]
    %v1251 = vpack.c.bf16 %v1246, %v1245
    %v1252 = vld [vmem:[%s10] sm:$0x1]
    %v1254 = vlaneseq
    %v1255 = vshrl.u32 %v1254, 7
    %v1256 = vsub.s32 0, %v1255
    %v1257 = vrot.slane %v1252, %v1256
    %v1263 = vunpack.c.l.b16 %v1247
    %v1264 = vunpack.c.l.b16 %v1248
    %v1265 = vunpack.c.l.b16 %v1249
    %v1266 = vunpack.c.l.b16 %v1250
    %v1267 = vpack.c.b16 %v1264, %v1263
    %v1268 = vpack.c.b16 %v1266, %v1265
    %v1272 = vsel %vm152, %v1251, 0
    %1274 = vmatprep.subr.bf16.mxu0 0
    %1275 = vmatpush1.bf16.msra.mxu0 %v1267
    %1276 = vmatprep.subr.bf16.mxu0 0
    %1277 = vmatpush1.bf16.msra.mxu0 %v1268
    %1278 = vmatprep.subr.bf16.mxu0 0
    %1279 = vmatpush1.bf16.msra.mxu0 0
    %1280 = vmatprep.subr.bf16.mxu0 0
    %1281 = vmatpush1.bf16.msra.mxu0 0
    %1282 = vmatprep.subr.bf16.mxu0 0
    %1283 = vmatpush1.bf16.msra.mxu0 0
    %1284 = vmatprep.subr.bf16.mxu0 0
    %1285 = vmatpush1.bf16.msra.mxu0 0
    %1286 = vmatprep.subr.bf16.mxu0 0
    %1287 = vmatpush1.bf16.msra.mxu0 0
    %1288 = vmatprep.subr.bf16.mxu0 0
    %1289 = vmatpush1.bf16.msra.mxu0 0
    %1290 = vmatprep.subr.bf16.mxu0 0
    %1291 = vmatpush1.bf16.msra.mxu0 0
    %1292 = vmatprep.subr.bf16.mxu0 0
    %1293 = vmatpush1.bf16.msra.mxu0 0
    %1294 = vmatprep.subr.bf16.mxu0 0
    %1295 = vmatpush1.bf16.msra.mxu0 0
    %1296 = vmatprep.subr.bf16.mxu0 0
    %1297 = vmatpush1.bf16.msra.mxu0 0
    %1298 = vmatprep.subr.bf16.mxu0 0
    %1299 = vmatpush1.bf16.msra.mxu0 0
    %1300 = vmatprep.subr.bf16.mxu0 0
    %1301 = vmatpush1.bf16.msra.mxu0 0
    %1302 = vmatprep.subr.bf16.mxu0 0
    %1303 = vmatpush1.bf16.msra.mxu0 0
    %1304 = vmatprep.subr.bf16.mxu0 0
    %1305 = vmatpush1.bf16.msra.mxu0 0
    %1306 = vmatprep.mubr.bf16.mxu0 0
    %1307 = vmatmul.mubr.bf16.gmra.mrb[0].mxu0 %v1272
    %v1308 = vpop.f32.mrb[0].mxu0
    %v1309 = vadd.f32 %v1257, %v1308
    %v1310 = vpop.f32.mrb[0].mxu0
    %v1311 = vpop.f32.mrb[0].mxu0
    %v1312 = vadd.f32 %v1257, %v1311
    %v1313 = vpop.f32.mrb[0].mxu0
    %1314 = vdwg.mxu0
    %v1315 = vld [vmem:[%s11] sm:$0xf]
    %v1316 = vld [vmem:[%s11 + $0x4] sm:$0xf]
    %v1317 = vld [vmem:[%s11 + $0x8] sm:$0xf]
    %v1318 = vld [vmem:[%s11 + $0xc] sm:$0xf]
    %v1319 = vld [vmem:[%s11 + $0x10] sm:$0xf]
    %v1320 = vld [vmem:[%s11 + $0x14] sm:$0xf]
    %v1321 = vld [vmem:[%s11 + $0x18] sm:$0xf]
    %v1322 = vld [vmem:[%s11 + $0x1c] sm:$0xf]
    %v1323 = vld [vmem:[%s11 + $0x20] sm:$0xf]
    %v1324 = vld [vmem:[%s11 + $0x24] sm:$0xf]
    %v1325 = vld [vmem:[%s11 + $0x28] sm:$0xf]
    %v1326 = vld [vmem:[%s11 + $0x2c] sm:$0xf]
    %v1327 = vld [vmem:[%s11 + $0x30] sm:$0xf]
    %v1328 = vld [vmem:[%s11 + $0x34] sm:$0xf]
    %v1329 = vld [vmem:[%s11 + $0x38] sm:$0xf]
    %v1330 = vld [vmem:[%s11 + $0x3c] sm:$0xf]
    %v1331 = vld [vmem:[%s12] sm:$0x1]
    %v1333 = vlaneseq
    %v1334 = vshrl.u32 %v1333, 7
    %v1335 = vsub.s32 0, %v1334
    %v1336 = vrot.slane %v1331, %v1335
    %v1340 = vunpack.c.l.b16 %v84
    %v1341 = vunpack.c.l.b16 %v85
    %v1342 = vpack.c.b16 %v1341, %v1340
    %v1360 = vunpack.c.l.b16 %v1315
    %v1361 = vunpack.c.l.b16 %v1316
    %v1362 = vunpack.c.l.b16 %v1317
    %v1363 = vunpack.c.l.b16 %v1318
    %v1364 = vunpack.c.l.b16 %v1319
    %v1365 = vunpack.c.l.b16 %v1320
    %v1366 = vunpack.c.l.b16 %v1321
    %v1367 = vunpack.c.l.b16 %v1322
    %v1368 = vunpack.c.l.b16 %v1323
    %v1369 = vunpack.c.l.b16 %v1324
    %v1370 = vunpack.c.l.b16 %v1325
    %v1371 = vunpack.c.l.b16 %v1326
    %v1372 = vunpack.c.l.b16 %v1327
    %v1373 = vunpack.c.l.b16 %v1328
    %v1374 = vunpack.c.l.b16 %v1329
    %v1375 = vunpack.c.l.b16 %v1330
    %v1376 = vpack.c.b16 %v1361, %v1360
    %v1377 = vpack.c.b16 %v1363, %v1362
    %v1378 = vpack.c.b16 %v1365, %v1364
    %v1379 = vpack.c.b16 %v1367, %v1366
    %v1380 = vpack.c.b16 %v1369, %v1368
    %v1381 = vpack.c.b16 %v1371, %v1370
    %v1382 = vpack.c.b16 %v1373, %v1372
    %v1383 = vpack.c.b16 %v1375, %v1374
    %1392 = vmatprep.subr.bf16.mxu0 0
    %1393 = vmatpush1.bf16.msra.mxu0 %v1376
    %1394 = vmatprep.subr.bf16.mxu0 0
    %1395 = vmatpush1.bf16.msra.mxu0 %v1377
    %1396 = vmatprep.subr.bf16.mxu0 0
    %1397 = vmatpush1.bf16.msra.mxu0 %v1378
    %1398 = vmatprep.subr.bf16.mxu0 0
    %1399 = vmatpush1.bf16.msra.mxu0 %v1379
    %1400 = vmatprep.subr.bf16.mxu0 0
    %1401 = vmatpush1.bf16.msra.mxu0 %v1380
    %1402 = vmatprep.subr.bf16.mxu0 0
    %1403 = vmatpush1.bf16.msra.mxu0 %v1381
    %1404 = vmatprep.subr.bf16.mxu0 0
    %1405 = vmatpush1.bf16.msra.mxu0 %v1382
    %1406 = vmatprep.subr.bf16.mxu0 0
    %1407 = vmatpush1.bf16.msra.mxu0 %v1383
    %1408 = vmatprep.subr.bf16.mxu0 0
    %1409 = vmatpush1.bf16.msra.mxu0 0
    %1410 = vmatprep.subr.bf16.mxu0 0
    %1411 = vmatpush1.bf16.msra.mxu0 0
    %1412 = vmatprep.subr.bf16.mxu0 0
    %1413 = vmatpush1.bf16.msra.mxu0 0
    %1414 = vmatprep.subr.bf16.mxu0 0
    %1415 = vmatpush1.bf16.msra.mxu0 0
    %1416 = vmatprep.subr.bf16.mxu0 0
    %1417 = vmatpush1.bf16.msra.mxu0 0
    %1418 = vmatprep.subr.bf16.mxu0 0
    %1419 = vmatpush1.bf16.msra.mxu0 0
    %1420 = vmatprep.subr.bf16.mxu0 0
    %1421 = vmatpush1.bf16.msra.mxu0 0
    %1422 = vmatprep.subr.bf16.mxu0 0
    %1423 = vmatpush1.bf16.msra.mxu0 0
    %1424 = vmatprep.mubr.bf16.mxu0 0
    %1425 = vmatmul.mubr.bf16.gmra.mrb[0].mxu0 %v1342
    %v1426 = vpop.f32.mrb[0].mxu0
    %v1427 = vadd.f32 %v1336, %v1426
    %v1428 = vpop.f32.mrb[0].mxu0
    %v1429 = vpop.f32.mrb[0].mxu0
    %v1430 = vadd.f32 %v1336, %v1429
    %v1431 = vpop.f32.mrb[0].mxu0
    %1432 = vdwg.mxu0
    %v1433 = vld [vmem:[%s13] sm:$0xf]
    %v1434 = vld [vmem:[%s13 + $0x4] sm:$0xf]
    %v1435 = vld [vmem:[%s13 + $0x8] sm:$0xf]
    %v1436 = vld [vmem:[%s13 + $0xc] sm:$0xf]
    %v1437 = vld [vmem:[%s14] sm:$0x1]
    %v1438 = vpack.c.bf16 %v1309, %v1309
    %v1439 = vpack.c.bf16 %v1312, %v1312
    %v1440 = vpack.c.bf16 %v1427, %v1427
    %v1441 = vpack.c.bf16 %v1430, %v1430
    %v1443 = vsel %vm207, %v1438, 0
    %v1446 = vsel %vm207, %v1440, 0
    %1448 = vmatprep.subr.bf16.mxu0 0
    %1449 = vmatpush1.bf16.xpose.msra.mxu0 %v1446
    %1450 = vmatprep.subr.bf16.mxu0 0
    %1451 = vmatpush1.bf16.xpose.msra.mxu0 0
    %1452 = vmatprep.subr.bf16.mxu0 0
    %1453 = vmatpush1.bf16.xpose.msra.mxu0 0
    %1454 = vmatprep.subr.bf16.mxu0 0
    %1455 = vmatpush1.bf16.xpose.msra.mxu0 0
    %1456 = vmatprep.subr.bf16.mxu0 0
    %1457 = vmatpush1.bf16.xpose.msra.mxu0 0
    %1458 = vmatprep.subr.bf16.mxu0 0
    %1459 = vmatpush1.bf16.xpose.msra.mxu0 0
    %1460 = vmatprep.subr.bf16.mxu0 0
    %1461 = vmatpush1.bf16.xpose.msra.mxu0 0
    %1462 = vmatprep.subr.bf16.mxu0 0
    %1463 = vmatpush1.bf16.xpose.msra.mxu0 0
    %1464 = vmatprep.subr.bf16.mxu0 0
    %1465 = vmatpush1.bf16.xpose.msra.mxu0 0
    %1466 = vmatprep.subr.bf16.mxu0 0
    %1467 = vmatpush1.bf16.xpose.msra.mxu0 0
    %1468 = vmatprep.subr.bf16.mxu0 0
    %1469 = vmatpush1.bf16.xpose.msra.mxu0 0
    %1470 = vmatprep.subr.bf16.mxu0 0
    %1471 = vmatpush1.bf16.xpose.msra.mxu0 0
    %1472 = vmatprep.subr.bf16.mxu0 0
    %1473 = vmatpush1.bf16.xpose.msra.mxu0 0
    %1474 = vmatprep.subr.bf16.mxu0 0
    %1475 = vmatpush1.bf16.xpose.msra.mxu0 0
    %1476 = vmatprep.subr.bf16.mxu0 0
    %1477 = vmatpush1.bf16.xpose.msra.mxu0 0
    %1478 = vmatprep.subr.bf16.mxu0 0
    %1479 = vmatpush1.bf16.xpose.msra.mxu0 0
    %1480 = vmatprep.mubr.bf16.mxu0 0
    %1481 = vmatmul.mubr.bf16.gmra.mrb[0].mxu0 %v1443
    %v1482 = vpop.f32.mrb[0].mxu0
    %v1483 = vadd.f32 0.0, %v1482
    %v1484 = vpop.f32.mrb[0].mxu0
    %v1485 = vpop.f32.mrb[0].mxu0
    %v1486 = vpop.f32.mrb[0].mxu0
    %1487 = vdwg.mxu0
    %v1489 = vsel %vm207, %v1439, 0
    %v1492 = vsel %vm207, %v1441, 0
    %1494 = vmatprep.subr.bf16.mxu0 0
    %1495 = vmatpush1.bf16.xpose.msra.mxu0 %v1492
    %1496 = vmatprep.subr.bf16.mxu0 0
    %1497 = vmatpush1.bf16.xpose.msra.mxu0 0
    %1498 = vmatprep.subr.bf16.mxu0 0
    %1499 = vmatpush1.bf16.xpose.msra.mxu0 0
    %1500 = vmatprep.subr.bf16.mxu0 0
    %1501 = vmatpush1.bf16.xpose.msra.mxu0 0
    %1502 = vmatprep.subr.bf16.mxu0 0
    %1503 = vmatpush1.bf16.xpose.msra.mxu0 0
    %1504 = vmatprep.subr.bf16.mxu0 0
    %1505 = vmatpush1.bf16.xpose.msra.mxu0 0
    %1506 = vmatprep.subr.bf16.mxu0 0
    %1507 = vmatpush1.bf16.xpose.msra.mxu0 0
    %1508 = vmatprep.subr.bf16.mxu0 0
    %1509 = vmatpush1.bf16.xpose.msra.mxu0 0
    %1510 = vmatprep.subr.bf16.mxu0 0
    %1511 = vmatpush1.bf16.xpose.msra.mxu0 0
    %1512 = vmatprep.subr.bf16.mxu0 0
    %1513 = vmatpush1.bf16.xpose.msra.mxu0 0
    %1514 = vmatprep.subr.bf16.mxu0 0
    %1515 = vmatpush1.bf16.xpose.msra.mxu0 0
    %1516 = vmatprep.subr.bf16.mxu0 0
    %1517 = vmatpush1.bf16.xpose.msra.mxu0 0
    %1518 = vmatprep.subr.bf16.mxu0 0
    %1519 = vmatpush1.bf16.xpose.msra.mxu0 0
    %1520 = vmatprep.subr.bf16.mxu0 0
    %1521 = vmatpush1.bf16.xpose.msra.mxu0 0
    %1522 = vmatprep.subr.bf16.mxu0 0
    %1523 = vmatpush1.bf16.xpose.msra.mxu0 0
    %1524 = vmatprep.subr.bf16.mxu0 0
    %1525 = vmatpush1.bf16.xpose.msra.mxu0 0
    %1526 = vmatprep.mubr.bf16.mxu0 0
    %1527 = vmatmul.mubr.bf16.gmra.mrb[0].mxu0 %v1489
    %v1528 = vpop.f32.mrb[0].mxu0
    %v1529 = vadd.f32 0.0, %v1528
    %v1530 = vpop.f32.mrb[0].mxu0
    %v1531 = vpop.f32.mrb[0].mxu0
    %v1532 = vpop.f32.mrb[0].mxu0
    %1533 = vdwg.mxu0
    %v1534 = vmul.f32 %v1483, 0.35355338
    %v1535 = vmul.f32 %v1529, 0.35355338
    %v1536 = vadd.f32 %v1534, %v121
    %v1537 = vadd.f32 %v1535, %v125
    %v1538 = vsel %vm207, %v1536, -inf
    %1539 = vmax.xlane.f32.xlu0 %v1538
    %v1540 = vpop.xlane.xlu0 %1539
    %v1541 = vsel %vm207, %v1537, -inf
    %1542 = vmax.xlane.f32.xlu0 %v1541
    %v1543 = vpop.xlane.xlu0 %1542
    %v1544 = vsub.f32 %v1536, %v1540
    %v1545 = vsub.f32 %v1537, %v1543
    %v1546 = vmul.f32 %v1544, 1.442695
    %v1547 = vpow.pop %v1546
    %v1548 = vmul.f32 %v1545, 1.442695
    %v1549 = vpow.pop %v1548
    %v1550 = vsel %vm207, %v1547, 0.0
    %1551 = vadd.xlane.f32.xlu0 %v1550
    %v1552 = vpop.xlane.xlu0 %1551
    %v1553 = vsel %vm207, %v1549, 0.0
    %1554 = vadd.xlane.f32.xlu0 %v1553
    %v1555 = vpop.xlane.xlu0 %1554
    %v1556 = vrcp.pop %v1552
    %v1557 = vrcp.pop %v1555
    %v1558 = vmul.f32 %v1547, %v1556
    %v1559 = vmul.f32 %v1549, %v1557
    %v1560 = vpack.c.bf16 %v1558, %v1558
    %v1561 = vpack.c.bf16 %v1559, %v1559
    %1563 = vrot.lane.b32.xlu0 %v1440, 96
    %v1564 = vpop.permute.xlu0 %1563
    %v1566 = vsel %vm207, %v1560, 0
    %v1569 = vsel %vm336, %v1564, 0
    %1571 = vmatprep.subr.bf16.mxu0 0
    %1572 = vmatpush1.bf16.msra.mxu0 %v1569
    %1573 = vmatprep.subr.bf16.mxu0 0
    %1574 = vmatpush1.bf16.msra.mxu0 0
    %1575 = vmatprep.subr.bf16.mxu0 0
    %1576 = vmatpush1.bf16.msra.mxu0 0
    %1577 = vmatprep.subr.bf16.mxu0 0
    %1578 = vmatpush1.bf16.msra.mxu0 0
    %1579 = vmatprep.subr.bf16.mxu0 0
    %1580 = vmatpush1.bf16.msra.mxu0 0
    %1581 = vmatprep.subr.bf16.mxu0 0
    %1582 = vmatpush1.bf16.msra.mxu0 0
    %1583 = vmatprep.subr.bf16.mxu0 0
    %1584 = vmatpush1.bf16.msra.mxu0 0
    %1585 = vmatprep.subr.bf16.mxu0 0
    %1586 = vmatpush1.bf16.msra.mxu0 0
    %1587 = vmatprep.subr.bf16.mxu0 0
    %1588 = vmatpush1.bf16.msra.mxu0 0
    %1589 = vmatprep.subr.bf16.mxu0 0
    %1590 = vmatpush1.bf16.msra.mxu0 0
    %1591 = vmatprep.subr.bf16.mxu0 0
    %1592 = vmatpush1.bf16.msra.mxu0 0
    %1593 = vmatprep.subr.bf16.mxu0 0
    %1594 = vmatpush1.bf16.msra.mxu0 0
    %1595 = vmatprep.subr.bf16.mxu0 0
    %1596 = vmatpush1.bf16.msra.mxu0 0
    %1597 = vmatprep.subr.bf16.mxu0 0
    %1598 = vmatpush1.bf16.msra.mxu0 0
    %1599 = vmatprep.subr.bf16.mxu0 0
    %1600 = vmatpush1.bf16.msra.mxu0 0
    %1601 = vmatprep.subr.bf16.mxu0 0
    %1602 = vmatpush1.bf16.msra.mxu0 0
    %1603 = vmatprep.mubr.bf16.mxu0 0
    %1604 = vmatmul.mubr.bf16.gmra.mrb[0].mxu0 %v1566
    %v1605 = vpop.f32.mrb[0].mxu0
    %v1606 = vadd.f32 0.0, %v1605
    %v1607 = vpop.f32.mrb[0].mxu0
    %v1608 = vpop.f32.mrb[0].mxu0
    %v1609 = vpop.f32.mrb[0].mxu0
    %1610 = vdwg.mxu0
    %1612 = vrot.lane.b32.xlu0 %v1441, 96
    %v1613 = vpop.permute.xlu0 %1612
    %v1615 = vsel %vm207, %v1561, 0
    %v1618 = vsel %vm336, %v1613, 0
    %1620 = vmatprep.subr.bf16.mxu0 0
    %1621 = vmatpush1.bf16.msra.mxu0 %v1618
    %1622 = vmatprep.subr.bf16.mxu0 0
    %1623 = vmatpush1.bf16.msra.mxu0 0
    %1624 = vmatprep.subr.bf16.mxu0 0
    %1625 = vmatpush1.bf16.msra.mxu0 0
    %1626 = vmatprep.subr.bf16.mxu0 0
    %1627 = vmatpush1.bf16.msra.mxu0 0
    %1628 = vmatprep.subr.bf16.mxu0 0
    %1629 = vmatpush1.bf16.msra.mxu0 0
    %1630 = vmatprep.subr.bf16.mxu0 0
    %1631 = vmatpush1.bf16.msra.mxu0 0
    %1632 = vmatprep.subr.bf16.mxu0 0
    %1633 = vmatpush1.bf16.msra.mxu0 0
    %1634 = vmatprep.subr.bf16.mxu0 0
    %1635 = vmatpush1.bf16.msra.mxu0 0
    %1636 = vmatprep.subr.bf16.mxu0 0
    %1637 = vmatpush1.bf16.msra.mxu0 0
    %1638 = vmatprep.subr.bf16.mxu0 0
    %1639 = vmatpush1.bf16.msra.mxu0 0
    %1640 = vmatprep.subr.bf16.mxu0 0
    %1641 = vmatpush1.bf16.msra.mxu0 0
    %1642 = vmatprep.subr.bf16.mxu0 0
    %1643 = vmatpush1.bf16.msra.mxu0 0
    %1644 = vmatprep.subr.bf16.mxu0 0
    %1645 = vmatpush1.bf16.msra.mxu0 0
    %1646 = vmatprep.subr.bf16.mxu0 0
    %1647 = vmatpush1.bf16.msra.mxu0 0
    %1648 = vmatprep.subr.bf16.mxu0 0
    %1649 = vmatpush1.bf16.msra.mxu0 0
    %1650 = vmatprep.subr.bf16.mxu0 0
    %1651 = vmatpush1.bf16.msra.mxu0 0
    %1652 = vmatprep.mubr.bf16.mxu0 0
    %1653 = vmatmul.mubr.bf16.gmra.mrb[0].mxu0 %v1615
    %v1654 = vpop.f32.mrb[0].mxu0
    %v1655 = vadd.f32 0.0, %v1654
    %v1656 = vpop.f32.mrb[0].mxu0
    %v1657 = vpop.f32.mrb[0].mxu0
    %v1658 = vpop.f32.mrb[0].mxu0
    %1659 = vdwg.mxu0
    %1660 = vst.msk [vmem:[#allocation2] sm:$0xff] %vm207, %v1606
    %1661 = vst.msk [vmem:[#allocation2 + $0x8] sm:$0xff] %vm207, %v1655
    %1663 = vrot.lane.b32.xlu0 %v1438, 120
    %v1664 = vpop.permute.xlu0 %1663
    %1665 = vrot.lane.b32.xlu0 %v1440, 120
    %v1666 = vpop.permute.xlu0 %1665
    %v1668 = vsel %vm207, %v1664, 0
    %v1671 = vsel %vm207, %v1666, 0
    %1673 = vmatprep.subr.bf16.mxu0 0
    %1674 = vmatpush1.bf16.xpose.msra.mxu0 %v1671
    %1675 = vmatprep.subr.bf16.mxu0 0
    %1676 = vmatpush1.bf16.xpose.msra.mxu0 0
    %1677 = vmatprep.subr.bf16.mxu0 0
    %1678 = vmatpush1.bf16.xpose.msra.mxu0 0
    %1679 = vmatprep.subr.bf16.mxu0 0
    %1680 = vmatpush1.bf16.xpose.msra.mxu0 0
    %1681 = vmatprep.subr.bf16.mxu0 0
    %1682 = vmatpush1.bf16.xpose.msra.mxu0 0
    %1683 = vmatprep.subr.bf16.mxu0 0
    %1684 = vmatpush1.bf16.xpose.msra.mxu0 0
    %1685 = vmatprep.subr.bf16.mxu0 0
    %1686 = vmatpush1.bf16.xpose.msra.mxu0 0
    %1687 = vmatprep.subr.bf16.mxu0 0
    %1688 = vmatpush1.bf16.xpose.msra.mxu0 0
    %1689 = vmatprep.subr.bf16.mxu0 0
    %1690 = vmatpush1.bf16.xpose.msra.mxu0 0
    %1691 = vmatprep.subr.bf16.mxu0 0
    %1692 = vmatpush1.bf16.xpose.msra.mxu0 0
    %1693 = vmatprep.subr.bf16.mxu0 0
    %1694 = vmatpush1.bf16.xpose.msra.mxu0 0
    %1695 = vmatprep.subr.bf16.mxu0 0
    %1696 = vmatpush1.bf16.xpose.msra.mxu0 0
    %1697 = vmatprep.subr.bf16.mxu0 0
    %1698 = vmatpush1.bf16.xpose.msra.mxu0 0
    %1699 = vmatprep.subr.bf16.mxu0 0
    %1700 = vmatpush1.bf16.xpose.msra.mxu0 0
    %1701 = vmatprep.subr.bf16.mxu0 0
    %1702 = vmatpush1.bf16.xpose.msra.mxu0 0
    %1703 = vmatprep.subr.bf16.mxu0 0
    %1704 = vmatpush1.bf16.xpose.msra.mxu0 0
    %1705 = vmatprep.mubr.bf16.mxu0 0
    %1706 = vmatmul.mubr.bf16.gmra.mrb[0].mxu0 %v1668
    %v1707 = vpop.f32.mrb[0].mxu0
    %v1708 = vadd.f32 0.0, %v1707
    %v1709 = vpop.f32.mrb[0].mxu0
    %v1710 = vpop.f32.mrb[0].mxu0
    %v1711 = vpop.f32.mrb[0].mxu0
    %1712 = vdwg.mxu0
    %1714 = vrot.lane.b32.xlu0 %v1439, 120
    %v1715 = vpop.permute.xlu0 %1714
    %1716 = vrot.lane.b32.xlu0 %v1441, 120
    %v1717 = vpop.permute.xlu0 %1716
    %v1719 = vsel %vm207, %v1715, 0
    %v1722 = vsel %vm207, %v1717, 0
    %1724 = vmatprep.subr.bf16.mxu0 0
    %1725 = vmatpush1.bf16.xpose.msra.mxu0 %v1722
    %1726 = vmatprep.subr.bf16.mxu0 0
    %1727 = vmatpush1.bf16.xpose.msra.mxu0 0
    %1728 = vmatprep.subr.bf16.mxu0 0
    %1729 = vmatpush1.bf16.xpose.msra.mxu0 0
    %1730 = vmatprep.subr.bf16.mxu0 0
    %1731 = vmatpush1.bf16.xpose.msra.mxu0 0
    %1732 = vmatprep.subr.bf16.mxu0 0
    %1733 = vmatpush1.bf16.xpose.msra.mxu0 0
    %1734 = vmatprep.subr.bf16.mxu0 0
    %1735 = vmatpush1.bf16.xpose.msra.mxu0 0
    %1736 = vmatprep.subr.bf16.mxu0 0
    %1737 = vmatpush1.bf16.xpose.msra.mxu0 0
    %1738 = vmatprep.subr.bf16.mxu0 0
    %1739 = vmatpush1.bf16.xpose.msra.mxu0 0
    %1740 = vmatprep.subr.bf16.mxu0 0
    %1741 = vmatpush1.bf16.xpose.msra.mxu0 0
    %1742 = vmatprep.subr.bf16.mxu0 0
    %1743 = vmatpush1.bf16.xpose.msra.mxu0 0
    %1744 = vmatprep.subr.bf16.mxu0 0
    %1745 = vmatpush1.bf16.xpose.msra.mxu0 0
    %1746 = vmatprep.subr.bf16.mxu0 0
    %1747 = vmatpush1.bf16.xpose.msra.mxu0 0
    %1748 = vmatprep.subr.bf16.mxu0 0
    %1749 = vmatpush1.bf16.xpose.msra.mxu0 0
    %1750 = vmatprep.subr.bf16.mxu0 0
    %1751 = vmatpush1.bf16.xpose.msra.mxu0 0
    %1752 = vmatprep.subr.bf16.mxu0 0
    %1753 = vmatpush1.bf16.xpose.msra.mxu0 0
    %1754 = vmatprep.subr.bf16.mxu0 0
    %1755 = vmatpush1.bf16.xpose.msra.mxu0 0
    %1756 = vmatprep.mubr.bf16.mxu0 0
    %1757 = vmatmul.mubr.bf16.gmra.mrb[0].mxu0 %v1719
    %v1758 = vpop.f32.mrb[0].mxu0
    %v1759 = vadd.f32 0.0, %v1758
    %v1760 = vpop.f32.mrb[0].mxu0
    %v1761 = vpop.f32.mrb[0].mxu0
    %v1762 = vpop.f32.mrb[0].mxu0
    %1763 = vdwg.mxu0
    %v1764 = vmul.f32 %v1708, 0.35355338
    %v1765 = vmul.f32 %v1759, 0.35355338
    %v1766 = vadd.f32 %v1764, %v121
    %v1767 = vadd.f32 %v1765, %v125
    %v1768 = vsel %vm207, %v1766, -inf
    %1769 = vmax.xlane.f32.xlu0 %v1768
    %v1770 = vpop.xlane.xlu0 %1769
    %v1771 = vsel %vm207, %v1767, -inf
    %1772 = vmax.xlane.f32.xlu0 %v1771
    %v1773 = vpop.xlane.xlu0 %1772
    %v1774 = vsub.f32 %v1766, %v1770
    %v1775 = vsub.f32 %v1767, %v1773
    %v1776 = vmul.f32 %v1774, 1.442695
    %v1777 = vpow.pop %v1776
    %v1778 = vmul.f32 %v1775, 1.442695
    %v1779 = vpow.pop %v1778
    %v1780 = vsel %vm207, %v1777, 0.0
    %1781 = vadd.xlane.f32.xlu0 %v1780
    %v1782 = vpop.xlane.xlu0 %1781
    %v1783 = vsel %vm207, %v1779, 0.0
    %1784 = vadd.xlane.f32.xlu0 %v1783
    %v1785 = vpop.xlane.xlu0 %1784
    %v1786 = vrcp.pop %v1782
    %v1787 = vrcp.pop %v1785
    %v1788 = vmul.f32 %v1777, %v1786
    %v1789 = vmul.f32 %v1779, %v1787
    %v1790 = vpack.c.bf16 %v1788, %v1788
    %v1791 = vpack.c.bf16 %v1789, %v1789
    %1792 = vrot.lane.b32.xlu0 %v1440, 88
    %v1793 = vpop.permute.xlu0 %1792
    %v1795 = vsel %vm207, %v1790, 0
    %v1798 = vsel %vm336, %v1793, 0
    %1800 = vmatprep.subr.bf16.mxu0 0
    %1801 = vmatpush1.bf16.msra.mxu0 %v1798
    %1802 = vmatprep.subr.bf16.mxu0 0
    %1803 = vmatpush1.bf16.msra.mxu0 0
    %1804 = vmatprep.subr.bf16.mxu0 0
    %1805 = vmatpush1.bf16.msra.mxu0 0
    %1806 = vmatprep.subr.bf16.mxu0 0
    %1807 = vmatpush1.bf16.msra.mxu0 0
    %1808 = vmatprep.subr.bf16.mxu0 0
    %1809 = vmatpush1.bf16.msra.mxu0 0
    %1810 = vmatprep.subr.bf16.mxu0 0
    %1811 = vmatpush1.bf16.msra.mxu0 0
    %1812 = vmatprep.subr.bf16.mxu0 0
    %1813 = vmatpush1.bf16.msra.mxu0 0
    %1814 = vmatprep.subr.bf16.mxu0 0
    %1815 = vmatpush1.bf16.msra.mxu0 0
    %1816 = vmatprep.subr.bf16.mxu0 0
    %1817 = vmatpush1.bf16.msra.mxu0 0
    %1818 = vmatprep.subr.bf16.mxu0 0
    %1819 = vmatpush1.bf16.msra.mxu0 0
    %1820 = vmatprep.subr.bf16.mxu0 0
    %1821 = vmatpush1.bf16.msra.mxu0 0
    %1822 = vmatprep.subr.bf16.mxu0 0
    %1823 = vmatpush1.bf16.msra.mxu0 0
    %1824 = vmatprep.subr.bf16.mxu0 0
    %1825 = vmatpush1.bf16.msra.mxu0 0
    %1826 = vmatprep.subr.bf16.mxu0 0
    %1827 = vmatpush1.bf16.msra.mxu0 0
    %1828 = vmatprep.subr.bf16.mxu0 0
    %1829 = vmatpush1.bf16.msra.mxu0 0
    %1830 = vmatprep.subr.bf16.mxu0 0
    %1831 = vmatpush1.bf16.msra.mxu0 0
    %1832 = vmatprep.mubr.bf16.mxu0 0
    %1833 = vmatmul.mubr.bf16.gmra.mrb[0].mxu0 %v1795
    %v1834 = vpop.f32.mrb[0].mxu0
    %v1835 = vadd.f32 0.0, %v1834
    %v1836 = vpop.f32.mrb[0].mxu0
    %v1837 = vpop.f32.mrb[0].mxu0
    %v1838 = vpop.f32.mrb[0].mxu0
    %1839 = vdwg.mxu0
    %1840 = vrot.lane.b32.xlu0 %v1441, 88
    %v1841 = vpop.permute.xlu0 %1840
    %v1843 = vsel %vm207, %v1791, 0
    %v1846 = vsel %vm336, %v1841, 0
    %1848 = vmatprep.subr.bf16.mxu0 0
    %1849 = vmatpush1.bf16.msra.mxu0 %v1846
    %1850 = vmatprep.subr.bf16.mxu0 0
    %1851 = vmatpush1.bf16.msra.mxu0 0
    %1852 = vmatprep.subr.bf16.mxu0 0
    %1853 = vmatpush1.bf16.msra.mxu0 0
    %1854 = vmatprep.subr.bf16.mxu0 0
    %1855 = vmatpush1.bf16.msra.mxu0 0
    %1856 = vmatprep.subr.bf16.mxu0 0
    %1857 = vmatpush1.bf16.msra.mxu0 0
    %1858 = vmatprep.subr.bf16.mxu0 0
    %1859 = vmatpush1.bf16.msra.mxu0 0
    %1860 = vmatprep.subr.bf16.mxu0 0
    %1861 = vmatpush1.bf16.msra.mxu0 0
    %1862 = vmatprep.subr.bf16.mxu0 0
    %1863 = vmatpush1.bf16.msra.mxu0 0
    %1864 = vmatprep.subr.bf16.mxu0 0
    %1865 = vmatpush1.bf16.msra.mxu0 0
    %1866 = vmatprep.subr.bf16.mxu0 0
    %1867 = vmatpush1.bf16.msra.mxu0 0
    %1868 = vmatprep.subr.bf16.mxu0 0
    %1869 = vmatpush1.bf16.msra.mxu0 0
    %1870 = vmatprep.subr.bf16.mxu0 0
    %1871 = vmatpush1.bf16.msra.mxu0 0
    %1872 = vmatprep.subr.bf16.mxu0 0
    %1873 = vmatpush1.bf16.msra.mxu0 0
    %1874 = vmatprep.subr.bf16.mxu0 0
    %1875 = vmatpush1.bf16.msra.mxu0 0
    %1876 = vmatprep.subr.bf16.mxu0 0
    %1877 = vmatpush1.bf16.msra.mxu0 0
    %1878 = vmatprep.subr.bf16.mxu0 0
    %1879 = vmatpush1.bf16.msra.mxu0 0
    %1880 = vmatprep.mubr.bf16.mxu0 0
    %1881 = vmatmul.mubr.bf16.gmra.mrb[0].mxu0 %v1843
    %v1882 = vpop.f32.mrb[0].mxu0
    %v1883 = vadd.f32 0.0, %v1882
    %v1884 = vpop.f32.mrb[0].mxu0
    %v1885 = vpop.f32.mrb[0].mxu0
    %v1886 = vpop.f32.mrb[0].mxu0
    %1887 = vdwg.mxu0
    %1890 = vrot.lane.b32.xlu0 %v1835, 8
    %v1891 = vpop.permute.xlu0 %1890
    %1892 = vrot.lane.b32.xlu0 %v1883, 8
    %v1893 = vpop.permute.xlu0 %1892
    %1896 = vst.msk [vmem:[#allocation2] sm:$0xff] %vm662, %v1891
    %1897 = vst.msk [vmem:[#allocation2 + $0x8] sm:$0xff] %vm662, %v1893
    %1898 = vrot.lane.b32.xlu0 %v1438, 112
    %v1899 = vpop.permute.xlu0 %1898
    %1900 = vrot.lane.b32.xlu0 %v1440, 112
    %v1901 = vpop.permute.xlu0 %1900
    %v1903 = vsel %vm207, %v1899, 0
    %v1906 = vsel %vm207, %v1901, 0
    %1908 = vmatprep.subr.bf16.mxu0 0
    %1909 = vmatpush1.bf16.xpose.msra.mxu0 %v1906
    %1910 = vmatprep.subr.bf16.mxu0 0
    %1911 = vmatpush1.bf16.xpose.msra.mxu0 0
    %1912 = vmatprep.subr.bf16.mxu0 0
    %1913 = vmatpush1.bf16.xpose.msra.mxu0 0
    %1914 = vmatprep.subr.bf16.mxu0 0
    %1915 = vmatpush1.bf16.xpose.msra.mxu0 0
    %1916 = vmatprep.subr.bf16.mxu0 0
    %1917 = vmatpush1.bf16.xpose.msra.mxu0 0
    %1918 = vmatprep.subr.bf16.mxu0 0
    %1919 = vmatpush1.bf16.xpose.msra.mxu0 0
    %1920 = vmatprep.subr.bf16.mxu0 0
    %1921 = vmatpush1.bf16.xpose.msra.mxu0 0
    %1922 = vmatprep.subr.bf16.mxu0 0
    %1923 = vmatpush1.bf16.xpose.msra.mxu0 0
    %1924 = vmatprep.subr.bf16.mxu0 0
    %1925 = vmatpush1.bf16.xpose.msra.mxu0 0
    %1926 = vmatprep.subr.bf16.mxu0 0
    %1927 = vmatpush1.bf16.xpose.msra.mxu0 0
    %1928 = vmatprep.subr.bf16.mxu0 0
    %1929 = vmatpush1.bf16.xpose.msra.mxu0 0
    %1930 = vmatprep.subr.bf16.mxu0 0
    %1931 = vmatpush1.bf16.xpose.msra.mxu0 0
    %1932 = vmatprep.subr.bf16.mxu0 0
    %1933 = vmatpush1.bf16.xpose.msra.mxu0 0
    %1934 = vmatprep.subr.bf16.mxu0 0
    %1935 = vmatpush1.bf16.xpose.msra.mxu0 0
    %1936 = vmatprep.subr.bf16.mxu0 0
    %1937 = vmatpush1.bf16.xpose.msra.mxu0 0
    %1938 = vmatprep.subr.bf16.mxu0 0
    %1939 = vmatpush1.bf16.xpose.msra.mxu0 0
    %1940 = vmatprep.mubr.bf16.mxu0 0
    %1941 = vmatmul.mubr.bf16.gmra.mrb[0].mxu0 %v1903
    %v1942 = vpop.f32.mrb[0].mxu0
    %v1943 = vadd.f32 0.0, %v1942
    %v1944 = vpop.f32.mrb[0].mxu0
    %v1945 = vpop.f32.mrb[0].mxu0
    %v1946 = vpop.f32.mrb[0].mxu0
    %1947 = vdwg.mxu0
    %1948 = vrot.lane.b32.xlu0 %v1439, 112
    %v1949 = vpop.permute.xlu0 %1948
    %1950 = vrot.lane.b32.xlu0 %v1441, 112
    %v1951 = vpop.permute.xlu0 %1950
    %v1953 = vsel %vm207, %v1949, 0
    %v1956 = vsel %vm207, %v1951, 0
    %1958 = vmatprep.subr.bf16.mxu0 0
    %1959 = vmatpush1.bf16.xpose.msra.mxu0 %v1956
    %1960 = vmatprep.subr.bf16.mxu0 0
    %1961 = vmatpush1.bf16.xpose.msra.mxu0 0
    %1962 = vmatprep.subr.bf16.mxu0 0
    %1963 = vmatpush1.bf16.xpose.msra.mxu0 0
    %1964 = vmatprep.subr.bf16.mxu0 0
    %1965 = vmatpush1.bf16.xpose.msra.mxu0 0
    %1966 = vmatprep.subr.bf16.mxu0 0
    %1967 = vmatpush1.bf16.xpose.msra.mxu0 0
    %1968 = vmatprep.subr.bf16.mxu0 0
    %1969 = vmatpush1.bf16.xpose.msra.mxu0 0
    %1970 = vmatprep.subr.bf16.mxu0 0
    %1971 = vmatpush1.bf16.xpose.msra.mxu0 0
    %1972 = vmatprep.subr.bf16.mxu0 0
    %1973 = vmatpush1.bf16.xpose.msra.mxu0 0
    %1974 = vmatprep.subr.bf16.mxu0 0
    %1975 = vmatpush1.bf16.xpose.msra.mxu0 0
    %1976 = vmatprep.subr.bf16.mxu0 0
    %1977 = vmatpush1.bf16.xpose.msra.mxu0 0
    %1978 = vmatprep.subr.bf16.mxu0 0
    %1979 = vmatpush1.bf16.xpose.msra.mxu0 0
    %1980 = vmatprep.subr.bf16.mxu0 0
    %1981 = vmatpush1.bf16.xpose.msra.mxu0 0
    %1982 = vmatprep.subr.bf16.mxu0 0
    %1983 = vmatpush1.bf16.xpose.msra.mxu0 0
    %1984 = vmatprep.subr.bf16.mxu0 0
    %1985 = vmatpush1.bf16.xpose.msra.mxu0 0
    %1986 = vmatprep.subr.bf16.mxu0 0
    %1987 = vmatpush1.bf16.xpose.msra.mxu0 0
    %1988 = vmatprep.subr.bf16.mxu0 0
    %1989 = vmatpush1.bf16.xpose.msra.mxu0 0
    %1990 = vmatprep.mubr.bf16.mxu0 0
    %1991 = vmatmul.mubr.bf16.gmra.mrb[0].mxu0 %v1953
    %v1992 = vpop.f32.mrb[0].mxu0
    %v1993 = vadd.f32 0.0, %v1992
    %v1994 = vpop.f32.mrb[0].mxu0
    %v1995 = vpop.f32.mrb[0].mxu0
    %v1996 = vpop.f32.mrb[0].mxu0
    %1997 = vdwg.mxu0
    %v1998 = vmul.f32 %v1943, 0.35355338
    %v1999 = vmul.f32 %v1993, 0.35355338
    %v2000 = vadd.f32 %v1998, %v121
    %v2001 = vadd.f32 %v1999, %v125
    %v2002 = vsel %vm207, %v2000, -inf
    %2003 = vmax.xlane.f32.xlu0 %v2002
    %v2004 = vpop.xlane.xlu0 %2003
    %v2005 = vsel %vm207, %v2001, -inf
    %2006 = vmax.xlane.f32.xlu0 %v2005
    %v2007 = vpop.xlane.xlu0 %2006
    %v2008 = vsub.f32 %v2000, %v2004
    %v2009 = vsub.f32 %v2001, %v2007
    %v2010 = vmul.f32 %v2008, 1.442695
    %v2011 = vpow.pop %v2010
    %v2012 = vmul.f32 %v2009, 1.442695
    %v2013 = vpow.pop %v2012
    %v2014 = vsel %vm207, %v2011, 0.0
    %2015 = vadd.xlane.f32.xlu0 %v2014
    %v2016 = vpop.xlane.xlu0 %2015
    %v2017 = vsel %vm207, %v2013, 0.0
    %2018 = vadd.xlane.f32.xlu0 %v2017
    %v2019 = vpop.xlane.xlu0 %2018
    %v2020 = vrcp.pop %v2016
    %v2021 = vrcp.pop %v2019
    %v2022 = vmul.f32 %v2011, %v2020
    %v2023 = vmul.f32 %v2013, %v2021
    %v2024 = vpack.c.bf16 %v2022, %v2022
    %v2025 = vpack.c.bf16 %v2023, %v2023
    %2026 = vrot.lane.b32.xlu0 %v1440, 80
    %v2027 = vpop.permute.xlu0 %2026
    %v2029 = vsel %vm207, %v2024, 0
    %v2032 = vsel %vm336, %v2027, 0
    %2034 = vmatprep.subr.bf16.mxu0 0
    %2035 = vmatpush1.bf16.msra.mxu0 %v2032
    %2036 = vmatprep.subr.bf16.mxu0 0
    %2037 = vmatpush1.bf16.msra.mxu0 0
    %2038 = vmatprep.subr.bf16.mxu0 0
    %2039 = vmatpush1.bf16.msra.mxu0 0
    %2040 = vmatprep.subr.bf16.mxu0 0
    %2041 = vmatpush1.bf16.msra.mxu0 0
    %2042 = vmatprep.subr.bf16.mxu0 0
    %2043 = vmatpush1.bf16.msra.mxu0 0
    %2044 = vmatprep.subr.bf16.mxu0 0
    %2045 = vmatpush1.bf16.msra.mxu0 0
    %2046 = vmatprep.subr.bf16.mxu0 0
    %2047 = vmatpush1.bf16.msra.mxu0 0
    %2048 = vmatprep.subr.bf16.mxu0 0
    %2049 = vmatpush1.bf16.msra.mxu0 0
    %2050 = vmatprep.subr.bf16.mxu0 0
    %2051 = vmatpush1.bf16.msra.mxu0 0
    %2052 = vmatprep.subr.bf16.mxu0 0
    %2053 = vmatpush1.bf16.msra.mxu0 0
    %2054 = vmatprep.subr.bf16.mxu0 0
    %2055 = vmatpush1.bf16.msra.mxu0 0
    %2056 = vmatprep.subr.bf16.mxu0 0
    %2057 = vmatpush1.bf16.msra.mxu0 0
    %2058 = vmatprep.subr.bf16.mxu0 0
    %2059 = vmatpush1.bf16.msra.mxu0 0
    %2060 = vmatprep.subr.bf16.mxu0 0
    %2061 = vmatpush1.bf16.msra.mxu0 0
    %2062 = vmatprep.subr.bf16.mxu0 0
    %2063 = vmatpush1.bf16.msra.mxu0 0
    %2064 = vmatprep.subr.bf16.mxu0 0
    %2065 = vmatpush1.bf16.msra.mxu0 0
    %2066 = vmatprep.mubr.bf16.mxu0 0
    %2067 = vmatmul.mubr.bf16.gmra.mrb[0].mxu0 %v2029
    %v2068 = vpop.f32.mrb[0].mxu0
    %v2069 = vadd.f32 0.0, %v2068
    %v2070 = vpop.f32.mrb[0].mxu0
    %v2071 = vpop.f32.mrb[0].mxu0
    %v2072 = vpop.f32.mrb[0].mxu0
    %2073 = vdwg.mxu0
    %2074 = vrot.lane.b32.xlu0 %v1441, 80
    %v2075 = vpop.permute.xlu0 %2074
    %v2077 = vsel %vm207, %v2025, 0
    %v2080 = vsel %vm336, %v2075, 0
    %2082 = vmatprep.subr.bf16.mxu0 0
    %2083 = vmatpush1.bf16.msra.mxu0 %v2080
    %2084 = vmatprep.subr.bf16.mxu0 0
    %2085 = vmatpush1.bf16.msra.mxu0 0
    %2086 = vmatprep.subr.bf16.mxu0 0
    %2087 = vmatpush1.bf16.msra.mxu0 0
    %2088 = vmatprep.subr.bf16.mxu0 0
    %2089 = vmatpush1.bf16.msra.mxu0 0
    %2090 = vmatprep.subr.bf16.mxu0 0
    %2091 = vmatpush1.bf16.msra.mxu0 0
    %2092 = vmatprep.subr.bf16.mxu0 0
    %2093 = vmatpush1.bf16.msra.mxu0 0
    %2094 = vmatprep.subr.bf16.mxu0 0
    %2095 = vmatpush1.bf16.msra.mxu0 0
    %2096 = vmatprep.subr.bf16.mxu0 0
    %2097 = vmatpush1.bf16.msra.mxu0 0
    %2098 = vmatprep.subr.bf16.mxu0 0
    %2099 = vmatpush1.bf16.msra.mxu0 0
    %2100 = vmatprep.subr.bf16.mxu0 0
    %2101 = vmatpush1.bf16.msra.mxu0 0
    %2102 = vmatprep.subr.bf16.mxu0 0
    %2103 = vmatpush1.bf16.msra.mxu0 0
    %2104 = vmatprep.subr.bf16.mxu0 0
    %2105 = vmatpush1.bf16.msra.mxu0 0
    %2106 = vmatprep.subr.bf16.mxu0 0
    %2107 = vmatpush1.bf16.msra.mxu0 0
    %2108 = vmatprep.subr.bf16.mxu0 0
    %2109 = vmatpush1.bf16.msra.mxu0 0
    %2110 = vmatprep.subr.bf16.mxu0 0
    %2111 = vmatpush1.bf16.msra.mxu0 0
    %2112 = vmatprep.subr.bf16.mxu0 0
    %2113 = vmatpush1.bf16.msra.mxu0 0
    %2114 = vmatprep.mubr.bf16.mxu0 0
    %2115 = vmatmul.mubr.bf16.gmra.mrb[0].mxu0 %v2077
    %v2116 = vpop.f32.mrb[0].mxu0
    %v2117 = vadd.f32 0.0, %v2116
    %v2118 = vpop.f32.mrb[0].mxu0
    %v2119 = vpop.f32.mrb[0].mxu0
    %v2120 = vpop.f32.mrb[0].mxu0
    %2121 = vdwg.mxu0
    %2124 = vrot.lane.b32.xlu0 %v2069, 16
    %v2125 = vpop.permute.xlu0 %2124
    %2126 = vrot.lane.b32.xlu0 %v2117, 16
    %v2127 = vpop.permute.xlu0 %2126
    %2130 = vst.msk [vmem:[#allocation2] sm:$0xff] %vm897, %v2125
    %2131 = vst.msk [vmem:[#allocation2 + $0x8] sm:$0xff] %vm897, %v2127
    %2132 = vrot.lane.b32.xlu0 %v1438, 104
    %v2133 = vpop.permute.xlu0 %2132
    %2134 = vrot.lane.b32.xlu0 %v1440, 104
    %v2135 = vpop.permute.xlu0 %2134
    %v2137 = vsel %vm207, %v2133, 0
    %v2140 = vsel %vm207, %v2135, 0
    %2142 = vmatprep.subr.bf16.mxu0 0
    %2143 = vmatpush1.bf16.xpose.msra.mxu0 %v2140
    %2144 = vmatprep.subr.bf16.mxu0 0
    %2145 = vmatpush1.bf16.xpose.msra.mxu0 0
    %2146 = vmatprep.subr.bf16.mxu0 0
    %2147 = vmatpush1.bf16.xpose.msra.mxu0 0
    %2148 = vmatprep.subr.bf16.mxu0 0
    %2149 = vmatpush1.bf16.xpose.msra.mxu0 0
    %2150 = vmatprep.subr.bf16.mxu0 0
    %2151 = vmatpush1.bf16.xpose.msra.mxu0 0
    %2152 = vmatprep.subr.bf16.mxu0 0
    %2153 = vmatpush1.bf16.xpose.msra.mxu0 0
    %2154 = vmatprep.subr.bf16.mxu0 0
    %2155 = vmatpush1.bf16.xpose.msra.mxu0 0
    %2156 = vmatprep.subr.bf16.mxu0 0
    %2157 = vmatpush1.bf16.xpose.msra.mxu0 0
    %2158 = vmatprep.subr.bf16.mxu0 0
    %2159 = vmatpush1.bf16.xpose.msra.mxu0 0
    %2160 = vmatprep.subr.bf16.mxu0 0
    %2161 = vmatpush1.bf16.xpose.msra.mxu0 0
    %2162 = vmatprep.subr.bf16.mxu0 0
    %2163 = vmatpush1.bf16.xpose.msra.mxu0 0
    %2164 = vmatprep.subr.bf16.mxu0 0
    %2165 = vmatpush1.bf16.xpose.msra.mxu0 0
    %2166 = vmatprep.subr.bf16.mxu0 0
    %2167 = vmatpush1.bf16.xpose.msra.mxu0 0
    %2168 = vmatprep.subr.bf16.mxu0 0
    %2169 = vmatpush1.bf16.xpose.msra.mxu0 0
    %2170 = vmatprep.subr.bf16.mxu0 0
    %2171 = vmatpush1.bf16.xpose.msra.mxu0 0
    %2172 = vmatprep.subr.bf16.mxu0 0
    %2173 = vmatpush1.bf16.xpose.msra.mxu0 0
    %2174 = vmatprep.mubr.bf16.mxu0 0
    %2175 = vmatmul.mubr.bf16.gmra.mrb[0].mxu0 %v2137
    %v2176 = vpop.f32.mrb[0].mxu0
    %v2177 = vadd.f32 0.0, %v2176
    %v2178 = vpop.f32.mrb[0].mxu0
    %v2179 = vpop.f32.mrb[0].mxu0
    %v2180 = vpop.f32.mrb[0].mxu0
    %2181 = vdwg.mxu0
    %2182 = vrot.lane.b32.xlu0 %v1439, 104
    %v2183 = vpop.permute.xlu0 %2182
    %2184 = vrot.lane.b32.xlu0 %v1441, 104
    %v2185 = vpop.permute.xlu0 %2184
    %v2187 = vsel %vm207, %v2183, 0
    %v2190 = vsel %vm207, %v2185, 0
    %2192 = vmatprep.subr.bf16.mxu0 0
    %2193 = vmatpush1.bf16.xpose.msra.mxu0 %v2190
    %2194 = vmatprep.subr.bf16.mxu0 0
    %2195 = vmatpush1.bf16.xpose.msra.mxu0 0
    %2196 = vmatprep.subr.bf16.mxu0 0
    %2197 = vmatpush1.bf16.xpose.msra.mxu0 0
    %2198 = vmatprep.subr.bf16.mxu0 0
    %2199 = vmatpush1.bf16.xpose.msra.mxu0 0
    %2200 = vmatprep.subr.bf16.mxu0 0
    %2201 = vmatpush1.bf16.xpose.msra.mxu0 0
    %2202 = vmatprep.subr.bf16.mxu0 0
    %2203 = vmatpush1.bf16.xpose.msra.mxu0 0
    %2204 = vmatprep.subr.bf16.mxu0 0
    %2205 = vmatpush1.bf16.xpose.msra.mxu0 0
    %2206 = vmatprep.subr.bf16.mxu0 0
    %2207 = vmatpush1.bf16.xpose.msra.mxu0 0
    %2208 = vmatprep.subr.bf16.mxu0 0
    %2209 = vmatpush1.bf16.xpose.msra.mxu0 0
    %2210 = vmatprep.subr.bf16.mxu0 0
    %2211 = vmatpush1.bf16.xpose.msra.mxu0 0
    %2212 = vmatprep.subr.bf16.mxu0 0
    %2213 = vmatpush1.bf16.xpose.msra.mxu0 0
    %2214 = vmatprep.subr.bf16.mxu0 0
    %2215 = vmatpush1.bf16.xpose.msra.mxu0 0
    %2216 = vmatprep.subr.bf16.mxu0 0
    %2217 = vmatpush1.bf16.xpose.msra.mxu0 0
    %2218 = vmatprep.subr.bf16.mxu0 0
    %2219 = vmatpush1.bf16.xpose.msra.mxu0 0
    %2220 = vmatprep.subr.bf16.mxu0 0
    %2221 = vmatpush1.bf16.xpose.msra.mxu0 0
    %2222 = vmatprep.subr.bf16.mxu0 0
    %2223 = vmatpush1.bf16.xpose.msra.mxu0 0
    %2224 = vmatprep.mubr.bf16.mxu0 0
    %2225 = vmatmul.mubr.bf16.gmra.mrb[0].mxu0 %v2187
    %v2226 = vpop.f32.mrb[0].mxu0
    %v2227 = vadd.f32 0.0, %v2226
    %v2228 = vpop.f32.mrb[0].mxu0
    %v2229 = vpop.f32.mrb[0].mxu0
    %v2230 = vpop.f32.mrb[0].mxu0
    %2231 = vdwg.mxu0
    %v2232 = vmul.f32 %v2177, 0.35355338
    %v2233 = vmul.f32 %v2227, 0.35355338
    %v2234 = vadd.f32 %v2232, %v121
    %v2235 = vadd.f32 %v2233, %v125
    %v2236 = vsel %vm207, %v2234, -inf
    %2237 = vmax.xlane.f32.xlu0 %v2236
    %v2238 = vpop.xlane.xlu0 %2237
    %v2239 = vsel %vm207, %v2235, -inf
    %2240 = vmax.xlane.f32.xlu0 %v2239
    %v2241 = vpop.xlane.xlu0 %2240
    %v2242 = vsub.f32 %v2234, %v2238
    %v2243 = vsub.f32 %v2235, %v2241
    %v2244 = vmul.f32 %v2242, 1.442695
    %v2245 = vpow.pop %v2244
    %v2246 = vmul.f32 %v2243, 1.442695
    %v2247 = vpow.pop %v2246
    %v2248 = vsel %vm207, %v2245, 0.0
    %2249 = vadd.xlane.f32.xlu0 %v2248
    %v2250 = vpop.xlane.xlu0 %2249
    %v2251 = vsel %vm207, %v2247, 0.0
    %2252 = vadd.xlane.f32.xlu0 %v2251
    %v2253 = vpop.xlane.xlu0 %2252
    %v2254 = vrcp.pop %v2250
    %v2255 = vrcp.pop %v2253
    %v2256 = vmul.f32 %v2245, %v2254
    %v2257 = vmul.f32 %v2247, %v2255
    %v2258 = vpack.c.bf16 %v2256, %v2256
    %v2259 = vpack.c.bf16 %v2257, %v2257
    %2260 = vrot.lane.b32.xlu0 %v1440, 72
    %v2261 = vpop.permute.xlu0 %2260
    %v2263 = vsel %vm207, %v2258, 0
    %v2266 = vsel %vm336, %v2261, 0
    %2268 = vmatprep.subr.bf16.mxu0 0
    %2269 = vmatpush1.bf16.msra.mxu0 %v2266
    %2270 = vmatprep.subr.bf16.mxu0 0
    %2271 = vmatpush1.bf16.msra.mxu0 0
    %2272 = vmatprep.subr.bf16.mxu0 0
    %2273 = vmatpush1.bf16.msra.mxu0 0
    %2274 = vmatprep.subr.bf16.mxu0 0
    %2275 = vmatpush1.bf16.msra.mxu0 0
    %2276 = vmatprep.subr.bf16.mxu0 0
    %2277 = vmatpush1.bf16.msra.mxu0 0
    %2278 = vmatprep.subr.bf16.mxu0 0
    %2279 = vmatpush1.bf16.msra.mxu0 0
    %2280 = vmatprep.subr.bf16.mxu0 0
    %2281 = vmatpush1.bf16.msra.mxu0 0
    %2282 = vmatprep.subr.bf16.mxu0 0
    %2283 = vmatpush1.bf16.msra.mxu0 0
    %2284 = vmatprep.subr.bf16.mxu0 0
    %2285 = vmatpush1.bf16.msra.mxu0 0
    %2286 = vmatprep.subr.bf16.mxu0 0
    %2287 = vmatpush1.bf16.msra.mxu0 0
    %2288 = vmatprep.subr.bf16.mxu0 0
    %2289 = vmatpush1.bf16.msra.mxu0 0
    %2290 = vmatprep.subr.bf16.mxu0 0
    %2291 = vmatpush1.bf16.msra.mxu0 0
    %2292 = vmatprep.subr.bf16.mxu0 0
    %2293 = vmatpush1.bf16.msra.mxu0 0
    %2294 = vmatprep.subr.bf16.mxu0 0
    %2295 = vmatpush1.bf16.msra.mxu0 0
    %2296 = vmatprep.subr.bf16.mxu0 0
    %2297 = vmatpush1.bf16.msra.mxu0 0
    %2298 = vmatprep.subr.bf16.mxu0 0
    %2299 = vmatpush1.bf16.msra.mxu0 0
    %2300 = vmatprep.mubr.bf16.mxu0 0
    %2301 = vmatmul.mubr.bf16.gmra.mrb[0].mxu0 %v2263
    %v2302 = vpop.f32.mrb[0].mxu0
    %v2303 = vadd.f32 0.0, %v2302
    %v2304 = vpop.f32.mrb[0].mxu0
    %v2305 = vpop.f32.mrb[0].mxu0
    %v2306 = vpop.f32.mrb[0].mxu0
    %2307 = vdwg.mxu0
    %2308 = vrot.lane.b32.xlu0 %v1441, 72
    %v2309 = vpop.permute.xlu0 %2308
    %v2311 = vsel %vm207, %v2259, 0
    %v2314 = vsel %vm336, %v2309, 0
    %2316 = vmatprep.subr.bf16.mxu0 0
    %2317 = vmatpush1.bf16.msra.mxu0 %v2314
    %2318 = vmatprep.subr.bf16.mxu0 0
    %2319 = vmatpush1.bf16.msra.mxu0 0
    %2320 = vmatprep.subr.bf16.mxu0 0
    %2321 = vmatpush1.bf16.msra.mxu0 0
    %2322 = vmatprep.subr.bf16.mxu0 0
    %2323 = vmatpush1.bf16.msra.mxu0 0
    %2324 = vmatprep.subr.bf16.mxu0 0
    %2325 = vmatpush1.bf16.msra.mxu0 0
    %2326 = vmatprep.subr.bf16.mxu0 0
    %2327 = vmatpush1.bf16.msra.mxu0 0
    %2328 = vmatprep.subr.bf16.mxu0 0
    %2329 = vmatpush1.bf16.msra.mxu0 0
    %2330 = vmatprep.subr.bf16.mxu0 0
    %2331 = vmatpush1.bf16.msra.mxu0 0
    %2332 = vmatprep.subr.bf16.mxu0 0
    %2333 = vmatpush1.bf16.msra.mxu0 0
    %2334 = vmatprep.subr.bf16.mxu0 0
    %2335 = vmatpush1.bf16.msra.mxu0 0
    %2336 = vmatprep.subr.bf16.mxu0 0
    %2337 = vmatpush1.bf16.msra.mxu0 0
    %2338 = vmatprep.subr.bf16.mxu0 0
    %2339 = vmatpush1.bf16.msra.mxu0 0
    %2340 = vmatprep.subr.bf16.mxu0 0
    %2341 = vmatpush1.bf16.msra.mxu0 0
    %2342 = vmatprep.subr.bf16.mxu0 0
    %2343 = vmatpush1.bf16.msra.mxu0 0
    %2344 = vmatprep.subr.bf16.mxu0 0
    %2345 = vmatpush1.bf16.msra.mxu0 0
    %2346 = vmatprep.subr.bf16.mxu0 0
    %2347 = vmatpush1.bf16.msra.mxu0 0
    %2348 = vmatprep.mubr.bf16.mxu0 0
    %2349 = vmatmul.mubr.bf16.gmra.mrb[0].mxu0 %v2311
    %v2350 = vpop.f32.mrb[0].mxu0
    %v2351 = vadd.f32 0.0, %v2350
    %v2352 = vpop.f32.mrb[0].mxu0
    %v2353 = vpop.f32.mrb[0].mxu0
    %v2354 = vpop.f32.mrb[0].mxu0
    %2355 = vdwg.mxu0
    %2358 = vrot.lane.b32.xlu0 %v2303, 24
    %v2359 = vpop.permute.xlu0 %2358
    %2360 = vrot.lane.b32.xlu0 %v2351, 24
    %v2361 = vpop.permute.xlu0 %2360
    %2364 = vst.msk [vmem:[#allocation2] sm:$0xff] %vm1132, %v2359
    %2365 = vst.msk [vmem:[#allocation2 + $0x8] sm:$0xff] %vm1132, %v2361
    %v2366 = vld [vmem:[#allocation2] sm:$0xff]
    %v2367 = vld [vmem:[#allocation2 + $0x8] sm:$0xff]
    %v2368 = vpack.c.bf16 %v2367, %v2366
    %v2370 = vlaneseq
    %v2371 = vshrl.u32 %v2370, 7
    %v2372 = vsub.s32 0, %v2371
    %v2373 = vrot.slane %v1437, %v2372
    %v2379 = vunpack.c.l.b16 %v1433
    %v2380 = vunpack.c.l.b16 %v1434
    %v2381 = vunpack.c.l.b16 %v1435
    %v2382 = vunpack.c.l.b16 %v1436
    %v2383 = vpack.c.b16 %v2380, %v2379
    %v2384 = vpack.c.b16 %v2382, %v2381
    %v2388 = vsel %vm152, %v2368, 0
    %2390 = vmatprep.subr.bf16.mxu0 0
    %2391 = vmatpush1.bf16.msra.mxu0 %v2383
    %2392 = vmatprep.subr.bf16.mxu0 0
    %2393 = vmatpush1.bf16.msra.mxu0 %v2384
    %2394 = vmatprep.subr.bf16.mxu0 0
    %2395 = vmatpush1.bf16.msra.mxu0 0
    %2396 = vmatprep.subr.bf16.mxu0 0
    %2397 = vmatpush1.bf16.msra.mxu0 0
    %2398 = vmatprep.subr.bf16.mxu0 0
    %2399 = vmatpush1.bf16.msra.mxu0 0
    %2400 = vmatprep.subr.bf16.mxu0 0
    %2401 = vmatpush1.bf16.msra.mxu0 0
    %2402 = vmatprep.subr.bf16.mxu0 0
    %2403 = vmatpush1.bf16.msra.mxu0 0
    %2404 = vmatprep.subr.bf16.mxu0 0
    %2405 = vmatpush1.bf16.msra.mxu0 0
    %2406 = vmatprep.subr.bf16.mxu0 0
    %2407 = vmatpush1.bf16.msra.mxu0 0
    %2408 = vmatprep.subr.bf16.mxu0 0
    %2409 = vmatpush1.bf16.msra.mxu0 0
    %2410 = vmatprep.subr.bf16.mxu0 0
    %2411 = vmatpush1.bf16.msra.mxu0 0
    %2412 = vmatprep.subr.bf16.mxu0 0
    %2413 = vmatpush1.bf16.msra.mxu0 0
    %2414 = vmatprep.subr.bf16.mxu0 0
    %2415 = vmatpush1.bf16.msra.mxu0 0
    %2416 = vmatprep.subr.bf16.mxu0 0
    %2417 = vmatpush1.bf16.msra.mxu0 0
    %2418 = vmatprep.subr.bf16.mxu0 0
    %2419 = vmatpush1.bf16.msra.mxu0 0
    %2420 = vmatprep.subr.bf16.mxu0 0
    %2421 = vmatpush1.bf16.msra.mxu0 0
    %2422 = vmatprep.mubr.bf16.mxu0 0
    %2423 = vmatmul.mubr.bf16.gmra.mrb[0].mxu0 %v2388
    %v2424 = vpop.f32.mrb[0].mxu0
    %v2425 = vadd.f32 %v2373, %v2424
    %v2426 = vpop.f32.mrb[0].mxu0
    %v2427 = vpop.f32.mrb[0].mxu0
    %v2428 = vadd.f32 %v2373, %v2427
    %v2429 = vpop.f32.mrb[0].mxu0
    %2430 = vdwg.mxu0
    %v2431 = vadd.f32 %v1245, %v2425
    %v2432 = vadd.f32 %v1246, %v2428
    %v2433 = vld [vmem:[%s15] sm:$0x1]
    %v2434 = vld [vmem:[%s16] sm:$0x1]
    %v2435 = vsel %vm152, %v2431, 0.0
    %2436 = vadd.xlane.f32.xlu0 %v2435
    %v2437 = vpop.xlane.xlu0 %2436
    %v2438 = vsel %vm152, %v2432, 0.0
    %2439 = vadd.xlane.f32.xlu0 %v2438
    %v2440 = vpop.xlane.xlu0 %2439
    %v2441 = vmul.f32 %v2437, %v1210
    %v2442 = vmul.f32 %v2440, %v1210
    %v2443 = vsub.f32 %v2431, %v2441
    %v2444 = vsub.f32 %v2432, %v2442
    %v2445 = vmul.f32 %v2443, %v2443
    %v2446 = vmul.f32 %v2444, %v2444
    %v2447 = vsel %vm152, %v2445, 0.0
    %2448 = vadd.xlane.f32.xlu0 %v2447
    %v2449 = vpop.xlane.xlu0 %2448
    %v2450 = vsel %vm152, %v2446, 0.0
    %2451 = vadd.xlane.f32.xlu0 %v2450
    %v2452 = vpop.xlane.xlu0 %2451
    %v2453 = vmul.f32 %v2449, %v1210
    %v2454 = vmul.f32 %v2452, %v1210
    %v2455 = vadd.f32 %v2453, 1e-05
    %v2456 = vadd.f32 %v2454, 1e-05
    %v2457 = vrsqrt.pop %v2455
    %v2458 = vrsqrt.pop %v2456
    %v2459 = vmul.f32 %v2443, %v2457
    %v2460 = vmul.f32 %v2444, %v2458
    %v2462 = vlaneseq
    %v2463 = vshrl.u32 %v2462, 7
    %v2464 = vsub.s32 0, %v2463
    %v2465 = vrot.slane %v2433, %v2464
    %v2467 = vmul.f32 %v2459, %v2465
    %v2468 = vmul.f32 %v2460, %v2465
    %v2470 = vlaneseq
    %v2471 = vshrl.u32 %v2470, 7
    %v2472 = vsub.s32 0, %v2471
    %v2473 = vrot.slane %v2434, %v2472
    %v2475 = vadd.f32 %v2467, %v2473
    %v2476 = vadd.f32 %v2468, %v2473
    %v2477 = vld [vmem:[%s17] sm:$0xf]
    %v2478 = vld [vmem:[%s17 + $0x4] sm:$0xf]
    %v2479 = vld [vmem:[%s17 + $0x8] sm:$0xf]
    %v2480 = vld [vmem:[%s17 + $0xc] sm:$0xf]
    %v2481 = vld [vmem:[%s18] sm:$0x1]
    %v2482 = vld [vmem:[%s19] sm:$0xf]
    %v2483 = vld [vmem:[%s19 + $0x4] sm:$0xf]
    %v2484 = vld [vmem:[%s19 + $0x8] sm:$0xf]
    %v2485 = vld [vmem:[%s19 + $0xc] sm:$0xf]
    %v2486 = vld [vmem:[%s19 + $0x10] sm:$0xf]
    %v2487 = vld [vmem:[%s19 + $0x14] sm:$0xf]
    %v2488 = vld [vmem:[%s19 + $0x18] sm:$0xf]
    %v2489 = vld [vmem:[%s19 + $0x1c] sm:$0xf]
    %v2490 = vld [vmem:[%s20] sm:$0x1]
    %v2491 = vpack.c.bf16 %v2476, %v2475
    %v2493 = vlaneseq
    %v2494 = vshrl.u32 %v2493, 7
    %v2495 = vsub.s32 0, %v2494
    %v2496 = vrot.slane %v2481, %v2495
    %v2502 = vunpack.c.l.b16 %v2477
    %v2503 = vunpack.c.l.b16 %v2478
    %v2504 = vunpack.c.l.b16 %v2479
    %v2505 = vunpack.c.l.b16 %v2480
    %v2506 = vpack.c.b16 %v2503, %v2502
    %v2507 = vpack.c.b16 %v2505, %v2504
    %v2511 = vsel %vm152, %v2491, 0
    %2513 = vmatprep.subr.bf16.mxu0 0
    %2514 = vmatpush1.bf16.msra.mxu0 %v2506
    %2515 = vmatprep.subr.bf16.mxu0 0
    %2516 = vmatpush1.bf16.msra.mxu0 %v2507
    %2517 = vmatprep.subr.bf16.mxu0 0
    %2518 = vmatpush1.bf16.msra.mxu0 0
    %2519 = vmatprep.subr.bf16.mxu0 0
    %2520 = vmatpush1.bf16.msra.mxu0 0
    %2521 = vmatprep.subr.bf16.mxu0 0
    %2522 = vmatpush1.bf16.msra.mxu0 0
    %2523 = vmatprep.subr.bf16.mxu0 0
    %2524 = vmatpush1.bf16.msra.mxu0 0
    %2525 = vmatprep.subr.bf16.mxu0 0
    %2526 = vmatpush1.bf16.msra.mxu0 0
    %2527 = vmatprep.subr.bf16.mxu0 0
    %2528 = vmatpush1.bf16.msra.mxu0 0
    %2529 = vmatprep.subr.bf16.mxu0 0
    %2530 = vmatpush1.bf16.msra.mxu0 0
    %2531 = vmatprep.subr.bf16.mxu0 0
    %2532 = vmatpush1.bf16.msra.mxu0 0
    %2533 = vmatprep.subr.bf16.mxu0 0
    %2534 = vmatpush1.bf16.msra.mxu0 0
    %2535 = vmatprep.subr.bf16.mxu0 0
    %2536 = vmatpush1.bf16.msra.mxu0 0
    %2537 = vmatprep.subr.bf16.mxu0 0
    %2538 = vmatpush1.bf16.msra.mxu0 0
    %2539 = vmatprep.subr.bf16.mxu0 0
    %2540 = vmatpush1.bf16.msra.mxu0 0
    %2541 = vmatprep.subr.bf16.mxu0 0
    %2542 = vmatpush1.bf16.msra.mxu0 0
    %2543 = vmatprep.subr.bf16.mxu0 0
    %2544 = vmatpush1.bf16.msra.mxu0 0
    %2545 = vmatprep.mubr.bf16.mxu0 0
    %2546 = vmatmul.mubr.bf16.gmra.mrb[0].mxu0 %v2511
    %v2547 = vpop.f32.mrb[0].mxu0
    %v2548 = vadd.f32 %v2496, %v2547
    %v2549 = vpop.f32.mrb[0].mxu0
    %v2550 = vpop.f32.mrb[0].mxu0
    %v2551 = vadd.f32 %v2496, %v2550
    %v2552 = vpop.f32.mrb[0].mxu0
    %2553 = vdwg.mxu0
    %v2554 = vxor.u32 %v2548, 2147483648
    %v2555 = vxor.u32 %v2551, 2147483648
    %v2556 = vmul.f32 %v2554, 1.442695
    %v2557 = vpow.pop %v2556
    %v2558 = vmul.f32 %v2555, 1.442695
    %v2559 = vpow.pop %v2558
    %v2560 = vadd.f32 %v2557, 1.0
    %v2561 = vadd.f32 %v2559, 1.0
    %v2562 = vrcp.pop %v2560
    %v2563 = vmul.f32 1.0, %v2562
    %v2564 = vrcp.pop %v2561
    %v2565 = vmul.f32 1.0, %v2564
    %v2566 = vmul.f32 %v2548, %v2563
    %v2567 = vmul.f32 %v2551, %v2565
    %v2568 = vpack.c.bf16 %v2567, %v2566
    %v2570 = vlaneseq
    %v2571 = vshrl.u32 %v2570, 7
    %v2572 = vsub.s32 0, %v2571
    %v2573 = vrot.slane %v2490, %v2572
    %v2583 = vunpack.c.l.b16 %v2482
    %v2584 = vunpack.c.l.b16 %v2483
    %v2585 = vunpack.c.l.b16 %v2484
    %v2586 = vunpack.c.l.b16 %v2485
    %v2587 = vunpack.c.l.b16 %v2486
    %v2588 = vunpack.c.l.b16 %v2487
    %v2589 = vunpack.c.l.b16 %v2488
    %v2590 = vunpack.c.l.b16 %v2489
    %v2591 = vpack.c.b16 %v2584, %v2583
    %v2592 = vpack.c.b16 %v2586, %v2585
    %v2593 = vpack.c.b16 %v2588, %v2587
    %v2594 = vpack.c.b16 %v2590, %v2589
    %vm2599 = vcmask 523264
    %v2601 = vsel %vm2599, %v2568, 0
    %2603 = vmatprep.subr.bf16.mxu0 0
    %2604 = vmatpush1.bf16.msra.mxu0 %v2591
    %2605 = vmatprep.subr.bf16.mxu0 0
    %2606 = vmatpush1.bf16.msra.mxu0 %v2592
    %2607 = vmatprep.subr.bf16.mxu0 0
    %2608 = vmatpush1.bf16.msra.mxu0 %v2593
    %2609 = vmatprep.subr.bf16.mxu0 0
    %2610 = vmatpush1.bf16.msra.mxu0 %v2594
    %2611 = vmatprep.subr.bf16.mxu0 0
    %2612 = vmatpush1.bf16.msra.mxu0 0
    %2613 = vmatprep.subr.bf16.mxu0 0
    %2614 = vmatpush1.bf16.msra.mxu0 0
    %2615 = vmatprep.subr.bf16.mxu0 0
    %2616 = vmatpush1.bf16.msra.mxu0 0
    %2617 = vmatprep.subr.bf16.mxu0 0
    %2618 = vmatpush1.bf16.msra.mxu0 0
    %2619 = vmatprep.subr.bf16.mxu0 0
    %2620 = vmatpush1.bf16.msra.mxu0 0
    %2621 = vmatprep.subr.bf16.mxu0 0
    %2622 = vmatpush1.bf16.msra.mxu0 0
    %2623 = vmatprep.subr.bf16.mxu0 0
    %2624 = vmatpush1.bf16.msra.mxu0 0
    %2625 = vmatprep.subr.bf16.mxu0 0
    %2626 = vmatpush1.bf16.msra.mxu0 0
    %2627 = vmatprep.subr.bf16.mxu0 0
    %2628 = vmatpush1.bf16.msra.mxu0 0
    %2629 = vmatprep.subr.bf16.mxu0 0
    %2630 = vmatpush1.bf16.msra.mxu0 0
    %2631 = vmatprep.subr.bf16.mxu0 0
    %2632 = vmatpush1.bf16.msra.mxu0 0
    %2633 = vmatprep.subr.bf16.mxu0 0
    %2634 = vmatpush1.bf16.msra.mxu0 0
    %2635 = vmatprep.mubr.bf16.mxu0 0
    %2636 = vmatmul.mubr.bf16.gmra.mrb[0].mxu0 %v2601
    %v2637 = vpop.f32.mrb[0].mxu0
    %v2638 = vadd.f32 %v2573, %v2637
    %v2639 = vpop.f32.mrb[0].mxu0
    %v2640 = vpop.f32.mrb[0].mxu0
    %v2641 = vadd.f32 %v2573, %v2640
    %v2642 = vpop.f32.mrb[0].mxu0
    %2643 = vdwg.mxu0
    %v2644 = vadd.f32 %v2475, %v2638
    %v2645 = vadd.f32 %v2476, %v2641
    %v2646 = vld [vmem:[%s21] sm:$0x1]
    %v2647 = vld [vmem:[%s22] sm:$0x1]
    %v2648 = vsel %vm152, %v2644, 0.0
    %2649 = vadd.xlane.f32.xlu0 %v2648
    %v2650 = vpop.xlane.xlu0 %2649
    %v2651 = vsel %vm152, %v2645, 0.0
    %2652 = vadd.xlane.f32.xlu0 %v2651
    %v2653 = vpop.xlane.xlu0 %2652
    %v2654 = vmul.f32 %v2650, %v1210
    %v2655 = vmul.f32 %v2653, %v1210
    %v2656 = vsub.f32 %v2644, %v2654
    %v2657 = vsub.f32 %v2645, %v2655
    %v2658 = vmul.f32 %v2656, %v2656
    %v2659 = vmul.f32 %v2657, %v2657
    %v2660 = vsel %vm152, %v2658, 0.0
    %2661 = vadd.xlane.f32.xlu0 %v2660
    %v2662 = vpop.xlane.xlu0 %2661
    %v2663 = vsel %vm152, %v2659, 0.0
    %2664 = vadd.xlane.f32.xlu0 %v2663
    %v2665 = vpop.xlane.xlu0 %2664
    %v2666 = vmul.f32 %v2662, %v1210
    %v2667 = vmul.f32 %v2665, %v1210
    %v2668 = vadd.f32 %v2666, 1e-05
    %v2669 = vadd.f32 %v2667, 1e-05
    %v2670 = vrsqrt.pop %v2668
    %v2671 = vrsqrt.pop %v2669
    %v2672 = vmul.f32 %v2656, %v2670
    %v2673 = vmul.f32 %v2657, %v2671
    %v2675 = vlaneseq
    %v2676 = vshrl.u32 %v2675, 7
    %v2677 = vsub.s32 0, %v2676
    %v2678 = vrot.slane %v2646, %v2677
    %v2680 = vmul.f32 %v2672, %v2678
    %v2681 = vmul.f32 %v2673, %v2678
    %v2683 = vlaneseq
    %v2684 = vshrl.u32 %v2683, 7
    %v2685 = vsub.s32 0, %v2684
    %v2686 = vrot.slane %v2647, %v2685
    %v2688 = vadd.f32 %v2680, %v2686
    %v2689 = vadd.f32 %v2681, %v2686
    %v2690 = vpack.c.bf16 %v2689, %v2688
    %v2691 = vld [vmem:[%s23] sm:$0xf]
    %v2692 = vld [vmem:[%s23 + $0x4] sm:$0xf]
    %v2693 = vld [vmem:[%s23 + $0x8] sm:$0xf]
    %v2694 = vld [vmem:[%s23 + $0xc] sm:$0xf]
    %v2695 = vld [vmem:[%s23 + $0x10] sm:$0xf]
    %v2696 = vld [vmem:[%s23 + $0x14] sm:$0xf]
    %v2697 = vld [vmem:[%s23 + $0x18] sm:$0xf]
    %v2698 = vld [vmem:[%s23 + $0x1c] sm:$0xf]
    %v2699 = vld [vmem:[%s23 + $0x20] sm:$0xf]
    %v2700 = vld [vmem:[%s23 + $0x24] sm:$0xf]
    %v2701 = vld [vmem:[%s23 + $0x28] sm:$0xf]
    %v2702 = vld [vmem:[%s23 + $0x2c] sm:$0xf]
    %v2703 = vld [vmem:[%s23 + $0x30] sm:$0xf]
    %v2704 = vld [vmem:[%s23 + $0x34] sm:$0xf]
    %v2705 = vld [vmem:[%s23 + $0x38] sm:$0xf]
    %v2706 = vld [vmem:[%s23 + $0x3c] sm:$0xf]
    %v2707 = vld [vmem:[%s24] sm:$0x1]
    %v2709 = vlaneseq
    %v2710 = vshrl.u32 %v2709, 7
    %v2711 = vsub.s32 0, %v2710
    %v2712 = vrot.slane %v2707, %v2711
    %v2730 = vunpack.c.l.b16 %v2691
    %v2731 = vunpack.c.l.b16 %v2692
    %v2732 = vunpack.c.l.b16 %v2693
    %v2733 = vunpack.c.l.b16 %v2694
    %v2734 = vunpack.c.l.b16 %v2695
    %v2735 = vunpack.c.l.b16 %v2696
    %v2736 = vunpack.c.l.b16 %v2697
    %v2737 = vunpack.c.l.b16 %v2698
    %v2738 = vunpack.c.l.b16 %v2699
    %v2739 = vunpack.c.l.b16 %v2700
    %v2740 = vunpack.c.l.b16 %v2701
    %v2741 = vunpack.c.l.b16 %v2702
    %v2742 = vunpack.c.l.b16 %v2703
    %v2743 = vunpack.c.l.b16 %v2704
    %v2744 = vunpack.c.l.b16 %v2705
    %v2745 = vunpack.c.l.b16 %v2706
    %v2746 = vpack.c.b16 %v2731, %v2730
    %v2747 = vpack.c.b16 %v2733, %v2732
    %v2748 = vpack.c.b16 %v2735, %v2734
    %v2749 = vpack.c.b16 %v2737, %v2736
    %v2750 = vpack.c.b16 %v2739, %v2738
    %v2751 = vpack.c.b16 %v2741, %v2740
    %v2752 = vpack.c.b16 %v2743, %v2742
    %v2753 = vpack.c.b16 %v2745, %v2744
    %v2755 = vsel %vm152, %v2690, 0
    %v2758 = vsel %vm152, %v2746, 0
    %v2761 = vsel %vm152, %v2747, 0
    %v2764 = vsel %vm152, %v2748, 0
    %v2767 = vsel %vm152, %v2749, 0
    %v2770 = vsel %vm152, %v2750, 0
    %v2773 = vsel %vm152, %v2751, 0
    %v2776 = vsel %vm152, %v2752, 0
    %v2779 = vsel %vm152, %v2753, 0
    %2781 = vmatprep.subr.bf16.mxu0 0
    %2782 = vmatpush1.bf16.xpose.msra.mxu0 %v2758
    %2783 = vmatprep.subr.bf16.mxu0 0
    %2784 = vmatpush1.bf16.xpose.msra.mxu0 %v2761
    %2785 = vmatprep.subr.bf16.mxu0 0
    %2786 = vmatpush1.bf16.xpose.msra.mxu0 %v2764
    %2787 = vmatprep.subr.bf16.mxu0 0
    %2788 = vmatpush1.bf16.xpose.msra.mxu0 %v2767
    %2789 = vmatprep.subr.bf16.mxu0 0
    %2790 = vmatpush1.bf16.xpose.msra.mxu0 %v2770
    %2791 = vmatprep.subr.bf16.mxu0 0
    %2792 = vmatpush1.bf16.xpose.msra.mxu0 %v2773
    %2793 = vmatprep.subr.bf16.mxu0 0
    %2794 = vmatpush1.bf16.xpose.msra.mxu0 %v2776
    %2795 = vmatprep.subr.bf16.mxu0 0
    %2796 = vmatpush1.bf16.xpose.msra.mxu0 %v2779
    %2797 = vmatprep.subr.bf16.mxu0 0
    %2798 = vmatpush1.bf16.xpose.msra.mxu0 0
    %2799 = vmatprep.subr.bf16.mxu0 0
    %2800 = vmatpush1.bf16.xpose.msra.mxu0 0
    %2801 = vmatprep.subr.bf16.mxu0 0
    %2802 = vmatpush1.bf16.xpose.msra.mxu0 0
    %2803 = vmatprep.subr.bf16.mxu0 0
    %2804 = vmatpush1.bf16.xpose.msra.mxu0 0
    %2805 = vmatprep.subr.bf16.mxu0 0
    %2806 = vmatpush1.bf16.xpose.msra.mxu0 0
    %2807 = vmatprep.subr.bf16.mxu0 0
    %2808 = vmatpush1.bf16.xpose.msra.mxu0 0
    %2809 = vmatprep.subr.bf16.mxu0 0
    %2810 = vmatpush1.bf16.xpose.msra.mxu0 0
    %2811 = vmatprep.subr.bf16.mxu0 0
    %2812 = vmatpush1.bf16.xpose.msra.mxu0 0
    %2813 = vmatprep.mubr.bf16.mxu0 0
    %2814 = vmatmul.mubr.bf16.gmra.mrb[0].mxu0 %v2755
    %v2815 = vpop.f32.mrb[0].mxu0
    %v2816 = vadd.f32 %v2712, %v2815
    %v2817 = vpop.f32.mrb[0].mxu0
    %v2818 = vpop.f32.mrb[0].mxu0
    %v2819 = vadd.f32 %v2712, %v2818
    %v2820 = vpop.f32.mrb[0].mxu0
    %2821 = vdwg.mxu0
    %2822 = vst [vmem:[#allocation3] sm:$0xff] %v2816
    %2823 = vst [vmem:[#allocation3 + $0x8] sm:$0xff] %v2819
    // Predicated region
    $region102: #{marian_logits.3} parent=1 // pred_check
      _
    $region103: #{marian_logits.3} parent=1 // pred_check_branch
      %2825 = sbr.rel (0) target = $region105
    $region104: #{marian_logits.3} parent=1 // pred_region
      %s2827 = ssub.s32 256, 256
      %2828 = vsyncadd [#allocation4], %s2827
      %s2829 = sshll.u32 [#allocation3], 4
      %s2830 = int_to_ptr.vmem [resolvable:$true] %s2829
      %2835 = dma.vmem_to_hbm [thread:$0]  %s2830, 256, %s25, [#allocation4], 128, 128, 8
    $region105: #{marian_logits.3} parent=1 // pred_fallthru
      _
    // Predicated region
    $region106: #{marian_logits.3} parent=1 // pred_check
      _
    $region107: #{marian_logits.3} parent=1 // pred_check_branch
      %2837 = sbr.rel (0) target = $region109
    $region108: #{marian_logits.3} parent=1 // pred_region
      %2838 = dma.done [#allocation4], 256
    $region109: #{marian_logits.3} parent=1 // pred_fallthru
      _
    %2839 = vsyncpa [#allocation4], 1

</llo_original>
